<compile_context>
chip_gen: v7x
topology: tpu7x:2x2x1
jax: 0.10.0
libtpu: 0.0.40
codegen_flags: <defaults>
</compile_context>

<pallas_src>
import jax
import jax.numpy as jnp
from jax.experimental import pallas as pl
from jax.experimental.pallas import tpu as pltpu

LANES = 128  # pad every channel / feature dim to this width


# ----------------------------------------------------------------------------
# Pallas kernels
# ----------------------------------------------------------------------------
def _conv_block_kernel(p_ref, w_ref, b_ref, pool_ref, o_ref):
    """One conv stage for one image, fully fused in VMEM.

    p_ref    : (S_in, K)      im2col patches for this image
    w_ref    : (K, 128)       conv weight (output channels padded to 128 lanes)
    b_ref    : (1, 128)       bias (padded)
    pool_ref : (S_out, S_in)  constant 2x2 average-pooling matrix (0 / 0.25)
    o_ref    : (S_out, 128)   pooled, ReLU'd activations (channels in lanes)
    """
    conv = jnp.dot(p_ref[...], w_ref[...], preferred_element_type=jnp.float32)
    conv = jnp.maximum(conv + b_ref[...], 0.0)
    o_ref[...] = jnp.dot(
        pool_ref[...], conv, preferred_element_type=jnp.float32
    ).astype(o_ref.dtype)


def _fc_stack_kernel(x_ref, w1_ref, b1_ref, w2_ref, b2_ref, w3_ref, b3_ref, o_ref):
    """fc1 -> ReLU -> fc2 -> ReLU -> fc3; intermediates never leave VMEM."""
    h = jnp.dot(x_ref[...], w1_ref[...], preferred_element_type=jnp.float32)
    h = jnp.maximum(h + b1_ref[...], 0.0)
    h = jnp.dot(h, w2_ref[...], preferred_element_type=jnp.float32)
    h = jnp.maximum(h + b2_ref[...], 0.0)
    out = jnp.dot(h, w3_ref[...], preferred_element_type=jnp.float32) + b3_ref[...]
    o_ref[...] = out.astype(o_ref.dtype)


# ----------------------------------------------------------------------------
# pallas_call wrappers
# ----------------------------------------------------------------------------
def conv_block(patches, w, b, pool, n_images):
    """relu(patches @ w + b) then 2x2 avg-pool (as a matmul), one image per grid step."""
    s_in, k = patches.shape[0] // n_images, patches.shape[1]
    s_out = pool.shape[0]
    c = w.shape[1]
    return pl.pallas_call(
        _conv_block_kernel,
        out_shape=jax.ShapeDtypeStruct((n_images * s_out, c), jnp.float32),
        grid=(n_images,),
        in_specs=[
            pl.BlockSpec((s_in, k), lambda n: (n, 0)),
            pl.BlockSpec((k, c), lambda n: (0, 0)),
            pl.BlockSpec((1, c), lambda n: (0, 0)),
            pl.BlockSpec((s_out, s_in), lambda n: (0, 0)),
        ],
        out_specs=pl.BlockSpec((s_out, c), lambda n: (n, 0)),
        compiler_params=pltpu.CompilerParams(dimension_semantics=("parallel",)),
    )(patches, w, b, pool)


def fc_stack(flat, w1, b1, w2, b2, w3, b3):
    m, k = flat.shape
    c = w1.shape[1]
    if m > 512:  # bounded fixed row tile for large batches (keeps VMEM in check)
        tm = 256
        mp = ((m + tm - 1) // tm) * tm
        if mp != m:
            flat = jnp.pad(flat, ((0, mp - m), (0, 0)))
    else:        # tiny batch: single full-array block (exempt from (8,128) rule)
        tm, mp = m, m
    out = pl.pallas_call(
        _fc_stack_kernel,
        out_shape=jax.ShapeDtypeStruct((mp, c), jnp.float32),
        grid=(mp // tm,),
        in_specs=[
            pl.BlockSpec((tm, k), lambda i: (i, 0)),
            pl.BlockSpec((k, c), lambda i: (0, 0)),
            pl.BlockSpec((1, c), lambda i: (0, 0)),
            pl.BlockSpec((c, c), lambda i: (0, 0)),
            pl.BlockSpec((1, c), lambda i: (0, 0)),
            pl.BlockSpec((c, c), lambda i: (0, 0)),
            pl.BlockSpec((1, c), lambda i: (0, 0)),
        ],
        out_specs=pl.BlockSpec((tm, c), lambda i: (i, 0)),
        compiler_params=pltpu.CompilerParams(dimension_semantics=("parallel",)),
    )(flat, w1, b1, w2, b2, w3, b3)
    return out[:m]


# ----------------------------------------------------------------------------
# JAX glue: im2col (channels-last), pooling matrices, parameter packing
# ----------------------------------------------------------------------------
def _im2col_nhwc(x, k):
    """x: (N, H, W, C) -> (N*OH*OW, K*K*C); patch index = (ki*K + kj)*C + c."""
    n, h, w, c = x.shape
    oh, ow = h - k + 1, w - k + 1
    cols = [x[:, i:i + oh, j:j + ow, :] for i in range(k) for j in range(k)]
    patches = jnp.stack(cols, axis=3)            # (N, OH, OW, K*K, C)
    return patches.reshape(n * oh * ow, k * k * c)


def _make_pool_matrix(oh, ow):
    """(PH*PW, OH*OW) matrix with 0.25 where the 2x2 window covers the input pixel."""
    ph, pw = oh // 2, ow // 2
    out_idx = jnp.arange(ph * pw)
    in_idx = jnp.arange(oh * ow)
    o_r, o_c = out_idx // pw, out_idx % pw
    i_r, i_c = in_idx // ow, in_idx % ow
    hit = (i_r[None, :] // 2 == o_r[:, None]) & (i_c[None, :] // 2 == o_c[:, None])
    return jnp.where(hit, 0.25, 0.0).astype(jnp.float32)


def pack_params(params):
    """One-time weight repacking: transpose, fold NCHW-flatten into fc1, pad to 128 lanes."""
    (w1, b1, w2, b2, fw1, fb1, fw2, fb2, fw3, fb3) = params
    f32 = jnp.float32
    c = LANES
    # conv1: (6,1,5,5) -> (25, 6), pad output channels to 128 lanes
    w1p = jnp.zeros((25, c), f32).at[:, :6].set(w1.reshape(6, 25).T)
    b1p = jnp.zeros((1, c), f32).at[0, :6].set(b1)
    # conv2: patch index = (ki*5 + kj)*6 + ci -> (150, 16), pad to 128 lanes
    w2m = jnp.transpose(w2, (2, 3, 1, 0)).reshape(150, 16)
    w2p = jnp.zeros((150, c), f32).at[:, :16].set(w2m)
    b2p = jnp.zeros((1, c), f32).at[0, :16].set(b2)
    # fc1: our flat layout is (spatial*128 + channel); PyTorch NCHW flatten is
    # (channel*16 + spatial).  Fold that permutation + lane padding into the weight.
    fw1r = jnp.transpose(fw1.reshape(120, 16, 16), (2, 1, 0))      # (s, ch, out)
    fw1p = jnp.zeros((16, c, c), f32).at[:, :16, :120].set(fw1r).reshape(16 * c, c)
    fb1p = jnp.zeros((1, c), f32).at[0, :120].set(fb1)
    fw2p = jnp.zeros((c, c), f32).at[:120, :84].set(fw2.T)
    fb2p = jnp.zeros((1, c), f32).at[0, :84].set(fb2)
    fw3p = jnp.zeros((c, c), f32).at[:84, :10].set(fw3.T)
    fb3p = jnp.zeros((1, c), f32).at[0, :10].set(fb3)
    pool1 = _make_pool_matrix(24, 24)   # (144, 576)
    pool2 = _make_pool_matrix(8, 8)     # (16, 64)
    return (w1p, b1p, w2p, b2p, fw1p, fb1p, fw2p, fb2p, fw3p, fb3p, pool1, pool2)


# ----------------------------------------------------------------------------
# Forward pass (3 pallas_calls, channels-last, no activation transposes)
# ----------------------------------------------------------------------------
def lenet_forward(x, packed):
    (w1p, b1p, w2p, b2p, fw1p, fb1p, fw2p, fb2p, fw3p, fb3p, pool1, pool2) = packed
    n = x.shape[0]
    # conv1 block: 28x28x1 -> 24x24x6 -> pool -> 12x12 (channels in lanes, padded)
    p1 = _im2col_nhwc(x.reshape(n, 28, 28, 1), 5)            # (N*576, 25)
    h1 = conv_block(p1, w1p, b1p, pool1, n)                  # (N*144, 128)
    # conv2 block: 12x12x6 -> 8x8x16 -> pool -> 4x4
    h1 = h1.reshape(n, 12, 12, LANES)[:, :, :, :6]           # (N, 12, 12, 6)
    p2 = _im2col_nhwc(h1, 5)                                 # (N*64, 150)
    h2 = conv_block(p2, w2p, b2p, pool2, n)                  # (N*16, 128)
    # FC stack; the NCHW flatten permutation is already folded into fw1p.
    flat = h2.reshape(n, 16 * LANES)                         # (N, 2048)
    out = fc_stack(flat, fw1p, fb1p, fw2p, fb2p, fw3p, fb3p)  # (N, 128)
    return out[:, :10]


# ----------------------------------------------------------------------------
# Pure-JAX reference (for correctness check)
# ----------------------------------------------------------------------------
def reference_forward(x, params):
    (w1, b1, w2, b2, fw1, fb1, fw2, fb2, fw3, fb3) = params

    def conv(h, w, b):
        y = jax.lax.conv_general_dilated(
            h, w, (1, 1), "VALID", dimension_numbers=("NCHW", "OIHW", "NCHW")
        )
        return jax.nn.relu(y + b[None, :, None, None])

    def pool(h):
        N, C, H, W = h.shape
        return h.reshape(N, C, H // 2, 2, W // 2, 2).mean(axis=(3, 5))

    h = pool(conv(x, w1, b1))
    h = pool(conv(h, w2, b2))
    h = h.reshape(h.shape[0], -1)
    h = jax.nn.relu(h @ fw1.T + fb1)
    h = jax.nn.relu(h @ fw2.T + fb2)
    return h @ fw3.T + fb3


# ----------------------------------------------------------------------------
# Deterministic parameter init (shapes from Net.__init__ defaults)
# ----------------------------------------------------------------------------
def init_params(key):
    ks = jax.random.split(key, 10)
    f32 = jnp.float32
    w1 = 0.1 * jax.random.normal(ks[0], (6, 1, 5, 5), f32)
    b1 = 0.1 * jax.random.normal(ks[1], (6,), f32)
    w2 = 0.1 * jax.random.normal(ks[2], (16, 6, 5, 5), f32)
    b2 = 0.1 * jax.random.normal(ks[3], (16,), f32)
    fw1 = 0.1 * jax.random.normal(ks[4], (120, 16 * 4 * 4), f32)
    fb1 = 0.1 * jax.random.normal(ks[5], (120,), f32)
    fw2 = 0.1 * jax.random.normal(ks[6], (84, 120), f32)
    fb2 = 0.1 * jax.random.normal(ks[7], (84,), f32)
    fw3 = 0.1 * jax.random.normal(ks[8], (10, 84), f32)
    fb3 = 0.1 * jax.random.normal(ks[9], (10,), f32)
    return (w1, b1, w2, b2, fw1, fb1, fw2, fb2, fw3, fb3)


if __name__ == "__main__":
    # Input implied by conv_output_size=4: 28 -> conv5 -> 24 -> pool -> 12
    #                                      -> conv5 -> 8 -> pool -> 4
    x = jax.random.normal(jax.random.PRNGKey(0), (2, 1, 28, 28), jnp.float32)
    params = init_params(jax.random.PRNGKey(42))
    packed = pack_params(params)   # one-time weight repack (outside the jitted forward)

    fwd = jax.jit(lenet_forward)
    out = jax.block_until_ready(fwd(x, packed))
    assert out.shape == (2, 10), out.shape

    ref = reference_forward(x, params)
    assert jnp.allclose(out, ref, atol=1e-3, rtol=1e-3), (
        "mismatch vs reference: max abs err = "
        + str(float(jnp.max(jnp.abs(out - ref))))
    )

    print("KERNEL_OK")
</pallas_src>

<mosaic_0001>
module attributes {stable_mosaic.version = 11 : i64} {
  func.func @_conv_block_kernel(%arg0: i32, %arg1: memref<576x25xf32, #tpu.memory_space<vmem>>, %arg2: memref<25x128xf32, #tpu.memory_space<vmem>>, %arg3: memref<1x128xf32, #tpu.memory_space<vmem>>, %arg4: memref<144x576xf32, #tpu.memory_space<vmem>>, %arg5: memref<144x128xf32, #tpu.memory_space<vmem>>) attributes {dimension_semantics = [#tpu.dimension_semantics<parallel>], iteration_bounds = array<i64: 2>, scalar_prefetch = 0 : i64, scratch_operands = 0 : i64, tpu.core_type = #tpu.core_type<tc>, window_params = [{transform_indices = @transform_0, window_bounds = array<i64: 576, 25>}, {pipeline_mode = #tpu.pipeline_mode<synchronous>, transform_indices = @transform_1, window_bounds = array<i64: 25, 128>}, {pipeline_mode = #tpu.pipeline_mode<synchronous>, transform_indices = @transform_2, window_bounds = array<i64: 1, 128>}, {pipeline_mode = #tpu.pipeline_mode<synchronous>, transform_indices = @transform_3, window_bounds = array<i64: 144, 576>}, {transform_indices = @transform_4, window_bounds = array<i64: 144, 128>}]} {
    %c0 = arith.constant 0 : index
    %c0_0 = arith.constant 0 : index
    %0 = vector.load %arg1[%c0, %c0_0] : memref<576x25xf32, #tpu.memory_space<vmem>>, vector<576x25xf32>
    %c0_1 = arith.constant 0 : index
    %c0_2 = arith.constant 0 : index
    %1 = vector.load %arg2[%c0_1, %c0_2] : memref<25x128xf32, #tpu.memory_space<vmem>>, vector<25x128xf32>
    %cst = arith.constant dense<0.000000e+00> : vector<576x128xf32>
    %2 = tpu.matmul %0, %1, %cst {dimension_numbers = #tpu.dot_dimension_numbers<[1], [0], [0], [1], [0, 0, 1, 1], [], []>} : vector<576x25xf32>, vector<25x128xf32>, vector<576x128xf32> -> vector<576x128xf32>
    %c0_3 = arith.constant 0 : index
    %c0_4 = arith.constant 0 : index
    %3 = vector.load %arg3[%c0_3, %c0_4] : memref<1x128xf32, #tpu.memory_space<vmem>>, vector<1x128xf32>
    %4 = vector.broadcast %3 : vector<1x128xf32> to vector<576x128xf32>
    %5 = arith.addf %2, %4 : vector<576x128xf32>
    %cst_5 = arith.constant 0.000000e+00 : f32
    %6 = vector.broadcast %cst_5 : f32 to vector<576x128xf32>
    %7 = arith.maximumf %5, %6 : vector<576x128xf32>
    %c0_6 = arith.constant 0 : index
    %c0_7 = arith.constant 0 : index
    %8 = vector.load %arg4[%c0_6, %c0_7] : memref<144x576xf32, #tpu.memory_space<vmem>>, vector<144x576xf32>
    %cst_8 = arith.constant dense<0.000000e+00> : vector<144x128xf32>
    %9 = tpu.matmul %8, %7, %cst_8 {dimension_numbers = #tpu.dot_dimension_numbers<[1], [0], [0], [1], [0, 0, 1, 1], [], []>} : vector<144x576xf32>, vector<576x128xf32>, vector<144x128xf32> -> vector<144x128xf32>
    %c0_9 = arith.constant 0 : index
    %c0_10 = arith.constant 0 : index
    %10 = vector.load %arg5[%c0_9, %c0_10] : memref<144x128xf32, #tpu.memory_space<vmem>>, vector<144x128xf32>
    tpu.vector_store %arg5[%c0_9, %c0_10], %9 {strides = array<i32>} : memref<144x128xf32, #tpu.memory_space<vmem>>, vector<144x128xf32>,
    return
  }
  func.func @transform_0(%arg0: i32) -> (i32, i32) {
    %c0_i32 = arith.constant 0 : i32
    %c0_i32_0 = arith.constant 0 : i32
    return %arg0, %c0_i32 : i32, i32
  }
  func.func @transform_1(%arg0: i32) -> (i32, i32) {
    %c0_i32 = arith.constant 0 : i32
    %c0_i32_0 = arith.constant 0 : i32
    %c0_i32_1 = arith.constant 0 : i32
    return %c0_i32, %c0_i32_0 : i32, i32
  }
  func.func @transform_2(%arg0: i32) -> (i32, i32) {
    %c0_i32 = arith.constant 0 : i32
    %c0_i32_0 = arith.constant 0 : i32
    %c0_i32_1 = arith.constant 0 : i32
    return %c0_i32, %c0_i32_0 : i32, i32
  }
  func.func @transform_3(%arg0: i32) -> (i32, i32) {
    %c0_i32 = arith.constant 0 : i32
    %c0_i32_0 = arith.constant 0 : i32
    %c0_i32_1 = arith.constant 0 : i32
    return %c0_i32, %c0_i32_0 : i32, i32
  }
  func.func @transform_4(%arg0: i32) -> (i32, i32) {
    %c0_i32 = arith.constant 0 : i32
    %c0_i32_0 = arith.constant 0 : i32
    return %arg0, %c0_i32 : i32, i32
  }
}

module attributes {stable_mosaic.version = 11 : i64} {
  func.func @_conv_block_kernel(%arg0: i32, %arg1: memref<64x150xf32, #tpu.memory_space<vmem>>, %arg2: memref<150x128xf32, #tpu.memory_space<vmem>>, %arg3: memref<1x128xf32, #tpu.memory_space<vmem>>, %arg4: memref<16x64xf32, #tpu.memory_space<vmem>>, %arg5: memref<16x128xf32, #tpu.memory_space<vmem>>) attributes {dimension_semantics = [#tpu.dimension_semantics<parallel>], iteration_bounds = array<i64: 2>, scalar_prefetch = 0 : i64, scratch_operands = 0 : i64, tpu.core_type = #tpu.core_type<tc>, window_params = [{transform_indices = @transform_0, window_bounds = array<i64: 64, 150>}, {pipeline_mode = #tpu.pipeline_mode<synchronous>, transform_indices = @transform_1, window_bounds = array<i64: 150, 128>}, {pipeline_mode = #tpu.pipeline_mode<synchronous>, transform_indices = @transform_2, window_bounds = array<i64: 1, 128>}, {pipeline_mode = #tpu.pipeline_mode<synchronous>, transform_indices = @transform_3, window_bounds = array<i64: 16, 64>}, {transform_indices = @transform_4, window_bounds = array<i64: 16, 128>}]} {
    %c0 = arith.constant 0 : index
    %c0_0 = arith.constant 0 : index
    %0 = vector.load %arg1[%c0, %c0_0] : memref<64x150xf32, #tpu.memory_space<vmem>>, vector<64x150xf32>
    %c0_1 = arith.constant 0 : index
    %c0_2 = arith.constant 0 : index
    %1 = vector.load %arg2[%c0_1, %c0_2] : memref<150x128xf32, #tpu.memory_space<vmem>>, vector<150x128xf32>
    %cst = arith.constant dense<0.000000e+00> : vector<64x128xf32>
    %2 = tpu.matmul %0, %1, %cst {dimension_numbers = #tpu.dot_dimension_numbers<[1], [0], [0], [1], [0, 0, 1, 1], [], []>} : vector<64x150xf32>, vector<150x128xf32>, vector<64x128xf32> -> vector<64x128xf32>
    %c0_3 = arith.constant 0 : index
    %c0_4 = arith.constant 0 : index
    %3 = vector.load %arg3[%c0_3, %c0_4] : memref<1x128xf32, #tpu.memory_space<vmem>>, vector<1x128xf32>
    %4 = vector.broadcast %3 : vector<1x128xf32> to vector<64x128xf32>
    %5 = arith.addf %2, %4 : vector<64x128xf32>
    %cst_5 = arith.constant 0.000000e+00 : f32
    %6 = vector.broadcast %cst_5 : f32 to vector<64x128xf32>
    %7 = arith.maximumf %5, %6 : vector<64x128xf32>
    %c0_6 = arith.constant 0 : index
    %c0_7 = arith.constant 0 : index
    %8 = vector.load %arg4[%c0_6, %c0_7] : memref<16x64xf32, #tpu.memory_space<vmem>>, vector<16x64xf32>
    %cst_8 = arith.constant dense<0.000000e+00> : vector<16x128xf32>
    %9 = tpu.matmul %8, %7, %cst_8 {dimension_numbers = #tpu.dot_dimension_numbers<[1], [0], [0], [1], [0, 0, 1, 1], [], []>} : vector<16x64xf32>, vector<64x128xf32>, vector<16x128xf32> -> vector<16x128xf32>
    %c0_9 = arith.constant 0 : index
    %c0_10 = arith.constant 0 : index
    %10 = vector.load %arg5[%c0_9, %c0_10] : memref<16x128xf32, #tpu.memory_space<vmem>>, vector<16x128xf32>
    tpu.vector_store %arg5[%c0_9, %c0_10], %9 {strides = array<i32>} : memref<16x128xf32, #tpu.memory_space<vmem>>, vector<16x128xf32>,
    return
  }
  func.func @transform_0(%arg0: i32) -> (i32, i32) {
    %c0_i32 = arith.constant 0 : i32
    %c0_i32_0 = arith.constant 0 : i32
    return %arg0, %c0_i32 : i32, i32
  }
  func.func @transform_1(%arg0: i32) -> (i32, i32) {
    %c0_i32 = arith.constant 0 : i32
    %c0_i32_0 = arith.constant 0 : i32
    %c0_i32_1 = arith.constant 0 : i32
    return %c0_i32, %c0_i32_0 : i32, i32
  }
  func.func @transform_2(%arg0: i32) -> (i32, i32) {
    %c0_i32 = arith.constant 0 : i32
    %c0_i32_0 = arith.constant 0 : i32
    %c0_i32_1 = arith.constant 0 : i32
    return %c0_i32, %c0_i32_0 : i32, i32
  }
  func.func @transform_3(%arg0: i32) -> (i32, i32) {
    %c0_i32 = arith.constant 0 : i32
    %c0_i32_0 = arith.constant 0 : i32
    %c0_i32_1 = arith.constant 0 : i32
    return %c0_i32, %c0_i32_0 : i32, i32
  }
  func.func @transform_4(%arg0: i32) -> (i32, i32) {
    %c0_i32 = arith.constant 0 : i32
    %c0_i32_0 = arith.constant 0 : i32
    return %arg0, %c0_i32 : i32, i32
  }
}

module attributes {stable_mosaic.version = 11 : i64} {
  func.func @_fc_stack_kernel(%arg0: i32, %arg1: memref<2x2048xf32, #tpu.memory_space<vmem>>, %arg2: memref<2048x128xf32, #tpu.memory_space<vmem>>, %arg3: memref<1x128xf32, #tpu.memory_space<vmem>>, %arg4: memref<128x128xf32, #tpu.memory_space<vmem>>, %arg5: memref<1x128xf32, #tpu.memory_space<vmem>>, %arg6: memref<128x128xf32, #tpu.memory_space<vmem>>, %arg7: memref<1x128xf32, #tpu.memory_space<vmem>>, %arg8: memref<2x128xf32, #tpu.memory_space<vmem>>) attributes {dimension_semantics = [#tpu.dimension_semantics<parallel>], iteration_bounds = array<i64: 1>, scalar_prefetch = 0 : i64, scratch_operands = 0 : i64, tpu.core_type = #tpu.core_type<tc>, window_params = [{transform_indices = @transform_0, window_bounds = array<i64: 2, 2048>}, {pipeline_mode = #tpu.pipeline_mode<synchronous>, transform_indices = @transform_1, window_bounds = array<i64: 2048, 128>}, {pipeline_mode = #tpu.pipeline_mode<synchronous>, transform_indices = @transform_2, window_bounds = array<i64: 1, 128>}, {pipeline_mode = #tpu.pipeline_mode<synchronous>, transform_indices = @transform_3, window_bounds = array<i64: 128, 128>}, {pipeline_mode = #tpu.pipeline_mode<synchronous>, transform_indices = @transform_4, window_bounds = array<i64: 1, 128>}, {pipeline_mode = #tpu.pipeline_mode<synchronous>, transform_indices = @transform_5, window_bounds = array<i64: 128, 128>}, {pipeline_mode = #tpu.pipeline_mode<synchronous>, transform_indices = @transform_6, window_bounds = array<i64: 1, 128>}, {transform_indices = @transform_7, window_bounds = array<i64: 2, 128>}]} {
    %c0 = arith.constant 0 : index
    %c0_0 = arith.constant 0 : index
    %0 = vector.load %arg1[%c0, %c0_0] : memref<2x2048xf32, #tpu.memory_space<vmem>>, vector<2x2048xf32>
    %c0_1 = arith.constant 0 : index
    %c0_2 = arith.constant 0 : index
    %1 = vector.load %arg2[%c0_1, %c0_2] : memref<2048x128xf32, #tpu.memory_space<vmem>>, vector<2048x128xf32>
    %cst = arith.constant dense<0.000000e+00> : vector<2x128xf32>
    %2 = tpu.matmul %0, %1, %cst {dimension_numbers = #tpu.dot_dimension_numbers<[1], [0], [0], [1], [0, 0, 1, 1], [], []>} : vector<2x2048xf32>, vector<2048x128xf32>, vector<2x128xf32> -> vector<2x128xf32>
    %c0_3 = arith.constant 0 : index
    %c0_4 = arith.constant 0 : index
    %3 = vector.load %arg3[%c0_3, %c0_4] : memref<1x128xf32, #tpu.memory_space<vmem>>, vector<1x128xf32>
    %4 = vector.broadcast %3 : vector<1x128xf32> to vector<2x128xf32>
    %5 = arith.addf %2, %4 : vector<2x128xf32>
    %cst_5 = arith.constant 0.000000e+00 : f32
    %6 = vector.broadcast %cst_5 : f32 to vector<2x128xf32>
    %7 = arith.maximumf %5, %6 : vector<2x128xf32>
    %c0_6 = arith.constant 0 : index
    %c0_7 = arith.constant 0 : index
    %8 = vector.load %arg4[%c0_6, %c0_7] : memref<128x128xf32, #tpu.memory_space<vmem>>, vector<128x128xf32>
    %cst_8 = arith.constant dense<0.000000e+00> : vector<2x128xf32>
    %9 = tpu.matmul %7, %8, %cst_8 {dimension_numbers = #tpu.dot_dimension_numbers<[1], [0], [0], [1], [0, 0, 1, 1], [], []>} : vector<2x128xf32>, vector<128x128xf32>, vector<2x128xf32> -> vector<2x128xf32>
    %c0_9 = arith.constant 0 : index
    %c0_10 = arith.constant 0 : index
    %10 = vector.load %arg5[%c0_9, %c0_10] : memref<1x128xf32, #tpu.memory_space<vmem>>, vector<1x128xf32>
    %11 = vector.broadcast %10 : vector<1x128xf32> to vector<2x128xf32>
    %12 = arith.addf %9, %11 : vector<2x128xf32>
    %cst_11 = arith.constant 0.000000e+00 : f32
    %13 = vector.broadcast %cst_11 : f32 to vector<2x128xf32>
    %14 = arith.maximumf %12, %13 : vector<2x128xf32>
    %c0_12 = arith.constant 0 : index
    %c0_13 = arith.constant 0 : index
    %15 = vector.load %arg6[%c0_12, %c0_13] : memref<128x128xf32, #tpu.memory_space<vmem>>, vector<128x128xf32>
    %cst_14 = arith.constant dense<0.000000e+00> : vector<2x128xf32>
    %16 = tpu.matmul %14, %15, %cst_14 {dimension_numbers = #tpu.dot_dimension_numbers<[1], [0], [0], [1], [0, 0, 1, 1], [], []>} : vector<2x128xf32>, vector<128x128xf32>, vector<2x128xf32> -> vector<2x128xf32>
    %c0_15 = arith.constant 0 : index
    %c0_16 = arith.constant 0 : index
    %17 = vector.load %arg7[%c0_15, %c0_16] : memref<1x128xf32, #tpu.memory_space<vmem>>, vector<1x128xf32>
    %18 = vector.broadcast %17 : vector<1x128xf32> to vector<2x128xf32>
    %19 = arith.addf %16, %18 : vector<2x128xf32>
    %c0_17 = arith.constant 0 : index
    %c0_18 = arith.constant 0 : index
    %20 = vector.load %arg8[%c0_17, %c0_18] : memref<2x128xf32, #tpu.memory_space<vmem>>, vector<2x128xf32>
    tpu.vector_store %arg8[%c0_17, %c0_18], %19 {strides = array<i32>} : memref<2x128xf32, #tpu.memory_space<vmem>>, vector<2x128xf32>,
    return
  }
  func.func @transform_0(%arg0: i32) -> (i32, i32) {
    %c0_i32 = arith.constant 0 : i32
    %c0_i32_0 = arith.constant 0 : i32
    return %arg0, %c0_i32 : i32, i32
  }
  func.func @transform_1(%arg0: i32) -> (i32, i32) {
    %c0_i32 = arith.constant 0 : i32
    %c0_i32_0 = arith.constant 0 : i32
    %c0_i32_1 = arith.constant 0 : i32
    return %c0_i32, %c0_i32_0 : i32, i32
  }
  func.func @transform_2(%arg0: i32) -> (i32, i32) {
    %c0_i32 = arith.constant 0 : i32
    %c0_i32_0 = arith.constant 0 : i32
    %c0_i32_1 = arith.constant 0 : i32
    return %c0_i32, %c0_i32_0 : i32, i32
  }
  func.func @transform_3(%arg0: i32) -> (i32, i32) {
    %c0_i32 = arith.constant 0 : i32
    %c0_i32_0 = arith.constant 0 : i32
    %c0_i32_1 = arith.constant 0 : i32
    return %c0_i32, %c0_i32_0 : i32, i32
  }
  func.func @transform_4(%arg0: i32) -> (i32, i32) {
    %c0_i32 = arith.constant 0 : i32
    %c0_i32_0 = arith.constant 0 : i32
    %c0_i32_1 = arith.constant 0 : i32
    return %c0_i32, %c0_i32_0 : i32, i32
  }
  func.func @transform_5(%arg0: i32) -> (i32, i32) {
    %c0_i32 = arith.constant 0 : i32
    %c0_i32_0 = arith.constant 0 : i32
    %c0_i32_1 = arith.constant 0 : i32
    return %c0_i32, %c0_i32_0 : i32, i32
  }
  func.func @transform_6(%arg0: i32) -> (i32, i32) {
    %c0_i32 = arith.constant 0 : i32
    %c0_i32_0 = arith.constant 0 : i32
    %c0_i32_1 = arith.constant 0 : i32
    return %c0_i32, %c0_i32_0 : i32, i32
  }
  func.func @transform_7(%arg0: i32) -> (i32, i32) {
    %c0_i32 = arith.constant 0 : i32
    %c0_i32_0 = arith.constant 0 : i32
    return %arg0, %c0_i32 : i32, i32
  }
}

</mosaic_0001>

<llo_original>
// kernel: lenet_forward.3
$region0: #{lenet_forward.3}
  #allocation0 [shape = 'u32[]', space=smem, size = 0x4, offset = 0x4, fixed_abs, tag = 'smem constant byte address 0x4 - core index']
  #allocation1 [shape = 'u32[144,128]{1,0:T(1,128)}', space=vmem, size = 0x12000, scoped, tag = 'internal scratch']
  %s0 = inlined_call_operand.vmem [shape: f32[1152,25], index: 0, kind: input, shape index: {}]
  %s1 = inlined_call_operand.vmem [shape: f32[25,128], index: 1, kind: input, shape index: {}]
  %s2 = inlined_call_operand.vmem [shape: f32[1,128], index: 2, kind: input, shape index: {}]
  %s3 = inlined_call_operand.vmem [shape: f32[144,576], index: 3, kind: input, shape index: {}]
  %s4 = inlined_call_operand.vmem [shape: f32[288,128], index: 4, kind: output, shape index: {}]
  %s5 = sld [smem:[#allocation0]]
  $region49: #{lenet_forward.3} parent=0
    _
  %s7 = ssub.s32 1, %s5
  %s8 = scalar_select 0, %s7, %s5
  loop: start=0, step=1, limit=4
  $region2: #{lenet_forward.3} parent=0 // loop_pre_header
    _
  $region3: #{lenet_forward.3} parent=0 // loop_header
    %s10 = sphi 0, %s14
    %p11 = scmp.ge.s32.totalorder %s10, 4
    %s20 = sphi 0, %s22
    %s23 = sphi 0, %s20
    %s24 = sphi 0, %s23
    %s40 = sphi 0, %s24
    %s44 = sphi 0, %s44
    %s46 = sphi 0, %s44
    %s47 = sphi 0, %s46
    %s61 = sphi 0, %s47
    %s65 = sphi 0, %s65
    %s67 = sphi 0, %s65
    %s68 = sphi 0, %s67
    %s82 = sphi 0, %s68
    %s86 = sphi 0, %s86
    %s88 = sphi 0, %s86
    %s89 = sphi 0, %s88
    %s103 = sphi 0, %s89
    %s109 = sphi 0, %s111
    %s112 = sphi 0, %s109
    %s113 = sphi 0, %s112
    %s129 = sphi 0, %s113
  $region4: #{lenet_forward.3} parent=0 // loop_header_branch
    %13 = sbr.rel (%p11) target = $region8
  $region5: #{lenet_forward.3} parent=0 // loop_body
    %s15 = ssub.s32 %s10, 1
    %s16 = ssub.s32 %s10, 2
    %s17 = sadd.s32 %s10, 1
    %s18 = ssub.s32 %s10, %s17
    %p19 = scmp.eq.s32.totalorder %s18, 0
    %s21 = sadd.s32 %s20, 1
    %s22 = scalar_select %p19, %s20, %s21
    %p25 = pneg %p19
    %p26 = scmp.eq.s32.totalorder %s10, 1
    %p27 = por %p25, %p26
    %p28 = scmp.ne.s32.totalorder %s20, %s23
    %p29 = scmp.eq.s32.totalorder %s10, 0
    %p30 = por %p28, %p29
    %p31 = scmp.ne.s32.totalorder %s20, %s23
    %p32 = scmp.eq.s32.totalorder %s15, 1
    %p33 = por %p31, %p32
    %p34 = scmp.ne.s32.totalorder %s23, %s24
    %p35 = scmp.eq.s32.totalorder %s15, 0
    %p36 = por %p34, %p35
    %p37 = scmp.ne.s32.totalorder %s23, %s24
    %p38 = scmp.eq.s32.totalorder %s16, 1
    %p39 = por %p37, %p38
    %p41 = scmp.ne.s32.totalorder %s24, %s40
    %p42 = scmp.eq.s32.totalorder %s16, 0
    %p43 = por %p41, %p42
    %s45 = sadd.s32 %s44, 1
    %p48 = scmp.eq.s32.totalorder %s10, 1
    %p49 = scmp.ne.s32.totalorder %s44, %s46
    %p50 = scmp.eq.s32.totalorder %s10, 0
    %p51 = por %p49, %p50
    %p52 = scmp.ne.s32.totalorder %s44, %s46
    %p53 = scmp.eq.s32.totalorder %s15, 1
    %p54 = por %p52, %p53
    %p55 = scmp.ne.s32.totalorder %s46, %s47
    %p56 = scmp.eq.s32.totalorder %s15, 0
    %p57 = por %p55, %p56
    %p58 = scmp.ne.s32.totalorder %s46, %s47
    %p59 = scmp.eq.s32.totalorder %s16, 1
    %p60 = por %p58, %p59
    %p62 = scmp.ne.s32.totalorder %s47, %s61
    %p63 = scmp.eq.s32.totalorder %s16, 0
    %p64 = por %p62, %p63
    %s66 = sadd.s32 %s65, 1
    %p69 = scmp.eq.s32.totalorder %s10, 1
    %p70 = scmp.ne.s32.totalorder %s65, %s67
    %p71 = scmp.eq.s32.totalorder %s10, 0
    %p72 = por %p70, %p71
    %p73 = scmp.ne.s32.totalorder %s65, %s67
    %p74 = scmp.eq.s32.totalorder %s15, 1
    %p75 = por %p73, %p74
    %p76 = scmp.ne.s32.totalorder %s67, %s68
    %p77 = scmp.eq.s32.totalorder %s15, 0
    %p78 = por %p76, %p77
    %p79 = scmp.ne.s32.totalorder %s67, %s68
    %p80 = scmp.eq.s32.totalorder %s16, 1
    %p81 = por %p79, %p80
    %p83 = scmp.ne.s32.totalorder %s68, %s82
    %p84 = scmp.eq.s32.totalorder %s16, 0
    %p85 = por %p83, %p84
    %s87 = sadd.s32 %s86, 1
    %p90 = scmp.eq.s32.totalorder %s10, 1
    %p91 = scmp.ne.s32.totalorder %s86, %s88
    %p92 = scmp.eq.s32.totalorder %s10, 0
    %p93 = por %p91, %p92
    %p94 = scmp.ne.s32.totalorder %s86, %s88
    %p95 = scmp.eq.s32.totalorder %s15, 1
    %p96 = por %p94, %p95
    %p97 = scmp.ne.s32.totalorder %s88, %s89
    %p98 = scmp.eq.s32.totalorder %s15, 0
    %p99 = por %p97, %p98
    %p100 = scmp.ne.s32.totalorder %s88, %s89
    %p101 = scmp.eq.s32.totalorder %s16, 1
    %p102 = por %p100, %p101
    %p104 = scmp.ne.s32.totalorder %s89, %s103
    %p105 = scmp.eq.s32.totalorder %s16, 0
    %p106 = por %p104, %p105
    %s107 = ssub.s32 %s10, %s17
    %p108 = scmp.eq.s32.totalorder %s107, 0
    %s110 = sadd.s32 %s109, 1
    %s111 = scalar_select %p108, %s109, %s110
    %p114 = pneg %p108
    %p115 = scmp.eq.s32.totalorder %s10, 1
    %p116 = por %p114, %p115
    %p117 = scmp.ne.s32.totalorder %s109, %s112
    %p118 = scmp.eq.s32.totalorder %s10, 0
    %p119 = por %p117, %p118
    %p120 = scmp.ne.s32.totalorder %s109, %s112
    %p121 = scmp.eq.s32.totalorder %s15, 1
    %p122 = por %p120, %p121
    %p123 = scmp.ne.s32.totalorder %s112, %s113
    %p124 = scmp.eq.s32.totalorder %s15, 0
    %p125 = por %p123, %p124
    %p126 = scmp.ne.s32.totalorder %s112, %s113
    %p127 = scmp.eq.s32.totalorder %s16, 1
    %p128 = por %p126, %p127
    %p130 = scmp.ne.s32.totalorder %s113, %s129
    %p131 = scmp.eq.s32.totalorder %s16, 0
    %p132 = por %p130, %p131
    %p133 = scmp.le.s32.totalorder 1, %s10
    %p134 = scmp.lt.s32.totalorder %s10, 3
    %p135 = pnand %p133, %p134
    %p136 = pneg %p135
    // Predicated region
    $region9: #{lenet_forward.3} parent=5 // pred_check
      _
    $region10: #{lenet_forward.3} parent=5 // pred_check_branch
      %138 = sbr.rel (%p135) target = $region12
    $region11: #{lenet_forward.3} parent=5 // pred_region
      %s139 = ssub.s32 %s10, 1
      // Predicated region
      $region13: #{lenet_forward.3} parent=11 // pred_check
        %p140 = pneg %p57
      $region14: #{lenet_forward.3} parent=11 // pred_check_branch
        %142 = sbr.rel (%p140) target = $region16
      $region15: #{lenet_forward.3} parent=11 // pred_region
        _
      $region16: #{lenet_forward.3} parent=11 // pred_fallthru
        _
      // Predicated region
      $region17: #{lenet_forward.3} parent=11 // pred_check
        %p143 = pneg %p78
      $region18: #{lenet_forward.3} parent=11 // pred_check_branch
        %145 = sbr.rel (%p143) target = $region20
      $region19: #{lenet_forward.3} parent=11 // pred_region
        _
      $region20: #{lenet_forward.3} parent=11 // pred_fallthru
        _
      // Predicated region
      $region21: #{lenet_forward.3} parent=11 // pred_check
        %p146 = pneg %p99
      $region22: #{lenet_forward.3} parent=11 // pred_check_branch
        %148 = sbr.rel (%p146) target = $region24
      $region23: #{lenet_forward.3} parent=11 // pred_region
        _
      $region24: #{lenet_forward.3} parent=11 // pred_fallthru
        _
    $region12: #{lenet_forward.3} parent=5 // pred_fallthru
      _
    %p149 = scmp.lt.s32.totalorder %s10, 2
    // Predicated region
    $region25: #{lenet_forward.3} parent=5 // pred_check
      %p150 = pneg %p149
    $region26: #{lenet_forward.3} parent=5 // pred_check_branch
      %152 = sbr.rel (%p150) target = $region28
    $region27: #{lenet_forward.3} parent=5 // pred_region
      // Predicated region
      $region29: #{lenet_forward.3} parent=27 // pred_check
        %p153 = pneg %p30
      $region30: #{lenet_forward.3} parent=27 // pred_check_branch
        %155 = sbr.rel (%p153) target = $region32
      $region31: #{lenet_forward.3} parent=27 // pred_region
        %s156 = smul.u32 72, %s10
        %p157 = scmp.lt.s32.totalorder %s156, 143
        %s158 = scalar_select %p157, %s156, 143
        %s159 = smul.addr %s158, 8
        %s160 = scalar_lea.vmem %s0, %s159
        %s161 = smul.u32 72, %s10
      $region32: #{lenet_forward.3} parent=27 // pred_fallthru
        _
    $region28: #{lenet_forward.3} parent=5 // pred_fallthru
      _
    %p162 = scmp.le.s32.totalorder 1, %s10
    %p163 = scmp.lt.s32.totalorder %s10, 3
    %p164 = pnand %p162, %p163
    %p165 = pneg %p164
    // Predicated region
    $region33: #{lenet_forward.3} parent=5 // pred_check
      _
    $region34: #{lenet_forward.3} parent=5 // pred_check_branch
      %167 = sbr.rel (%p164) target = $region36
    $region35: #{lenet_forward.3} parent=5 // pred_region
      %s168 = ssub.s32 %s10, 1
      %s169 = smul.u32 72, %s15
      %p170 = scmp.lt.s32.totalorder %s169, 143
      %s171 = scalar_select %p170, %s169, 143
      %s172 = smul.addr %s171, 8
      %s173 = scalar_lea.vmem %s0, %s172
      %p174 = pneg %p36
      %p175 = pneg %p33
      %p176 = pneg %p57
      %p177 = pneg %p54
      %p178 = pneg %p78
      %p179 = pneg %p75
      %p180 = pneg %p99
      %p181 = pneg %p96
      %p182 = pneg %p125
      %p183 = pneg %p122
      %s184 = smul.u32 18, %s15
      %p185 = scmp.lt.s32.totalorder %s184, 35
      %s186 = scalar_select %p185, %s184, 35
      %s187 = smul.addr %s186, 8
      %s188 = scalar_lea.vmem %s4, %s187
      %s189 = smul.u32 72, %s15
      %p190 = scmp.lt.s32.totalorder %s189, 143
      %s191 = scalar_select %p190, %s189, 143
      %s192 = smul.addr %s191, 8
      %s193 = scalar_lea.vmem %s0, %s192
      %s194 = smul.u32 72, %s15
      %s195 = smul.u32 18, %s15
      %p196 = scmp.lt.s32.totalorder %s195, 35
      %s197 = scalar_select %p196, %s195, 35
      %s198 = smul.addr %s197, 8
      %s199 = scalar_lea.vmem %s4, %s198
      %s200 = smul.u32 18, %s15
      %v201 = vld [vmem:[%s193] sm:$0xff]
      %v202 = vld [vmem:[%s193 + $0x8] sm:$0xff]
      %v203 = vld [vmem:[%s193 + $0x10] sm:$0xff]
      %v204 = vld [vmem:[%s193 + $0x18] sm:$0xff]
      %v205 = vld [vmem:[%s193 + $0x20] sm:$0xff]
      %v206 = vld [vmem:[%s193 + $0x28] sm:$0xff]
      %v207 = vld [vmem:[%s193 + $0x30] sm:$0xff]
      %v208 = vld [vmem:[%s193 + $0x38] sm:$0xff]
      %v209 = vld [vmem:[%s193 + $0x40] sm:$0xff]
      %v210 = vld [vmem:[%s193 + $0x48] sm:$0xff]
      %v211 = vld [vmem:[%s193 + $0x50] sm:$0xff]
      %v212 = vld [vmem:[%s193 + $0x58] sm:$0xff]
      %v213 = vld [vmem:[%s193 + $0x60] sm:$0xff]
      %v214 = vld [vmem:[%s193 + $0x68] sm:$0xff]
      %v215 = vld [vmem:[%s193 + $0x70] sm:$0xff]
      %v216 = vld [vmem:[%s193 + $0x78] sm:$0xff]
      %v217 = vld [vmem:[%s193 + $0x80] sm:$0xff]
      %v218 = vld [vmem:[%s193 + $0x88] sm:$0xff]
      %v219 = vld [vmem:[%s193 + $0x90] sm:$0xff]
      %v220 = vld [vmem:[%s193 + $0x98] sm:$0xff]
      %v221 = vld [vmem:[%s193 + $0xa0] sm:$0xff]
      %v222 = vld [vmem:[%s193 + $0xa8] sm:$0xff]
      %v223 = vld [vmem:[%s193 + $0xb0] sm:$0xff]
      %v224 = vld [vmem:[%s193 + $0xb8] sm:$0xff]
      %v225 = vld [vmem:[%s193 + $0xc0] sm:$0xff]
      %v226 = vld [vmem:[%s193 + $0xc8] sm:$0xff]
      %v227 = vld [vmem:[%s193 + $0xd0] sm:$0xff]
      %v228 = vld [vmem:[%s193 + $0xd8] sm:$0xff]
      %v229 = vld [vmem:[%s193 + $0xe0] sm:$0xff]
      %v230 = vld [vmem:[%s193 + $0xe8] sm:$0xff]
      %v231 = vld [vmem:[%s193 + $0xf0] sm:$0xff]
      %v232 = vld [vmem:[%s193 + $0xf8] sm:$0xff]
      %v233 = vld [vmem:[%s193 + $0x100] sm:$0xff]
      %v234 = vld [vmem:[%s193 + $0x108] sm:$0xff]
      %v235 = vld [vmem:[%s193 + $0x110] sm:$0xff]
      %v236 = vld [vmem:[%s193 + $0x118] sm:$0xff]
      %v237 = vld [vmem:[%s193 + $0x120] sm:$0xff]
      %v238 = vld [vmem:[%s193 + $0x128] sm:$0xff]
      %v239 = vld [vmem:[%s193 + $0x130] sm:$0xff]
      %v240 = vld [vmem:[%s193 + $0x138] sm:$0xff]
      %v241 = vld [vmem:[%s193 + $0x140] sm:$0xff]
      %v242 = vld [vmem:[%s193 + $0x148] sm:$0xff]
      %v243 = vld [vmem:[%s193 + $0x150] sm:$0xff]
      %v244 = vld [vmem:[%s193 + $0x158] sm:$0xff]
      %v245 = vld [vmem:[%s193 + $0x160] sm:$0xff]
      %v246 = vld [vmem:[%s193 + $0x168] sm:$0xff]
      %v247 = vld [vmem:[%s193 + $0x170] sm:$0xff]
      %v248 = vld [vmem:[%s193 + $0x178] sm:$0xff]
      %v249 = vld [vmem:[%s193 + $0x180] sm:$0xff]
      %v250 = vld [vmem:[%s193 + $0x188] sm:$0xff]
      %v251 = vld [vmem:[%s193 + $0x190] sm:$0xff]
      %v252 = vld [vmem:[%s193 + $0x198] sm:$0xff]
      %v253 = vld [vmem:[%s193 + $0x1a0] sm:$0xff]
      %v254 = vld [vmem:[%s193 + $0x1a8] sm:$0xff]
      %v255 = vld [vmem:[%s193 + $0x1b0] sm:$0xff]
      %v256 = vld [vmem:[%s193 + $0x1b8] sm:$0xff]
      %v257 = vld [vmem:[%s193 + $0x1c0] sm:$0xff]
      %v258 = vld [vmem:[%s193 + $0x1c8] sm:$0xff]
      %v259 = vld [vmem:[%s193 + $0x1d0] sm:$0xff]
      %v260 = vld [vmem:[%s193 + $0x1d8] sm:$0xff]
      %v261 = vld [vmem:[%s193 + $0x1e0] sm:$0xff]
      %v262 = vld [vmem:[%s193 + $0x1e8] sm:$0xff]
      %v263 = vld [vmem:[%s193 + $0x1f0] sm:$0xff]
      %v264 = vld [vmem:[%s193 + $0x1f8] sm:$0xff]
      %v265 = vld [vmem:[%s193 + $0x200] sm:$0xff]
      %v266 = vld [vmem:[%s193 + $0x208] sm:$0xff]
      %v267 = vld [vmem:[%s193 + $0x210] sm:$0xff]
      %v268 = vld [vmem:[%s193 + $0x218] sm:$0xff]
      %v269 = vld [vmem:[%s193 + $0x220] sm:$0xff]
      %v270 = vld [vmem:[%s193 + $0x228] sm:$0xff]
      %v271 = vld [vmem:[%s193 + $0x230] sm:$0xff]
      %v272 = vld [vmem:[%s193 + $0x238] sm:$0xff]
      %v273 = vld [vmem:[%s1] sm:$0xff]
      %v274 = vld [vmem:[%s1 + $0x8] sm:$0xff]
      %v275 = vld [vmem:[%s1 + $0x10] sm:$0xff]
      %v276 = vld [vmem:[%s1 + $0x18] sm:$0x1]
      %v277 = vld [vmem:[%s2] sm:$0x1]
      %v279 = vlaneseq
      %v280 = vshrl.u32 %v279, 7
      %v281 = vsub.s32 0, %v280
      %v282 = vrot.slane %v277, %v281
      %vm284 = vcmask 203776
      %v286 = vsel %vm284, %v201, 0
      %v289 = vsel %vm284, %v202, 0
      %v292 = vsel %vm284, %v203, 0
      %v295 = vsel %vm284, %v204, 0
      %v298 = vsel %vm284, %v205, 0
      %v301 = vsel %vm284, %v206, 0
      %v304 = vsel %vm284, %v207, 0
      %v307 = vsel %vm284, %v208, 0
      %v310 = vsel %vm284, %v209, 0
      %v313 = vsel %vm284, %v210, 0
      %v316 = vsel %vm284, %v211, 0
      %v319 = vsel %vm284, %v212, 0
      %v322 = vsel %vm284, %v213, 0
      %v325 = vsel %vm284, %v214, 0
      %v328 = vsel %vm284, %v215, 0
      %v331 = vsel %vm284, %v216, 0
      %v334 = vsel %vm284, %v217, 0
      %v337 = vsel %vm284, %v218, 0
      %v340 = vsel %vm284, %v219, 0
      %v343 = vsel %vm284, %v220, 0
      %v346 = vsel %vm284, %v221, 0
      %v349 = vsel %vm284, %v222, 0
      %v352 = vsel %vm284, %v223, 0
      %v355 = vsel %vm284, %v224, 0
      %v358 = vsel %vm284, %v225, 0
      %v361 = vsel %vm284, %v226, 0
      %v364 = vsel %vm284, %v227, 0
      %v367 = vsel %vm284, %v228, 0
      %v370 = vsel %vm284, %v229, 0
      %v373 = vsel %vm284, %v230, 0
      %v376 = vsel %vm284, %v231, 0
      %v379 = vsel %vm284, %v232, 0
      %v382 = vsel %vm284, %v233, 0
      %v385 = vsel %vm284, %v234, 0
      %v388 = vsel %vm284, %v235, 0
      %v391 = vsel %vm284, %v236, 0
      %v394 = vsel %vm284, %v237, 0
      %v397 = vsel %vm284, %v238, 0
      %v400 = vsel %vm284, %v239, 0
      %v403 = vsel %vm284, %v240, 0
      %v406 = vsel %vm284, %v241, 0
      %v409 = vsel %vm284, %v242, 0
      %v412 = vsel %vm284, %v243, 0
      %v415 = vsel %vm284, %v244, 0
      %v418 = vsel %vm284, %v245, 0
      %v421 = vsel %vm284, %v246, 0
      %v424 = vsel %vm284, %v247, 0
      %v427 = vsel %vm284, %v248, 0
      %v430 = vsel %vm284, %v249, 0
      %v433 = vsel %vm284, %v250, 0
      %v436 = vsel %vm284, %v251, 0
      %v439 = vsel %vm284, %v252, 0
      %v442 = vsel %vm284, %v253, 0
      %v445 = vsel %vm284, %v254, 0
      %v448 = vsel %vm284, %v255, 0
      %v451 = vsel %vm284, %v256, 0
      %v454 = vsel %vm284, %v257, 0
      %v457 = vsel %vm284, %v258, 0
      %v460 = vsel %vm284, %v259, 0
      %v463 = vsel %vm284, %v260, 0
      %v466 = vsel %vm284, %v261, 0
      %v469 = vsel %vm284, %v262, 0
      %v472 = vsel %vm284, %v263, 0
      %v475 = vsel %vm284, %v264, 0
      %v478 = vsel %vm284, %v265, 0
      %v481 = vsel %vm284, %v266, 0
      %v484 = vsel %vm284, %v267, 0
      %v487 = vsel %vm284, %v268, 0
      %v490 = vsel %vm284, %v269, 0
      %v493 = vsel %vm284, %v270, 0
      %v496 = vsel %vm284, %v271, 0
      %v499 = vsel %vm284, %v272, 0
      %vm501 = vcmask 1040384
      %v503 = vsel %vm501, %v276, 0
      %505 = vmatprep.subr.mxu0 0.0
      %506 = vmatpush1.msra.mxu0 %v273
      %507 = vmatprep.subr.mxu0 0.0
      %508 = vmatpush1.msra.mxu0 %v274
      %509 = vmatprep.subr.mxu0 0.0
      %510 = vmatpush1.msra.mxu0 %v275
      %511 = vmatprep.subr.mxu0 0.0
      %512 = vmatpush1.msra.mxu0 %v503
      %513 = vmatprep.subr.mxu0 0.0
      %514 = vmatpush1.msra.mxu0 0.0
      %515 = vmatprep.subr.mxu0 0.0
      %516 = vmatpush1.msra.mxu0 0.0
      %517 = vmatprep.subr.mxu0 0.0
      %518 = vmatpush1.msra.mxu0 0.0
      %519 = vmatprep.subr.mxu0 0.0
      %520 = vmatpush1.msra.mxu0 0.0
      %521 = vmatprep.subr.mxu0 0.0
      %522 = vmatpush1.msra.mxu0 0.0
      %523 = vmatprep.subr.mxu0 0.0
      %524 = vmatpush1.msra.mxu0 0.0
      %525 = vmatprep.subr.mxu0 0.0
      %526 = vmatpush1.msra.mxu0 0.0
      %527 = vmatprep.subr.mxu0 0.0
      %528 = vmatpush1.msra.mxu0 0.0
      %529 = vmatprep.subr.mxu0 0.0
      %530 = vmatpush1.msra.mxu0 0.0
      %531 = vmatprep.subr.mxu0 0.0
      %532 = vmatpush1.msra.mxu0 0.0
      %533 = vmatprep.subr.mxu0 0.0
      %534 = vmatpush1.msra.mxu0 0.0
      %535 = vmatprep.subr.mxu0 0.0
      %536 = vmatpush1.msra.mxu0 0.0
      %537 = vmatprep.subr.mxu0 0.0
      %538 = vmatpush1.msra.mxu0 0.0
      %539 = vmatprep.subr.mxu0 0.0
      %540 = vmatpush1.msra.mxu0 0.0
      %541 = vmatprep.subr.mxu0 0.0
      %542 = vmatpush1.msra.mxu0 0.0
      %543 = vmatprep.subr.mxu0 0.0
      %544 = vmatpush1.msra.mxu0 0.0
      %545 = vmatprep.subr.mxu0 0.0
      %546 = vmatpush1.msra.mxu0 0.0
      %547 = vmatprep.subr.mxu0 0.0
      %548 = vmatpush1.msra.mxu0 0.0
      %549 = vmatprep.subr.mxu0 0.0
      %550 = vmatpush1.msra.mxu0 0.0
      %551 = vmatprep.subr.mxu0 0.0
      %552 = vmatpush1.msra.mxu0 0.0
      %553 = vmatprep.subr.mxu0 0.0
      %554 = vmatpush1.msra.mxu0 0.0
      %555 = vmatprep.subr.mxu0 0.0
      %556 = vmatpush1.msra.mxu0 0.0
      %557 = vmatprep.subr.mxu0 0.0
      %558 = vmatpush1.msra.mxu0 0.0
      %559 = vmatprep.subr.mxu0 0.0
      %560 = vmatpush1.msra.mxu0 0.0
      %561 = vmatprep.subr.mxu0 0.0
      %562 = vmatpush1.msra.mxu0 0.0
      %563 = vmatprep.subr.mxu0 0.0
      %564 = vmatpush1.msra.mxu0 0.0
      %565 = vmatprep.subr.mxu0 0.0
      %566 = vmatpush1.msra.mxu0 0.0
      %567 = vmatprep.subr.mxu0 0.0
      %568 = vmatpush1.msra.mxu0 0.0
      %569 = vmatprep.mubr.f32.mxu0 0.0
      %570 = vmatmul.mubr.f32.gmra.mrb[0].mxu0 %v286
      %v571 = vpop.f32.mrb[0].mxu0
      %v572 = vadd.f32 %v282, %v571
      %v573 = vpop.f32.mrb[0].mxu0
      %574 = vmatprep.mubr.f32.mxu0 0.0
      %575 = vmatmul.mubr.f32.gmra.mrb[0].mxu0 %v289
      %v576 = vpop.f32.mrb[0].mxu0
      %v577 = vadd.f32 %v282, %v576
      %v578 = vpop.f32.mrb[0].mxu0
      %579 = vmatprep.mubr.f32.mxu0 0.0
      %580 = vmatmul.mubr.f32.gmra.mrb[0].mxu0 %v292
      %v581 = vpop.f32.mrb[0].mxu0
      %v582 = vadd.f32 %v282, %v581
      %v583 = vpop.f32.mrb[0].mxu0
      %584 = vmatprep.mubr.f32.mxu0 0.0
      %585 = vmatmul.mubr.f32.gmra.mrb[0].mxu0 %v295
      %v586 = vpop.f32.mrb[0].mxu0
      %v587 = vadd.f32 %v282, %v586
      %v588 = vpop.f32.mrb[0].mxu0
      %589 = vmatprep.mubr.f32.mxu0 0.0
      %590 = vmatmul.mubr.f32.gmra.mrb[0].mxu0 %v298
      %v591 = vpop.f32.mrb[0].mxu0
      %v592 = vadd.f32 %v282, %v591
      %v593 = vpop.f32.mrb[0].mxu0
      %594 = vmatprep.mubr.f32.mxu0 0.0
      %595 = vmatmul.mubr.f32.gmra.mrb[0].mxu0 %v301
      %v596 = vpop.f32.mrb[0].mxu0
      %v597 = vadd.f32 %v282, %v596
      %v598 = vpop.f32.mrb[0].mxu0
      %599 = vmatprep.mubr.f32.mxu0 0.0
      %600 = vmatmul.mubr.f32.gmra.mrb[0].mxu0 %v304
      %v601 = vpop.f32.mrb[0].mxu0
      %v602 = vadd.f32 %v282, %v601
      %v603 = vpop.f32.mrb[0].mxu0
      %604 = vmatprep.mubr.f32.mxu0 0.0
      %605 = vmatmul.mubr.f32.gmra.mrb[0].mxu0 %v307
      %v606 = vpop.f32.mrb[0].mxu0
      %v607 = vadd.f32 %v282, %v606
      %v608 = vpop.f32.mrb[0].mxu0
      %609 = vmatprep.mubr.f32.mxu0 0.0
      %610 = vmatmul.mubr.f32.gmra.mrb[0].mxu0 %v310
      %v611 = vpop.f32.mrb[0].mxu0
      %v612 = vadd.f32 %v282, %v611
      %v613 = vpop.f32.mrb[0].mxu0
      %614 = vmatprep.mubr.f32.mxu0 0.0
      %615 = vmatmul.mubr.f32.gmra.mrb[0].mxu0 %v313
      %v616 = vpop.f32.mrb[0].mxu0
      %v617 = vadd.f32 %v282, %v616
      %v618 = vpop.f32.mrb[0].mxu0
      %619 = vmatprep.mubr.f32.mxu0 0.0
      %620 = vmatmul.mubr.f32.gmra.mrb[0].mxu0 %v316
      %v621 = vpop.f32.mrb[0].mxu0
      %v622 = vadd.f32 %v282, %v621
      %v623 = vpop.f32.mrb[0].mxu0
      %624 = vmatprep.mubr.f32.mxu0 0.0
      %625 = vmatmul.mubr.f32.gmra.mrb[0].mxu0 %v319
      %v626 = vpop.f32.mrb[0].mxu0
      %v627 = vadd.f32 %v282, %v626
      %v628 = vpop.f32.mrb[0].mxu0
      %629 = vmatprep.mubr.f32.mxu0 0.0
      %630 = vmatmul.mubr.f32.gmra.mrb[0].mxu0 %v322
      %v631 = vpop.f32.mrb[0].mxu0
      %v632 = vadd.f32 %v282, %v631
      %v633 = vpop.f32.mrb[0].mxu0
      %634 = vmatprep.mubr.f32.mxu0 0.0
      %635 = vmatmul.mubr.f32.gmra.mrb[0].mxu0 %v325
      %v636 = vpop.f32.mrb[0].mxu0
      %v637 = vadd.f32 %v282, %v636
      %v638 = vpop.f32.mrb[0].mxu0
      %639 = vmatprep.mubr.f32.mxu0 0.0
      %640 = vmatmul.mubr.f32.gmra.mrb[0].mxu0 %v328
      %v641 = vpop.f32.mrb[0].mxu0
      %v642 = vadd.f32 %v282, %v641
      %v643 = vpop.f32.mrb[0].mxu0
      %644 = vmatprep.mubr.f32.mxu0 0.0
      %645 = vmatmul.mubr.f32.gmra.mrb[0].mxu0 %v331
      %v646 = vpop.f32.mrb[0].mxu0
      %v647 = vadd.f32 %v282, %v646
      %v648 = vpop.f32.mrb[0].mxu0
      %649 = vmatprep.mubr.f32.mxu0 0.0
      %650 = vmatmul.mubr.f32.gmra.mrb[0].mxu0 %v334
      %v651 = vpop.f32.mrb[0].mxu0
      %v652 = vadd.f32 %v282, %v651
      %v653 = vpop.f32.mrb[0].mxu0
      %654 = vmatprep.mubr.f32.mxu0 0.0
      %655 = vmatmul.mubr.f32.gmra.mrb[0].mxu0 %v337
      %v656 = vpop.f32.mrb[0].mxu0
      %v657 = vadd.f32 %v282, %v656
      %v658 = vpop.f32.mrb[0].mxu0
      %659 = vmatprep.mubr.f32.mxu0 0.0
      %660 = vmatmul.mubr.f32.gmra.mrb[0].mxu0 %v340
      %v661 = vpop.f32.mrb[0].mxu0
      %v662 = vadd.f32 %v282, %v661
      %v663 = vpop.f32.mrb[0].mxu0
      %664 = vmatprep.mubr.f32.mxu0 0.0
      %665 = vmatmul.mubr.f32.gmra.mrb[0].mxu0 %v343
      %v666 = vpop.f32.mrb[0].mxu0
      %v667 = vadd.f32 %v282, %v666
      %v668 = vpop.f32.mrb[0].mxu0
      %669 = vmatprep.mubr.f32.mxu0 0.0
      %670 = vmatmul.mubr.f32.gmra.mrb[0].mxu0 %v346
      %v671 = vpop.f32.mrb[0].mxu0
      %v672 = vadd.f32 %v282, %v671
      %v673 = vpop.f32.mrb[0].mxu0
      %674 = vmatprep.mubr.f32.mxu0 0.0
      %675 = vmatmul.mubr.f32.gmra.mrb[0].mxu0 %v349
      %v676 = vpop.f32.mrb[0].mxu0
      %v677 = vadd.f32 %v282, %v676
      %v678 = vpop.f32.mrb[0].mxu0
      %679 = vmatprep.mubr.f32.mxu0 0.0
      %680 = vmatmul.mubr.f32.gmra.mrb[0].mxu0 %v352
      %v681 = vpop.f32.mrb[0].mxu0
      %v682 = vadd.f32 %v282, %v681
      %v683 = vpop.f32.mrb[0].mxu0
      %684 = vmatprep.mubr.f32.mxu0 0.0
      %685 = vmatmul.mubr.f32.gmra.mrb[0].mxu0 %v355
      %v686 = vpop.f32.mrb[0].mxu0
      %v687 = vadd.f32 %v282, %v686
      %v688 = vpop.f32.mrb[0].mxu0
      %689 = vmatprep.mubr.f32.mxu0 0.0
      %690 = vmatmul.mubr.f32.gmra.mrb[0].mxu0 %v358
      %v691 = vpop.f32.mrb[0].mxu0
      %v692 = vadd.f32 %v282, %v691
      %v693 = vpop.f32.mrb[0].mxu0
      %694 = vmatprep.mubr.f32.mxu0 0.0
      %695 = vmatmul.mubr.f32.gmra.mrb[0].mxu0 %v361
      %v696 = vpop.f32.mrb[0].mxu0
      %v697 = vadd.f32 %v282, %v696
      %v698 = vpop.f32.mrb[0].mxu0
      %699 = vmatprep.mubr.f32.mxu0 0.0
      %700 = vmatmul.mubr.f32.gmra.mrb[0].mxu0 %v364
      %v701 = vpop.f32.mrb[0].mxu0
      %v702 = vadd.f32 %v282, %v701
      %v703 = vpop.f32.mrb[0].mxu0
      %704 = vmatprep.mubr.f32.mxu0 0.0
      %705 = vmatmul.mubr.f32.gmra.mrb[0].mxu0 %v367
      %v706 = vpop.f32.mrb[0].mxu0
      %v707 = vadd.f32 %v282, %v706
      %v708 = vpop.f32.mrb[0].mxu0
      %709 = vmatprep.mubr.f32.mxu0 0.0
      %710 = vmatmul.mubr.f32.gmra.mrb[0].mxu0 %v370
      %v711 = vpop.f32.mrb[0].mxu0
      %v712 = vadd.f32 %v282, %v711
      %v713 = vpop.f32.mrb[0].mxu0
      %714 = vmatprep.mubr.f32.mxu0 0.0
      %715 = vmatmul.mubr.f32.gmra.mrb[0].mxu0 %v373
      %v716 = vpop.f32.mrb[0].mxu0
      %v717 = vadd.f32 %v282, %v716
      %v718 = vpop.f32.mrb[0].mxu0
      %719 = vmatprep.mubr.f32.mxu0 0.0
      %720 = vmatmul.mubr.f32.gmra.mrb[0].mxu0 %v376
      %v721 = vpop.f32.mrb[0].mxu0
      %v722 = vadd.f32 %v282, %v721
      %v723 = vpop.f32.mrb[0].mxu0
      %724 = vmatprep.mubr.f32.mxu0 0.0
      %725 = vmatmul.mubr.f32.gmra.mrb[0].mxu0 %v379
      %v726 = vpop.f32.mrb[0].mxu0
      %v727 = vadd.f32 %v282, %v726
      %v728 = vpop.f32.mrb[0].mxu0
      %729 = vmatprep.mubr.f32.mxu0 0.0
      %730 = vmatmul.mubr.f32.gmra.mrb[0].mxu0 %v382
      %v731 = vpop.f32.mrb[0].mxu0
      %v732 = vadd.f32 %v282, %v731
      %v733 = vpop.f32.mrb[0].mxu0
      %734 = vmatprep.mubr.f32.mxu0 0.0
      %735 = vmatmul.mubr.f32.gmra.mrb[0].mxu0 %v385
      %v736 = vpop.f32.mrb[0].mxu0
      %v737 = vadd.f32 %v282, %v736
      %v738 = vpop.f32.mrb[0].mxu0
      %739 = vmatprep.mubr.f32.mxu0 0.0
      %740 = vmatmul.mubr.f32.gmra.mrb[0].mxu0 %v388
      %v741 = vpop.f32.mrb[0].mxu0
      %v742 = vadd.f32 %v282, %v741
      %v743 = vpop.f32.mrb[0].mxu0
      %744 = vmatprep.mubr.f32.mxu0 0.0
      %745 = vmatmul.mubr.f32.gmra.mrb[0].mxu0 %v391
      %v746 = vpop.f32.mrb[0].mxu0
      %v747 = vadd.f32 %v282, %v746
      %v748 = vpop.f32.mrb[0].mxu0
      %749 = vmatprep.mubr.f32.mxu0 0.0
      %750 = vmatmul.mubr.f32.gmra.mrb[0].mxu0 %v394
      %v751 = vpop.f32.mrb[0].mxu0
      %v752 = vadd.f32 %v282, %v751
      %v753 = vpop.f32.mrb[0].mxu0
      %754 = vmatprep.mubr.f32.mxu0 0.0
      %755 = vmatmul.mubr.f32.gmra.mrb[0].mxu0 %v397
      %v756 = vpop.f32.mrb[0].mxu0
      %v757 = vadd.f32 %v282, %v756
      %v758 = vpop.f32.mrb[0].mxu0
      %759 = vmatprep.mubr.f32.mxu0 0.0
      %760 = vmatmul.mubr.f32.gmra.mrb[0].mxu0 %v400
      %v761 = vpop.f32.mrb[0].mxu0
      %v762 = vadd.f32 %v282, %v761
      %v763 = vpop.f32.mrb[0].mxu0
      %764 = vmatprep.mubr.f32.mxu0 0.0
      %765 = vmatmul.mubr.f32.gmra.mrb[0].mxu0 %v403
      %v766 = vpop.f32.mrb[0].mxu0
      %v767 = vadd.f32 %v282, %v766
      %v768 = vpop.f32.mrb[0].mxu0
      %769 = vmatprep.mubr.f32.mxu0 0.0
      %770 = vmatmul.mubr.f32.gmra.mrb[0].mxu0 %v406
      %v771 = vpop.f32.mrb[0].mxu0
      %v772 = vadd.f32 %v282, %v771
      %v773 = vpop.f32.mrb[0].mxu0
      %774 = vmatprep.mubr.f32.mxu0 0.0
      %775 = vmatmul.mubr.f32.gmra.mrb[0].mxu0 %v409
      %v776 = vpop.f32.mrb[0].mxu0
      %v777 = vadd.f32 %v282, %v776
      %v778 = vpop.f32.mrb[0].mxu0
      %779 = vmatprep.mubr.f32.mxu0 0.0
      %780 = vmatmul.mubr.f32.gmra.mrb[0].mxu0 %v412
      %v781 = vpop.f32.mrb[0].mxu0
      %v782 = vadd.f32 %v282, %v781
      %v783 = vpop.f32.mrb[0].mxu0
      %784 = vmatprep.mubr.f32.mxu0 0.0
      %785 = vmatmul.mubr.f32.gmra.mrb[0].mxu0 %v415
      %v786 = vpop.f32.mrb[0].mxu0
      %v787 = vadd.f32 %v282, %v786
      %v788 = vpop.f32.mrb[0].mxu0
      %789 = vmatprep.mubr.f32.mxu0 0.0
      %790 = vmatmul.mubr.f32.gmra.mrb[0].mxu0 %v418
      %v791 = vpop.f32.mrb[0].mxu0
      %v792 = vadd.f32 %v282, %v791
      %v793 = vpop.f32.mrb[0].mxu0
      %794 = vmatprep.mubr.f32.mxu0 0.0
      %795 = vmatmul.mubr.f32.gmra.mrb[0].mxu0 %v421
      %v796 = vpop.f32.mrb[0].mxu0
      %v797 = vadd.f32 %v282, %v796
      %v798 = vpop.f32.mrb[0].mxu0
      %799 = vmatprep.mubr.f32.mxu0 0.0
      %800 = vmatmul.mubr.f32.gmra.mrb[0].mxu0 %v424
      %v801 = vpop.f32.mrb[0].mxu0
      %v802 = vadd.f32 %v282, %v801
      %v803 = vpop.f32.mrb[0].mxu0
      %804 = vmatprep.mubr.f32.mxu0 0.0
      %805 = vmatmul.mubr.f32.gmra.mrb[0].mxu0 %v427
      %v806 = vpop.f32.mrb[0].mxu0
      %v807 = vadd.f32 %v282, %v806
      %v808 = vpop.f32.mrb[0].mxu0
      %809 = vmatprep.mubr.f32.mxu0 0.0
      %810 = vmatmul.mubr.f32.gmra.mrb[0].mxu0 %v430
      %v811 = vpop.f32.mrb[0].mxu0
      %v812 = vadd.f32 %v282, %v811
      %v813 = vpop.f32.mrb[0].mxu0
      %814 = vmatprep.mubr.f32.mxu0 0.0
      %815 = vmatmul.mubr.f32.gmra.mrb[0].mxu0 %v433
      %v816 = vpop.f32.mrb[0].mxu0
      %v817 = vadd.f32 %v282, %v816
      %v818 = vpop.f32.mrb[0].mxu0
      %819 = vmatprep.mubr.f32.mxu0 0.0
      %820 = vmatmul.mubr.f32.gmra.mrb[0].mxu0 %v436
      %v821 = vpop.f32.mrb[0].mxu0
      %v822 = vadd.f32 %v282, %v821
      %v823 = vpop.f32.mrb[0].mxu0
      %824 = vmatprep.mubr.f32.mxu0 0.0
      %825 = vmatmul.mubr.f32.gmra.mrb[0].mxu0 %v439
      %v826 = vpop.f32.mrb[0].mxu0
      %v827 = vadd.f32 %v282, %v826
      %v828 = vpop.f32.mrb[0].mxu0
      %829 = vmatprep.mubr.f32.mxu0 0.0
      %830 = vmatmul.mubr.f32.gmra.mrb[0].mxu0 %v442
      %v831 = vpop.f32.mrb[0].mxu0
      %v832 = vadd.f32 %v282, %v831
      %v833 = vpop.f32.mrb[0].mxu0
      %834 = vmatprep.mubr.f32.mxu0 0.0
      %835 = vmatmul.mubr.f32.gmra.mrb[0].mxu0 %v445
      %v836 = vpop.f32.mrb[0].mxu0
      %v837 = vadd.f32 %v282, %v836
      %v838 = vpop.f32.mrb[0].mxu0
      %839 = vmatprep.mubr.f32.mxu0 0.0
      %840 = vmatmul.mubr.f32.gmra.mrb[0].mxu0 %v448
      %v841 = vpop.f32.mrb[0].mxu0
      %v842 = vadd.f32 %v282, %v841
      %v843 = vpop.f32.mrb[0].mxu0
      %844 = vmatprep.mubr.f32.mxu0 0.0
      %845 = vmatmul.mubr.f32.gmra.mrb[0].mxu0 %v451
      %v846 = vpop.f32.mrb[0].mxu0
      %v847 = vadd.f32 %v282, %v846
      %v848 = vpop.f32.mrb[0].mxu0
      %849 = vmatprep.mubr.f32.mxu0 0.0
      %850 = vmatmul.mubr.f32.gmra.mrb[0].mxu0 %v454
      %v851 = vpop.f32.mrb[0].mxu0
      %v852 = vadd.f32 %v282, %v851
      %v853 = vpop.f32.mrb[0].mxu0
      %854 = vmatprep.mubr.f32.mxu0 0.0
      %855 = vmatmul.mubr.f32.gmra.mrb[0].mxu0 %v457
      %v856 = vpop.f32.mrb[0].mxu0
      %v857 = vadd.f32 %v282, %v856
      %v858 = vpop.f32.mrb[0].mxu0
      %859 = vmatprep.mubr.f32.mxu0 0.0
      %860 = vmatmul.mubr.f32.gmra.mrb[0].mxu0 %v460
      %v861 = vpop.f32.mrb[0].mxu0
      %v862 = vadd.f32 %v282, %v861
      %v863 = vpop.f32.mrb[0].mxu0
      %864 = vmatprep.mubr.f32.mxu0 0.0
      %865 = vmatmul.mubr.f32.gmra.mrb[0].mxu0 %v463
      %v866 = vpop.f32.mrb[0].mxu0
      %v867 = vadd.f32 %v282, %v866
      %v868 = vpop.f32.mrb[0].mxu0
      %869 = vmatprep.mubr.f32.mxu0 0.0
      %870 = vmatmul.mubr.f32.gmra.mrb[0].mxu0 %v466
      %v871 = vpop.f32.mrb[0].mxu0
      %v872 = vadd.f32 %v282, %v871
      %v873 = vpop.f32.mrb[0].mxu0
      %874 = vmatprep.mubr.f32.mxu0 0.0
      %875 = vmatmul.mubr.f32.gmra.mrb[0].mxu0 %v469
      %v876 = vpop.f32.mrb[0].mxu0
      %v877 = vadd.f32 %v282, %v876
      %v878 = vpop.f32.mrb[0].mxu0
      %879 = vmatprep.mubr.f32.mxu0 0.0
      %880 = vmatmul.mubr.f32.gmra.mrb[0].mxu0 %v472
      %v881 = vpop.f32.mrb[0].mxu0
      %v882 = vadd.f32 %v282, %v881
      %v883 = vpop.f32.mrb[0].mxu0
      %884 = vmatprep.mubr.f32.mxu0 0.0
      %885 = vmatmul.mubr.f32.gmra.mrb[0].mxu0 %v475
      %v886 = vpop.f32.mrb[0].mxu0
      %v887 = vadd.f32 %v282, %v886
      %v888 = vpop.f32.mrb[0].mxu0
      %889 = vmatprep.mubr.f32.mxu0 0.0
      %890 = vmatmul.mubr.f32.gmra.mrb[0].mxu0 %v478
      %v891 = vpop.f32.mrb[0].mxu0
      %v892 = vadd.f32 %v282, %v891
      %v893 = vpop.f32.mrb[0].mxu0
      %894 = vmatprep.mubr.f32.mxu0 0.0
      %895 = vmatmul.mubr.f32.gmra.mrb[0].mxu0 %v481
      %v896 = vpop.f32.mrb[0].mxu0
      %v897 = vadd.f32 %v282, %v896
      %v898 = vpop.f32.mrb[0].mxu0
      %899 = vmatprep.mubr.f32.mxu0 0.0
      %900 = vmatmul.mubr.f32.gmra.mrb[0].mxu0 %v484
      %v901 = vpop.f32.mrb[0].mxu0
      %v902 = vadd.f32 %v282, %v901
      %v903 = vpop.f32.mrb[0].mxu0
      %904 = vmatprep.mubr.f32.mxu0 0.0
      %905 = vmatmul.mubr.f32.gmra.mrb[0].mxu0 %v487
      %v906 = vpop.f32.mrb[0].mxu0
      %v907 = vadd.f32 %v282, %v906
      %v908 = vpop.f32.mrb[0].mxu0
      %909 = vmatprep.mubr.f32.mxu0 0.0
      %910 = vmatmul.mubr.f32.gmra.mrb[0].mxu0 %v490
      %v911 = vpop.f32.mrb[0].mxu0
      %v912 = vadd.f32 %v282, %v911
      %v913 = vpop.f32.mrb[0].mxu0
      %914 = vmatprep.mubr.f32.mxu0 0.0
      %915 = vmatmul.mubr.f32.gmra.mrb[0].mxu0 %v493
      %v916 = vpop.f32.mrb[0].mxu0
      %v917 = vadd.f32 %v282, %v916
      %v918 = vpop.f32.mrb[0].mxu0
      %919 = vmatprep.mubr.f32.mxu0 0.0
      %920 = vmatmul.mubr.f32.gmra.mrb[0].mxu0 %v496
      %v921 = vpop.f32.mrb[0].mxu0
      %v922 = vadd.f32 %v282, %v921
      %v923 = vpop.f32.mrb[0].mxu0
      %924 = vmatprep.mubr.f32.mxu0 0.0
      %925 = vmatmul.mubr.f32.gmra.mrb[0].mxu0 %v499
      %v926 = vpop.f32.mrb[0].mxu0
      %v927 = vadd.f32 %v282, %v926
      %v928 = vpop.f32.mrb[0].mxu0
      %929 = vdwg.mxu0
      %v930 = vmax.f32 %v572, 0.0
      %v931 = vmax.f32 %v577, 0.0
      %v932 = vmax.f32 %v582, 0.0
      %v933 = vmax.f32 %v587, 0.0
      %v934 = vmax.f32 %v592, 0.0
      %v935 = vmax.f32 %v597, 0.0
      %v936 = vmax.f32 %v602, 0.0
      %v937 = vmax.f32 %v607, 0.0
      %v938 = vmax.f32 %v612, 0.0
      %v939 = vmax.f32 %v617, 0.0
      %v940 = vmax.f32 %v622, 0.0
      %v941 = vmax.f32 %v627, 0.0
      %v942 = vmax.f32 %v632, 0.0
      %v943 = vmax.f32 %v637, 0.0
      %v944 = vmax.f32 %v642, 0.0
      %v945 = vmax.f32 %v647, 0.0
      %v946 = vmax.f32 %v652, 0.0
      %v947 = vmax.f32 %v657, 0.0
      %v948 = vmax.f32 %v662, 0.0
      %v949 = vmax.f32 %v667, 0.0
      %v950 = vmax.f32 %v672, 0.0
      %v951 = vmax.f32 %v677, 0.0
      %v952 = vmax.f32 %v682, 0.0
      %v953 = vmax.f32 %v687, 0.0
      %v954 = vmax.f32 %v692, 0.0
      %v955 = vmax.f32 %v697, 0.0
      %v956 = vmax.f32 %v702, 0.0
      %v957 = vmax.f32 %v707, 0.0
      %v958 = vmax.f32 %v712, 0.0
      %v959 = vmax.f32 %v717, 0.0
      %v960 = vmax.f32 %v722, 0.0
      %v961 = vmax.f32 %v727, 0.0
      %v962 = vmax.f32 %v732, 0.0
      %v963 = vmax.f32 %v737, 0.0
      %v964 = vmax.f32 %v742, 0.0
      %v965 = vmax.f32 %v747, 0.0
      %v966 = vmax.f32 %v752, 0.0
      %v967 = vmax.f32 %v757, 0.0
      %v968 = vmax.f32 %v762, 0.0
      %v969 = vmax.f32 %v767, 0.0
      %v970 = vmax.f32 %v772, 0.0
      %v971 = vmax.f32 %v777, 0.0
      %v972 = vmax.f32 %v782, 0.0
      %v973 = vmax.f32 %v787, 0.0
      %v974 = vmax.f32 %v792, 0.0
      %v975 = vmax.f32 %v797, 0.0
      %v976 = vmax.f32 %v802, 0.0
      %v977 = vmax.f32 %v807, 0.0
      %v978 = vmax.f32 %v812, 0.0
      %v979 = vmax.f32 %v817, 0.0
      %v980 = vmax.f32 %v822, 0.0
      %v981 = vmax.f32 %v827, 0.0
      %v982 = vmax.f32 %v832, 0.0
      %v983 = vmax.f32 %v837, 0.0
      %v984 = vmax.f32 %v842, 0.0
      %v985 = vmax.f32 %v847, 0.0
      %v986 = vmax.f32 %v852, 0.0
      %v987 = vmax.f32 %v857, 0.0
      %v988 = vmax.f32 %v862, 0.0
      %v989 = vmax.f32 %v867, 0.0
      %v990 = vmax.f32 %v872, 0.0
      %v991 = vmax.f32 %v877, 0.0
      %v992 = vmax.f32 %v882, 0.0
      %v993 = vmax.f32 %v887, 0.0
      %v994 = vmax.f32 %v892, 0.0
      %v995 = vmax.f32 %v897, 0.0
      %v996 = vmax.f32 %v902, 0.0
      %v997 = vmax.f32 %v907, 0.0
      %v998 = vmax.f32 %v912, 0.0
      %v999 = vmax.f32 %v917, 0.0
      %v1000 = vmax.f32 %v922, 0.0
      %v1001 = vmax.f32 %v927, 0.0
      %v1002 = vld [vmem:[%s3] sm:$0xff]
      %v1003 = vld [vmem:[%s3 + $0x8] sm:$0xff]
      %v1004 = vld [vmem:[%s3 + $0x10] sm:$0xff]
      %v1005 = vld [vmem:[%s3 + $0x18] sm:$0xff]
      %v1006 = vld [vmem:[%s3 + $0x20] sm:$0xff]
      %v1007 = vld [vmem:[%s3 + $0x28] sm:$0xff]
      %v1008 = vld [vmem:[%s3 + $0x30] sm:$0xff]
      %v1009 = vld [vmem:[%s3 + $0x38] sm:$0xff]
      %v1010 = vld [vmem:[%s3 + $0x40] sm:$0xff]
      %v1011 = vld [vmem:[%s3 + $0x48] sm:$0xff]
      %v1012 = vld [vmem:[%s3 + $0x50] sm:$0xff]
      %v1013 = vld [vmem:[%s3 + $0x58] sm:$0xff]
      %v1014 = vld [vmem:[%s3 + $0x60] sm:$0xff]
      %v1015 = vld [vmem:[%s3 + $0x68] sm:$0xff]
      %v1016 = vld [vmem:[%s3 + $0x70] sm:$0xff]
      %v1017 = vld [vmem:[%s3 + $0x78] sm:$0xff]
      %v1018 = vld [vmem:[%s3 + $0x80] sm:$0xff]
      %v1019 = vld [vmem:[%s3 + $0x88] sm:$0xff]
      %v1020 = vld [vmem:[%s3 + $0x90] sm:$0xff]
      %v1021 = vld [vmem:[%s3 + $0x98] sm:$0xff]
      %v1022 = vld [vmem:[%s3 + $0xa0] sm:$0xff]
      %v1023 = vld [vmem:[%s3 + $0xa8] sm:$0xff]
      %v1024 = vld [vmem:[%s3 + $0xb0] sm:$0xff]
      %v1025 = vld [vmem:[%s3 + $0xb8] sm:$0xff]
      %v1026 = vld [vmem:[%s3 + $0xc0] sm:$0xff]
      %v1027 = vld [vmem:[%s3 + $0xc8] sm:$0xff]
      %v1028 = vld [vmem:[%s3 + $0xd0] sm:$0xff]
      %v1029 = vld [vmem:[%s3 + $0xd8] sm:$0xff]
      %v1030 = vld [vmem:[%s3 + $0xe0] sm:$0xff]
      %v1031 = vld [vmem:[%s3 + $0xe8] sm:$0xff]
      %v1032 = vld [vmem:[%s3 + $0xf0] sm:$0xff]
      %v1033 = vld [vmem:[%s3 + $0xf8] sm:$0xff]
      %v1034 = vld [vmem:[%s3 + $0x100] sm:$0xff]
      %v1035 = vld [vmem:[%s3 + $0x108] sm:$0xff]
      %v1036 = vld [vmem:[%s3 + $0x110] sm:$0xff]
      %v1037 = vld [vmem:[%s3 + $0x118] sm:$0xff]
      %v1038 = vld [vmem:[%s3 + $0x120] sm:$0xff]
      %v1039 = vld [vmem:[%s3 + $0x128] sm:$0xff]
      %v1040 = vld [vmem:[%s3 + $0x130] sm:$0xff]
      %v1041 = vld [vmem:[%s3 + $0x138] sm:$0xff]
      %v1042 = vld [vmem:[%s3 + $0x140] sm:$0xff]
      %v1043 = vld [vmem:[%s3 + $0x148] sm:$0xff]
      %v1044 = vld [vmem:[%s3 + $0x150] sm:$0xff]
      %v1045 = vld [vmem:[%s3 + $0x158] sm:$0xff]
      %v1046 = vld [vmem:[%s3 + $0x160] sm:$0xff]
      %v1047 = vld [vmem:[%s3 + $0x168] sm:$0xff]
      %v1048 = vld [vmem:[%s3 + $0x170] sm:$0xff]
      %v1049 = vld [vmem:[%s3 + $0x178] sm:$0xff]
      %v1050 = vld [vmem:[%s3 + $0x180] sm:$0xff]
      %v1051 = vld [vmem:[%s3 + $0x188] sm:$0xff]
      %v1052 = vld [vmem:[%s3 + $0x190] sm:$0xff]
      %v1053 = vld [vmem:[%s3 + $0x198] sm:$0xff]
      %v1054 = vld [vmem:[%s3 + $0x1a0] sm:$0xff]
      %v1055 = vld [vmem:[%s3 + $0x1a8] sm:$0xff]
      %v1056 = vld [vmem:[%s3 + $0x1b0] sm:$0xff]
      %v1057 = vld [vmem:[%s3 + $0x1b8] sm:$0xff]
      %v1058 = vld [vmem:[%s3 + $0x1c0] sm:$0xff]
      %v1059 = vld [vmem:[%s3 + $0x1c8] sm:$0xff]
      %v1060 = vld [vmem:[%s3 + $0x1d0] sm:$0xff]
      %v1061 = vld [vmem:[%s3 + $0x1d8] sm:$0xff]
      %v1062 = vld [vmem:[%s3 + $0x1e0] sm:$0xff]
      %v1063 = vld [vmem:[%s3 + $0x1e8] sm:$0xff]
      %v1064 = vld [vmem:[%s3 + $0x1f0] sm:$0xff]
      %v1065 = vld [vmem:[%s3 + $0x1f8] sm:$0xff]
      %v1066 = vld [vmem:[%s3 + $0x200] sm:$0xff]
      %v1067 = vld [vmem:[%s3 + $0x208] sm:$0xff]
      %v1068 = vld [vmem:[%s3 + $0x210] sm:$0xff]
      %v1069 = vld [vmem:[%s3 + $0x218] sm:$0xff]
      %v1070 = vld [vmem:[%s3 + $0x220] sm:$0xff]
      %v1071 = vld [vmem:[%s3 + $0x228] sm:$0xff]
      %v1072 = vld [vmem:[%s3 + $0x230] sm:$0xff]
      %v1073 = vld [vmem:[%s3 + $0x238] sm:$0xff]
      %v1074 = vld [vmem:[%s3 + $0x240] sm:$0xff]
      %v1075 = vld [vmem:[%s3 + $0x248] sm:$0xff]
      %v1076 = vld [vmem:[%s3 + $0x250] sm:$0xff]
      %v1077 = vld [vmem:[%s3 + $0x258] sm:$0xff]
      %v1078 = vld [vmem:[%s3 + $0x260] sm:$0xff]
      %v1079 = vld [vmem:[%s3 + $0x268] sm:$0xff]
      %v1080 = vld [vmem:[%s3 + $0x270] sm:$0xff]
      %v1081 = vld [vmem:[%s3 + $0x278] sm:$0xff]
      %v1082 = vld [vmem:[%s3 + $0x280] sm:$0xff]
      %v1083 = vld [vmem:[%s3 + $0x288] sm:$0xff]
      %v1084 = vld [vmem:[%s3 + $0x290] sm:$0xff]
      %v1085 = vld [vmem:[%s3 + $0x298] sm:$0xff]
      %v1086 = vld [vmem:[%s3 + $0x2a0] sm:$0xff]
      %v1087 = vld [vmem:[%s3 + $0x2a8] sm:$0xff]
      %v1088 = vld [vmem:[%s3 + $0x2b0] sm:$0xff]
      %v1089 = vld [vmem:[%s3 + $0x2b8] sm:$0xff]
      %v1090 = vld [vmem:[%s3 + $0x2c0] sm:$0xff]
      %v1091 = vld [vmem:[%s3 + $0x2c8] sm:$0xff]
      %vm1092 = vcmask 523264
      %v1094 = vsel %vm1092, %v1006, 0
      %v1097 = vsel %vm1092, %v1011, 0
      %v1100 = vsel %vm1092, %v1016, 0
      %v1103 = vsel %vm1092, %v1021, 0
      %v1106 = vsel %vm1092, %v1026, 0
      %v1109 = vsel %vm1092, %v1031, 0
      %v1112 = vsel %vm1092, %v1036, 0
      %v1115 = vsel %vm1092, %v1041, 0
      %v1118 = vsel %vm1092, %v1046, 0
      %v1121 = vsel %vm1092, %v1051, 0
      %v1124 = vsel %vm1092, %v1056, 0
      %v1127 = vsel %vm1092, %v1061, 0
      %v1130 = vsel %vm1092, %v1066, 0
      %v1133 = vsel %vm1092, %v1071, 0
      %v1136 = vsel %vm1092, %v1076, 0
      %v1139 = vsel %vm1092, %v1081, 0
      %v1142 = vsel %vm1092, %v1086, 0
      %v1145 = vsel %vm1092, %v1091, 0
      %1147 = vmatprep.subr.mxu0 0.0
      %1148 = vmatpush1.msra.mxu0 %v930
      %1149 = vmatprep.subr.mxu0 0.0
      %1150 = vmatpush1.msra.mxu0 %v931
      %1151 = vmatprep.subr.mxu0 0.0
      %1152 = vmatpush1.msra.mxu0 %v932
      %1153 = vmatprep.subr.mxu0 0.0
      %1154 = vmatpush1.msra.mxu0 %v933
      %1155 = vmatprep.subr.mxu0 0.0
      %1156 = vmatpush1.msra.mxu0 %v934
      %1157 = vmatprep.subr.mxu0 0.0
      %1158 = vmatpush1.msra.mxu0 %v935
      %1159 = vmatprep.subr.mxu0 0.0
      %1160 = vmatpush1.msra.mxu0 %v936
      %1161 = vmatprep.subr.mxu0 0.0
      %1162 = vmatpush1.msra.mxu0 %v937
      %1163 = vmatprep.subr.mxu0 0.0
      %1164 = vmatpush1.msra.mxu0 %v938
      %1165 = vmatprep.subr.mxu0 0.0
      %1166 = vmatpush1.msra.mxu0 %v939
      %1167 = vmatprep.subr.mxu0 0.0
      %1168 = vmatpush1.msra.mxu0 %v940
      %1169 = vmatprep.subr.mxu0 0.0
      %1170 = vmatpush1.msra.mxu0 %v941
      %1171 = vmatprep.subr.mxu0 0.0
      %1172 = vmatpush1.msra.mxu0 %v942
      %1173 = vmatprep.subr.mxu0 0.0
      %1174 = vmatpush1.msra.mxu0 %v943
      %1175 = vmatprep.subr.mxu0 0.0
      %1176 = vmatpush1.msra.mxu0 %v944
      %1177 = vmatprep.subr.mxu0 0.0
      %1178 = vmatpush1.msra.mxu0 %v945
      %1179 = vmatprep.subr.mxu0 0.0
      %1180 = vmatpush1.msra.mxu0 %v946
      %1181 = vmatprep.subr.mxu0 0.0
      %1182 = vmatpush1.msra.mxu0 %v947
      %1183 = vmatprep.subr.mxu0 0.0
      %1184 = vmatpush1.msra.mxu0 %v948
      %1185 = vmatprep.subr.mxu0 0.0
      %1186 = vmatpush1.msra.mxu0 %v949
      %1187 = vmatprep.subr.mxu0 0.0
      %1188 = vmatpush1.msra.mxu0 %v950
      %1189 = vmatprep.subr.mxu0 0.0
      %1190 = vmatpush1.msra.mxu0 %v951
      %1191 = vmatprep.subr.mxu0 0.0
      %1192 = vmatpush1.msra.mxu0 %v952
      %1193 = vmatprep.subr.mxu0 0.0
      %1194 = vmatpush1.msra.mxu0 %v953
      %1195 = vmatprep.subr.mxu0 0.0
      %1196 = vmatpush1.msra.mxu0 %v954
      %1197 = vmatprep.subr.mxu0 0.0
      %1198 = vmatpush1.msra.mxu0 %v955
      %1199 = vmatprep.subr.mxu0 0.0
      %1200 = vmatpush1.msra.mxu0 %v956
      %1201 = vmatprep.subr.mxu0 0.0
      %1202 = vmatpush1.msra.mxu0 %v957
      %1203 = vmatprep.subr.mxu0 0.0
      %1204 = vmatpush1.msra.mxu0 %v958
      %1205 = vmatprep.subr.mxu0 0.0
      %1206 = vmatpush1.msra.mxu0 %v959
      %1207 = vmatprep.subr.mxu0 0.0
      %1208 = vmatpush1.msra.mxu0 %v960
      %1209 = vmatprep.subr.mxu0 0.0
      %1210 = vmatpush1.msra.mxu0 %v961
      %1211 = vmatprep.mubr.f32.mxu0 %v1003
      %1212 = vmatmul.mubr.f32.gmra.mrb[0].mxu0 %v1002
      %v1213 = vpop.f32.mrb[0].mxu0
      %v1214 = vadd.f32 0.0, %v1213
      %v1215 = vpop.f32.mrb[0].mxu0
      %1216 = vmatprep.mubr.f32.mxu0 %v1008
      %1217 = vmatmul.mubr.f32.gmra.mrb[0].mxu0 %v1007
      %v1218 = vpop.f32.mrb[0].mxu0
      %v1219 = vadd.f32 0.0, %v1218
      %v1220 = vpop.f32.mrb[0].mxu0
      %1221 = vmatprep.mubr.f32.mxu0 %v1013
      %1222 = vmatmul.mubr.f32.gmra.mrb[0].mxu0 %v1012
      %v1223 = vpop.f32.mrb[0].mxu0
      %v1224 = vadd.f32 0.0, %v1223
      %v1225 = vpop.f32.mrb[0].mxu0
      %1226 = vmatprep.mubr.f32.mxu0 %v1018
      %1227 = vmatmul.mubr.f32.gmra.mrb[0].mxu0 %v1017
      %v1228 = vpop.f32.mrb[0].mxu0
      %v1229 = vadd.f32 0.0, %v1228
      %v1230 = vpop.f32.mrb[0].mxu0
      %1231 = vmatprep.mubr.f32.mxu0 %v1023
      %1232 = vmatmul.mubr.f32.gmra.mrb[0].mxu0 %v1022
      %v1233 = vpop.f32.mrb[0].mxu0
      %v1234 = vadd.f32 0.0, %v1233
      %v1235 = vpop.f32.mrb[0].mxu0
      %1236 = vmatprep.mubr.f32.mxu0 %v1028
      %1237 = vmatmul.mubr.f32.gmra.mrb[0].mxu0 %v1027
      %v1238 = vpop.f32.mrb[0].mxu0
      %v1239 = vadd.f32 0.0, %v1238
      %v1240 = vpop.f32.mrb[0].mxu0
      %1241 = vmatprep.mubr.f32.mxu0 %v1033
      %1242 = vmatmul.mubr.f32.gmra.mrb[0].mxu0 %v1032
      %v1243 = vpop.f32.mrb[0].mxu0
      %v1244 = vadd.f32 0.0, %v1243
      %v1245 = vpop.f32.mrb[0].mxu0
      %1246 = vmatprep.mubr.f32.mxu0 %v1038
      %1247 = vmatmul.mubr.f32.gmra.mrb[0].mxu0 %v1037
      %v1248 = vpop.f32.mrb[0].mxu0
      %v1249 = vadd.f32 0.0, %v1248
      %v1250 = vpop.f32.mrb[0].mxu0
      %1251 = vmatprep.mubr.f32.mxu0 %v1043
      %1252 = vmatmul.mubr.f32.gmra.mrb[0].mxu0 %v1042
      %v1253 = vpop.f32.mrb[0].mxu0
      %v1254 = vadd.f32 0.0, %v1253
      %v1255 = vpop.f32.mrb[0].mxu0
      %1256 = vmatprep.mubr.f32.mxu0 %v1048
      %1257 = vmatmul.mubr.f32.gmra.mrb[0].mxu0 %v1047
      %v1258 = vpop.f32.mrb[0].mxu0
      %v1259 = vadd.f32 0.0, %v1258
      %v1260 = vpop.f32.mrb[0].mxu0
      %1261 = vmatprep.mubr.f32.mxu0 %v1053
      %1262 = vmatmul.mubr.f32.gmra.mrb[0].mxu0 %v1052
      %v1263 = vpop.f32.mrb[0].mxu0
      %v1264 = vadd.f32 0.0, %v1263
      %v1265 = vpop.f32.mrb[0].mxu0
      %1266 = vmatprep.mubr.f32.mxu0 %v1058
      %1267 = vmatmul.mubr.f32.gmra.mrb[0].mxu0 %v1057
      %v1268 = vpop.f32.mrb[0].mxu0
      %v1269 = vadd.f32 0.0, %v1268
      %v1270 = vpop.f32.mrb[0].mxu0
      %1271 = vmatprep.mubr.f32.mxu0 %v1063
      %1272 = vmatmul.mubr.f32.gmra.mrb[0].mxu0 %v1062
      %v1273 = vpop.f32.mrb[0].mxu0
      %v1274 = vadd.f32 0.0, %v1273
      %v1275 = vpop.f32.mrb[0].mxu0
      %1276 = vmatprep.mubr.f32.mxu0 %v1068
      %1277 = vmatmul.mubr.f32.gmra.mrb[0].mxu0 %v1067
      %v1278 = vpop.f32.mrb[0].mxu0
      %v1279 = vadd.f32 0.0, %v1278
      %v1280 = vpop.f32.mrb[0].mxu0
      %1281 = vmatprep.mubr.f32.mxu0 %v1073
      %1282 = vmatmul.mubr.f32.gmra.mrb[0].mxu0 %v1072
      %v1283 = vpop.f32.mrb[0].mxu0
      %v1284 = vadd.f32 0.0, %v1283
      %v1285 = vpop.f32.mrb[0].mxu0
      %1286 = vmatprep.mubr.f32.mxu0 %v1078
      %1287 = vmatmul.mubr.f32.gmra.mrb[0].mxu0 %v1077
      %v1288 = vpop.f32.mrb[0].mxu0
      %v1289 = vadd.f32 0.0, %v1288
      %v1290 = vpop.f32.mrb[0].mxu0
      %1291 = vmatprep.mubr.f32.mxu0 %v1083
      %1292 = vmatmul.mubr.f32.gmra.mrb[0].mxu0 %v1082
      %v1293 = vpop.f32.mrb[0].mxu0
      %v1294 = vadd.f32 0.0, %v1293
      %v1295 = vpop.f32.mrb[0].mxu0
      %1296 = vmatprep.mubr.f32.mxu0 %v1088
      %1297 = vmatmul.mubr.f32.gmra.mrb[0].mxu0 %v1087
      %v1298 = vpop.f32.mrb[0].mxu0
      %v1299 = vadd.f32 0.0, %v1298
      %v1300 = vpop.f32.mrb[0].mxu0
      %1301 = vdwg.mxu0
      %1302 = vmatprep.subr.mxu0 0.0
      %1303 = vmatpush1.msra.mxu0 %v962
      %1304 = vmatprep.subr.mxu0 0.0
      %1305 = vmatpush1.msra.mxu0 %v963
      %1306 = vmatprep.subr.mxu0 0.0
      %1307 = vmatpush1.msra.mxu0 %v964
      %1308 = vmatprep.subr.mxu0 0.0
      %1309 = vmatpush1.msra.mxu0 %v965
      %1310 = vmatprep.subr.mxu0 0.0
      %1311 = vmatpush1.msra.mxu0 %v966
      %1312 = vmatprep.subr.mxu0 0.0
      %1313 = vmatpush1.msra.mxu0 %v967
      %1314 = vmatprep.subr.mxu0 0.0
      %1315 = vmatpush1.msra.mxu0 %v968
      %1316 = vmatprep.subr.mxu0 0.0
      %1317 = vmatpush1.msra.mxu0 %v969
      %1318 = vmatprep.subr.mxu0 0.0
      %1319 = vmatpush1.msra.mxu0 %v970
      %1320 = vmatprep.subr.mxu0 0.0
      %1321 = vmatpush1.msra.mxu0 %v971
      %1322 = vmatprep.subr.mxu0 0.0
      %1323 = vmatpush1.msra.mxu0 %v972
      %1324 = vmatprep.subr.mxu0 0.0
      %1325 = vmatpush1.msra.mxu0 %v973
      %1326 = vmatprep.subr.mxu0 0.0
      %1327 = vmatpush1.msra.mxu0 %v974
      %1328 = vmatprep.subr.mxu0 0.0
      %1329 = vmatpush1.msra.mxu0 %v975
      %1330 = vmatprep.subr.mxu0 0.0
      %1331 = vmatpush1.msra.mxu0 %v976
      %1332 = vmatprep.subr.mxu0 0.0
      %1333 = vmatpush1.msra.mxu0 %v977
      %1334 = vmatprep.subr.mxu0 0.0
      %1335 = vmatpush1.msra.mxu0 %v978
      %1336 = vmatprep.subr.mxu0 0.0
      %1337 = vmatpush1.msra.mxu0 %v979
      %1338 = vmatprep.subr.mxu0 0.0
      %1339 = vmatpush1.msra.mxu0 %v980
      %1340 = vmatprep.subr.mxu0 0.0
      %1341 = vmatpush1.msra.mxu0 %v981
      %1342 = vmatprep.subr.mxu0 0.0
      %1343 = vmatpush1.msra.mxu0 %v982
      %1344 = vmatprep.subr.mxu0 0.0
      %1345 = vmatpush1.msra.mxu0 %v983
      %1346 = vmatprep.subr.mxu0 0.0
      %1347 = vmatpush1.msra.mxu0 %v984
      %1348 = vmatprep.subr.mxu0 0.0
      %1349 = vmatpush1.msra.mxu0 %v985
      %1350 = vmatprep.subr.mxu0 0.0
      %1351 = vmatpush1.msra.mxu0 %v986
      %1352 = vmatprep.subr.mxu0 0.0
      %1353 = vmatpush1.msra.mxu0 %v987
      %1354 = vmatprep.subr.mxu0 0.0
      %1355 = vmatpush1.msra.mxu0 %v988
      %1356 = vmatprep.subr.mxu0 0.0
      %1357 = vmatpush1.msra.mxu0 %v989
      %1358 = vmatprep.subr.mxu0 0.0
      %1359 = vmatpush1.msra.mxu0 %v990
      %1360 = vmatprep.subr.mxu0 0.0
      %1361 = vmatpush1.msra.mxu0 %v991
      %1362 = vmatprep.subr.mxu0 0.0
      %1363 = vmatpush1.msra.mxu0 %v992
      %1364 = vmatprep.subr.mxu0 0.0
      %1365 = vmatpush1.msra.mxu0 %v993
      %1366 = vmatprep.mubr.f32.mxu0 %v1005
      %1367 = vmatmul.mubr.f32.gmra.mrb[0].mxu0 %v1004
      %v1368 = vpop.f32.mrb[0].mxu0
      %v1369 = vadd.f32 %v1214, %v1368
      %v1370 = vpop.f32.mrb[0].mxu0
      %1371 = vmatprep.mubr.f32.mxu0 %v1010
      %1372 = vmatmul.mubr.f32.gmra.mrb[0].mxu0 %v1009
      %v1373 = vpop.f32.mrb[0].mxu0
      %v1374 = vadd.f32 %v1219, %v1373
      %v1375 = vpop.f32.mrb[0].mxu0
      %1376 = vmatprep.mubr.f32.mxu0 %v1015
      %1377 = vmatmul.mubr.f32.gmra.mrb[0].mxu0 %v1014
      %v1378 = vpop.f32.mrb[0].mxu0
      %v1379 = vadd.f32 %v1224, %v1378
      %v1380 = vpop.f32.mrb[0].mxu0
      %1381 = vmatprep.mubr.f32.mxu0 %v1020
      %1382 = vmatmul.mubr.f32.gmra.mrb[0].mxu0 %v1019
      %v1383 = vpop.f32.mrb[0].mxu0
      %v1384 = vadd.f32 %v1229, %v1383
      %v1385 = vpop.f32.mrb[0].mxu0
      %1386 = vmatprep.mubr.f32.mxu0 %v1025
      %1387 = vmatmul.mubr.f32.gmra.mrb[0].mxu0 %v1024
      %v1388 = vpop.f32.mrb[0].mxu0
      %v1389 = vadd.f32 %v1234, %v1388
      %v1390 = vpop.f32.mrb[0].mxu0
      %1391 = vmatprep.mubr.f32.mxu0 %v1030
      %1392 = vmatmul.mubr.f32.gmra.mrb[0].mxu0 %v1029
      %v1393 = vpop.f32.mrb[0].mxu0
      %v1394 = vadd.f32 %v1239, %v1393
      %v1395 = vpop.f32.mrb[0].mxu0
      %1396 = vmatprep.mubr.f32.mxu0 %v1035
      %1397 = vmatmul.mubr.f32.gmra.mrb[0].mxu0 %v1034
      %v1398 = vpop.f32.mrb[0].mxu0
      %v1399 = vadd.f32 %v1244, %v1398
      %v1400 = vpop.f32.mrb[0].mxu0
      %1401 = vmatprep.mubr.f32.mxu0 %v1040
      %1402 = vmatmul.mubr.f32.gmra.mrb[0].mxu0 %v1039
      %v1403 = vpop.f32.mrb[0].mxu0
      %v1404 = vadd.f32 %v1249, %v1403
      %v1405 = vpop.f32.mrb[0].mxu0
      %1406 = vmatprep.mubr.f32.mxu0 %v1045
      %1407 = vmatmul.mubr.f32.gmra.mrb[0].mxu0 %v1044
      %v1408 = vpop.f32.mrb[0].mxu0
      %v1409 = vadd.f32 %v1254, %v1408
      %v1410 = vpop.f32.mrb[0].mxu0
      %1411 = vmatprep.mubr.f32.mxu0 %v1050
      %1412 = vmatmul.mubr.f32.gmra.mrb[0].mxu0 %v1049
      %v1413 = vpop.f32.mrb[0].mxu0
      %v1414 = vadd.f32 %v1259, %v1413
      %v1415 = vpop.f32.mrb[0].mxu0
      %1416 = vmatprep.mubr.f32.mxu0 %v1055
      %1417 = vmatmul.mubr.f32.gmra.mrb[0].mxu0 %v1054
      %v1418 = vpop.f32.mrb[0].mxu0
      %v1419 = vadd.f32 %v1264, %v1418
      %v1420 = vpop.f32.mrb[0].mxu0
      %1421 = vmatprep.mubr.f32.mxu0 %v1060
      %1422 = vmatmul.mubr.f32.gmra.mrb[0].mxu0 %v1059
      %v1423 = vpop.f32.mrb[0].mxu0
      %v1424 = vadd.f32 %v1269, %v1423
      %v1425 = vpop.f32.mrb[0].mxu0
      %1426 = vmatprep.mubr.f32.mxu0 %v1065
      %1427 = vmatmul.mubr.f32.gmra.mrb[0].mxu0 %v1064
      %v1428 = vpop.f32.mrb[0].mxu0
      %v1429 = vadd.f32 %v1274, %v1428
      %v1430 = vpop.f32.mrb[0].mxu0
      %1431 = vmatprep.mubr.f32.mxu0 %v1070
      %1432 = vmatmul.mubr.f32.gmra.mrb[0].mxu0 %v1069
      %v1433 = vpop.f32.mrb[0].mxu0
      %v1434 = vadd.f32 %v1279, %v1433
      %v1435 = vpop.f32.mrb[0].mxu0
      %1436 = vmatprep.mubr.f32.mxu0 %v1075
      %1437 = vmatmul.mubr.f32.gmra.mrb[0].mxu0 %v1074
      %v1438 = vpop.f32.mrb[0].mxu0
      %v1439 = vadd.f32 %v1284, %v1438
      %v1440 = vpop.f32.mrb[0].mxu0
      %1441 = vmatprep.mubr.f32.mxu0 %v1080
      %1442 = vmatmul.mubr.f32.gmra.mrb[0].mxu0 %v1079
      %v1443 = vpop.f32.mrb[0].mxu0
      %v1444 = vadd.f32 %v1289, %v1443
      %v1445 = vpop.f32.mrb[0].mxu0
      %1446 = vmatprep.mubr.f32.mxu0 %v1085
      %1447 = vmatmul.mubr.f32.gmra.mrb[0].mxu0 %v1084
      %v1448 = vpop.f32.mrb[0].mxu0
      %v1449 = vadd.f32 %v1294, %v1448
      %v1450 = vpop.f32.mrb[0].mxu0
      %1451 = vmatprep.mubr.f32.mxu0 %v1090
      %1452 = vmatmul.mubr.f32.gmra.mrb[0].mxu0 %v1089
      %v1453 = vpop.f32.mrb[0].mxu0
      %v1454 = vadd.f32 %v1299, %v1453
      %v1455 = vpop.f32.mrb[0].mxu0
      %1456 = vdwg.mxu0
      %1457 = vmatprep.subr.mxu0 0.0
      %1458 = vmatpush1.msra.mxu0 %v994
      %1459 = vmatprep.subr.mxu0 0.0
      %1460 = vmatpush1.msra.mxu0 %v995
      %1461 = vmatprep.subr.mxu0 0.0
      %1462 = vmatpush1.msra.mxu0 %v996
      %1463 = vmatprep.subr.mxu0 0.0
      %1464 = vmatpush1.msra.mxu0 %v997
      %1465 = vmatprep.subr.mxu0 0.0
      %1466 = vmatpush1.msra.mxu0 %v998
      %1467 = vmatprep.subr.mxu0 0.0
      %1468 = vmatpush1.msra.mxu0 %v999
      %1469 = vmatprep.subr.mxu0 0.0
      %1470 = vmatpush1.msra.mxu0 %v1000
      %1471 = vmatprep.subr.mxu0 0.0
      %1472 = vmatpush1.msra.mxu0 %v1001
      %1473 = vmatprep.subr.mxu0 0.0
      %1474 = vmatpush1.msra.mxu0 0.0
      %1475 = vmatprep.subr.mxu0 0.0
      %1476 = vmatpush1.msra.mxu0 0.0
      %1477 = vmatprep.subr.mxu0 0.0
      %1478 = vmatpush1.msra.mxu0 0.0
      %1479 = vmatprep.subr.mxu0 0.0
      %1480 = vmatpush1.msra.mxu0 0.0
      %1481 = vmatprep.subr.mxu0 0.0
      %1482 = vmatpush1.msra.mxu0 0.0
      %1483 = vmatprep.subr.mxu0 0.0
      %1484 = vmatpush1.msra.mxu0 0.0
      %1485 = vmatprep.subr.mxu0 0.0
      %1486 = vmatpush1.msra.mxu0 0.0
      %1487 = vmatprep.subr.mxu0 0.0
      %1488 = vmatpush1.msra.mxu0 0.0
      %1489 = vmatprep.subr.mxu0 0.0
      %1490 = vmatpush1.msra.mxu0 0.0
      %1491 = vmatprep.subr.mxu0 0.0
      %1492 = vmatpush1.msra.mxu0 0.0
      %1493 = vmatprep.subr.mxu0 0.0
      %1494 = vmatpush1.msra.mxu0 0.0
      %1495 = vmatprep.subr.mxu0 0.0
      %1496 = vmatpush1.msra.mxu0 0.0
      %1497 = vmatprep.subr.mxu0 0.0
      %1498 = vmatpush1.msra.mxu0 0.0
      %1499 = vmatprep.subr.mxu0 0.0
      %1500 = vmatpush1.msra.mxu0 0.0
      %1501 = vmatprep.subr.mxu0 0.0
      %1502 = vmatpush1.msra.mxu0 0.0
      %1503 = vmatprep.subr.mxu0 0.0
      %1504 = vmatpush1.msra.mxu0 0.0
      %1505 = vmatprep.subr.mxu0 0.0
      %1506 = vmatpush1.msra.mxu0 0.0
      %1507 = vmatprep.subr.mxu0 0.0
      %1508 = vmatpush1.msra.mxu0 0.0
      %1509 = vmatprep.subr.mxu0 0.0
      %1510 = vmatpush1.msra.mxu0 0.0
      %1511 = vmatprep.subr.mxu0 0.0
      %1512 = vmatpush1.msra.mxu0 0.0
      %1513 = vmatprep.subr.mxu0 0.0
      %1514 = vmatpush1.msra.mxu0 0.0
      %1515 = vmatprep.subr.mxu0 0.0
      %1516 = vmatpush1.msra.mxu0 0.0
      %1517 = vmatprep.subr.mxu0 0.0
      %1518 = vmatpush1.msra.mxu0 0.0
      %1519 = vmatprep.subr.mxu0 0.0
      %1520 = vmatpush1.msra.mxu0 0.0
      %1521 = vmatprep.mubr.f32.mxu0 0.0
      %1522 = vmatmul.mubr.f32.gmra.mrb[0].mxu0 %v1094
      %v1523 = vpop.f32.mrb[0].mxu0
      %v1524 = vadd.f32 %v1369, %v1523
      %v1525 = vpop.f32.mrb[0].mxu0
      %1526 = vmatprep.mubr.f32.mxu0 0.0
      %1527 = vmatmul.mubr.f32.gmra.mrb[0].mxu0 %v1097
      %v1528 = vpop.f32.mrb[0].mxu0
      %v1529 = vadd.f32 %v1374, %v1528
      %v1530 = vpop.f32.mrb[0].mxu0
      %1531 = vmatprep.mubr.f32.mxu0 0.0
      %1532 = vmatmul.mubr.f32.gmra.mrb[0].mxu0 %v1100
      %v1533 = vpop.f32.mrb[0].mxu0
      %v1534 = vadd.f32 %v1379, %v1533
      %v1535 = vpop.f32.mrb[0].mxu0
      %1536 = vmatprep.mubr.f32.mxu0 0.0
      %1537 = vmatmul.mubr.f32.gmra.mrb[0].mxu0 %v1103
      %v1538 = vpop.f32.mrb[0].mxu0
      %v1539 = vadd.f32 %v1384, %v1538
      %v1540 = vpop.f32.mrb[0].mxu0
      %1541 = vmatprep.mubr.f32.mxu0 0.0
      %1542 = vmatmul.mubr.f32.gmra.mrb[0].mxu0 %v1106
      %v1543 = vpop.f32.mrb[0].mxu0
      %v1544 = vadd.f32 %v1389, %v1543
      %v1545 = vpop.f32.mrb[0].mxu0
      %1546 = vmatprep.mubr.f32.mxu0 0.0
      %1547 = vmatmul.mubr.f32.gmra.mrb[0].mxu0 %v1109
      %v1548 = vpop.f32.mrb[0].mxu0
      %v1549 = vadd.f32 %v1394, %v1548
      %v1550 = vpop.f32.mrb[0].mxu0
      %1551 = vmatprep.mubr.f32.mxu0 0.0
      %1552 = vmatmul.mubr.f32.gmra.mrb[0].mxu0 %v1112
      %v1553 = vpop.f32.mrb[0].mxu0
      %v1554 = vadd.f32 %v1399, %v1553
      %v1555 = vpop.f32.mrb[0].mxu0
      %1556 = vmatprep.mubr.f32.mxu0 0.0
      %1557 = vmatmul.mubr.f32.gmra.mrb[0].mxu0 %v1115
      %v1558 = vpop.f32.mrb[0].mxu0
      %v1559 = vadd.f32 %v1404, %v1558
      %v1560 = vpop.f32.mrb[0].mxu0
      %1561 = vmatprep.mubr.f32.mxu0 0.0
      %1562 = vmatmul.mubr.f32.gmra.mrb[0].mxu0 %v1118
      %v1563 = vpop.f32.mrb[0].mxu0
      %v1564 = vadd.f32 %v1409, %v1563
      %v1565 = vpop.f32.mrb[0].mxu0
      %1566 = vmatprep.mubr.f32.mxu0 0.0
      %1567 = vmatmul.mubr.f32.gmra.mrb[0].mxu0 %v1121
      %v1568 = vpop.f32.mrb[0].mxu0
      %v1569 = vadd.f32 %v1414, %v1568
      %v1570 = vpop.f32.mrb[0].mxu0
      %1571 = vmatprep.mubr.f32.mxu0 0.0
      %1572 = vmatmul.mubr.f32.gmra.mrb[0].mxu0 %v1124
      %v1573 = vpop.f32.mrb[0].mxu0
      %v1574 = vadd.f32 %v1419, %v1573
      %v1575 = vpop.f32.mrb[0].mxu0
      %1576 = vmatprep.mubr.f32.mxu0 0.0
      %1577 = vmatmul.mubr.f32.gmra.mrb[0].mxu0 %v1127
      %v1578 = vpop.f32.mrb[0].mxu0
      %v1579 = vadd.f32 %v1424, %v1578
      %v1580 = vpop.f32.mrb[0].mxu0
      %1581 = vmatprep.mubr.f32.mxu0 0.0
      %1582 = vmatmul.mubr.f32.gmra.mrb[0].mxu0 %v1130
      %v1583 = vpop.f32.mrb[0].mxu0
      %v1584 = vadd.f32 %v1429, %v1583
      %v1585 = vpop.f32.mrb[0].mxu0
      %1586 = vmatprep.mubr.f32.mxu0 0.0
      %1587 = vmatmul.mubr.f32.gmra.mrb[0].mxu0 %v1133
      %v1588 = vpop.f32.mrb[0].mxu0
      %v1589 = vadd.f32 %v1434, %v1588
      %v1590 = vpop.f32.mrb[0].mxu0
      %1591 = vmatprep.mubr.f32.mxu0 0.0
      %1592 = vmatmul.mubr.f32.gmra.mrb[0].mxu0 %v1136
      %v1593 = vpop.f32.mrb[0].mxu0
      %v1594 = vadd.f32 %v1439, %v1593
      %v1595 = vpop.f32.mrb[0].mxu0
      %1596 = vmatprep.mubr.f32.mxu0 0.0
      %1597 = vmatmul.mubr.f32.gmra.mrb[0].mxu0 %v1139
      %v1598 = vpop.f32.mrb[0].mxu0
      %v1599 = vadd.f32 %v1444, %v1598
      %v1600 = vpop.f32.mrb[0].mxu0
      %1601 = vmatprep.mubr.f32.mxu0 0.0
      %1602 = vmatmul.mubr.f32.gmra.mrb[0].mxu0 %v1142
      %v1603 = vpop.f32.mrb[0].mxu0
      %v1604 = vadd.f32 %v1449, %v1603
      %v1605 = vpop.f32.mrb[0].mxu0
      %1606 = vmatprep.mubr.f32.mxu0 0.0
      %1607 = vmatmul.mubr.f32.gmra.mrb[0].mxu0 %v1145
      %v1608 = vpop.f32.mrb[0].mxu0
      %v1609 = vadd.f32 %v1454, %v1608
      %v1610 = vpop.f32.mrb[0].mxu0
      %1611 = vdwg.mxu0
      %1612 = vst [vmem:[%s199] sm:$0xff] %v1524
      %1613 = vst [vmem:[%s199 + $0x8] sm:$0xff] %v1529
      %1614 = vst [vmem:[%s199 + $0x10] sm:$0xff] %v1534
      %1615 = vst [vmem:[%s199 + $0x18] sm:$0xff] %v1539
      %1616 = vst [vmem:[%s199 + $0x20] sm:$0xff] %v1544
      %1617 = vst [vmem:[%s199 + $0x28] sm:$0xff] %v1549
      %1618 = vst [vmem:[%s199 + $0x30] sm:$0xff] %v1554
      %1619 = vst [vmem:[%s199 + $0x38] sm:$0xff] %v1559
      %1620 = vst [vmem:[%s199 + $0x40] sm:$0xff] %v1564
      %1621 = vst [vmem:[%s199 + $0x48] sm:$0xff] %v1569
      %1622 = vst [vmem:[%s199 + $0x50] sm:$0xff] %v1574
      %1623 = vst [vmem:[%s199 + $0x58] sm:$0xff] %v1579
      %1624 = vst [vmem:[%s199 + $0x60] sm:$0xff] %v1584
      %1625 = vst [vmem:[%s199 + $0x68] sm:$0xff] %v1589
      %1626 = vst [vmem:[%s199 + $0x70] sm:$0xff] %v1594
      %1627 = vst [vmem:[%s199 + $0x78] sm:$0xff] %v1599
      %1628 = vst [vmem:[%s199 + $0x80] sm:$0xff] %v1604
      %1629 = vst [vmem:[%s199 + $0x88] sm:$0xff] %v1609
      %s1630 = smul.u32 18, %s15
      %p1631 = scmp.lt.s32.totalorder %s1630, 35
      %s1632 = scalar_select %p1631, %s1630, 35
      %s1633 = smul.addr %s1632, 8
      %s1634 = scalar_lea.vmem %s4, %s1633
      // Predicated region
      $region37: #{lenet_forward.3} parent=35 // pred_check
        %p1635 = pneg %p122
      $region38: #{lenet_forward.3} parent=35 // pred_check_branch
        %1637 = sbr.rel (%p1635) target = $region40
      $region39: #{lenet_forward.3} parent=35 // pred_region
        %s1638 = smul.u32 18, %s15
      $region40: #{lenet_forward.3} parent=35 // pred_fallthru
        _
    $region36: #{lenet_forward.3} parent=5 // pred_fallthru
      _
    %p1639 = scmp.le.s32.totalorder 2, %s10
    // Predicated region
    $region41: #{lenet_forward.3} parent=5 // pred_check
      %p1640 = pneg %p1639
    $region42: #{lenet_forward.3} parent=5 // pred_check_branch
      %1642 = sbr.rel (%p1640) target = $region44
    $region43: #{lenet_forward.3} parent=5 // pred_region
      %s1643 = ssub.s32 %s10, 2
      // Predicated region
      $region45: #{lenet_forward.3} parent=43 // pred_check
        %p1644 = pneg %p128
      $region46: #{lenet_forward.3} parent=43 // pred_check_branch
        %1646 = sbr.rel (%p1644) target = $region48
      $region47: #{lenet_forward.3} parent=43 // pred_region
        %s1647 = smul.u32 18, %s16
        %p1648 = scmp.lt.s32.totalorder %s1647, 35
        %s1649 = scalar_select %p1648, %s1647, 35
        %s1650 = smul.addr %s1649, 8
        %s1651 = scalar_lea.vmem %s4, %s1650
      $region48: #{lenet_forward.3} parent=43 // pred_fallthru
        _
    $region44: #{lenet_forward.3} parent=5 // pred_fallthru
      _
  $region6: #{lenet_forward.3} parent=0 // loop_footer
    %s14 = sadd.s32 1, %s10
  $region7: #{lenet_forward.3} parent=0 // loop_footer_branch
    %9 = sbr.rel target = $region3
  $region8: #{lenet_forward.3} parent=0 // loop_exit
    _

// kernel: lenet_forward.4
$region0: #{lenet_forward.4}
  #allocation0 [shape = 'u32[]', space=smem, size = 0x4, offset = 0x4, fixed_abs, tag = 'smem constant byte address 0x4 - core index']
  #allocation1 [shape = 'u32[144,128]{1,0:T(1,128)}', space=vmem, size = 0x12000, scoped, tag = 'internal scratch']
  %s0 = inlined_call_operand.vmem [shape: f32[128,150], index: 0, kind: input, shape index: {}]
  %s1 = inlined_call_operand.vmem [shape: f32[150,128], index: 1, kind: input, shape index: {}]
  %s2 = inlined_call_operand.vmem [shape: f32[1,128], index: 2, kind: input, shape index: {}]
  %s3 = inlined_call_operand.vmem [shape: f32[16,64], index: 3, kind: input, shape index: {}]
  %s4 = inlined_call_operand.vmem [shape: f32[32,128], index: 4, kind: output, shape index: {}]
  %s5 = sld [smem:[#allocation0]]
  $region49: #{lenet_forward.4} parent=0
    _
  %s7 = ssub.s32 1, %s5
  %s8 = scalar_select 0, %s7, %s5
  loop: start=0, step=1, limit=4
  $region2: #{lenet_forward.4} parent=0 // loop_pre_header
    _
  $region3: #{lenet_forward.4} parent=0 // loop_header
    %s10 = sphi 0, %s14
    %p11 = scmp.ge.s32.totalorder %s10, 4
    %s20 = sphi 0, %s22
    %s23 = sphi 0, %s20
    %s24 = sphi 0, %s23
    %s40 = sphi 0, %s24
    %s44 = sphi 0, %s44
    %s46 = sphi 0, %s44
    %s47 = sphi 0, %s46
    %s61 = sphi 0, %s47
    %s65 = sphi 0, %s65
    %s67 = sphi 0, %s65
    %s68 = sphi 0, %s67
    %s82 = sphi 0, %s68
    %s86 = sphi 0, %s86
    %s88 = sphi 0, %s86
    %s89 = sphi 0, %s88
    %s103 = sphi 0, %s89
    %s109 = sphi 0, %s111
    %s112 = sphi 0, %s109
    %s113 = sphi 0, %s112
    %s129 = sphi 0, %s113
  $region4: #{lenet_forward.4} parent=0 // loop_header_branch
    %13 = sbr.rel (%p11) target = $region8
  $region5: #{lenet_forward.4} parent=0 // loop_body
    %s15 = ssub.s32 %s10, 1
    %s16 = ssub.s32 %s10, 2
    %s17 = sadd.s32 %s10, 1
    %s18 = ssub.s32 %s10, %s17
    %p19 = scmp.eq.s32.totalorder %s18, 0
    %s21 = sadd.s32 %s20, 1
    %s22 = scalar_select %p19, %s20, %s21
    %p25 = pneg %p19
    %p26 = scmp.eq.s32.totalorder %s10, 1
    %p27 = por %p25, %p26
    %p28 = scmp.ne.s32.totalorder %s20, %s23
    %p29 = scmp.eq.s32.totalorder %s10, 0
    %p30 = por %p28, %p29
    %p31 = scmp.ne.s32.totalorder %s20, %s23
    %p32 = scmp.eq.s32.totalorder %s15, 1
    %p33 = por %p31, %p32
    %p34 = scmp.ne.s32.totalorder %s23, %s24
    %p35 = scmp.eq.s32.totalorder %s15, 0
    %p36 = por %p34, %p35
    %p37 = scmp.ne.s32.totalorder %s23, %s24
    %p38 = scmp.eq.s32.totalorder %s16, 1
    %p39 = por %p37, %p38
    %p41 = scmp.ne.s32.totalorder %s24, %s40
    %p42 = scmp.eq.s32.totalorder %s16, 0
    %p43 = por %p41, %p42
    %s45 = sadd.s32 %s44, 1
    %p48 = scmp.eq.s32.totalorder %s10, 1
    %p49 = scmp.ne.s32.totalorder %s44, %s46
    %p50 = scmp.eq.s32.totalorder %s10, 0
    %p51 = por %p49, %p50
    %p52 = scmp.ne.s32.totalorder %s44, %s46
    %p53 = scmp.eq.s32.totalorder %s15, 1
    %p54 = por %p52, %p53
    %p55 = scmp.ne.s32.totalorder %s46, %s47
    %p56 = scmp.eq.s32.totalorder %s15, 0
    %p57 = por %p55, %p56
    %p58 = scmp.ne.s32.totalorder %s46, %s47
    %p59 = scmp.eq.s32.totalorder %s16, 1
    %p60 = por %p58, %p59
    %p62 = scmp.ne.s32.totalorder %s47, %s61
    %p63 = scmp.eq.s32.totalorder %s16, 0
    %p64 = por %p62, %p63
    %s66 = sadd.s32 %s65, 1
    %p69 = scmp.eq.s32.totalorder %s10, 1
    %p70 = scmp.ne.s32.totalorder %s65, %s67
    %p71 = scmp.eq.s32.totalorder %s10, 0
    %p72 = por %p70, %p71
    %p73 = scmp.ne.s32.totalorder %s65, %s67
    %p74 = scmp.eq.s32.totalorder %s15, 1
    %p75 = por %p73, %p74
    %p76 = scmp.ne.s32.totalorder %s67, %s68
    %p77 = scmp.eq.s32.totalorder %s15, 0
    %p78 = por %p76, %p77
    %p79 = scmp.ne.s32.totalorder %s67, %s68
    %p80 = scmp.eq.s32.totalorder %s16, 1
    %p81 = por %p79, %p80
    %p83 = scmp.ne.s32.totalorder %s68, %s82
    %p84 = scmp.eq.s32.totalorder %s16, 0
    %p85 = por %p83, %p84
    %s87 = sadd.s32 %s86, 1
    %p90 = scmp.eq.s32.totalorder %s10, 1
    %p91 = scmp.ne.s32.totalorder %s86, %s88
    %p92 = scmp.eq.s32.totalorder %s10, 0
    %p93 = por %p91, %p92
    %p94 = scmp.ne.s32.totalorder %s86, %s88
    %p95 = scmp.eq.s32.totalorder %s15, 1
    %p96 = por %p94, %p95
    %p97 = scmp.ne.s32.totalorder %s88, %s89
    %p98 = scmp.eq.s32.totalorder %s15, 0
    %p99 = por %p97, %p98
    %p100 = scmp.ne.s32.totalorder %s88, %s89
    %p101 = scmp.eq.s32.totalorder %s16, 1
    %p102 = por %p100, %p101
    %p104 = scmp.ne.s32.totalorder %s89, %s103
    %p105 = scmp.eq.s32.totalorder %s16, 0
    %p106 = por %p104, %p105
    %s107 = ssub.s32 %s10, %s17
    %p108 = scmp.eq.s32.totalorder %s107, 0
    %s110 = sadd.s32 %s109, 1
    %s111 = scalar_select %p108, %s109, %s110
    %p114 = pneg %p108
    %p115 = scmp.eq.s32.totalorder %s10, 1
    %p116 = por %p114, %p115
    %p117 = scmp.ne.s32.totalorder %s109, %s112
    %p118 = scmp.eq.s32.totalorder %s10, 0
    %p119 = por %p117, %p118
    %p120 = scmp.ne.s32.totalorder %s109, %s112
    %p121 = scmp.eq.s32.totalorder %s15, 1
    %p122 = por %p120, %p121
    %p123 = scmp.ne.s32.totalorder %s112, %s113
    %p124 = scmp.eq.s32.totalorder %s15, 0
    %p125 = por %p123, %p124
    %p126 = scmp.ne.s32.totalorder %s112, %s113
    %p127 = scmp.eq.s32.totalorder %s16, 1
    %p128 = por %p126, %p127
    %p130 = scmp.ne.s32.totalorder %s113, %s129
    %p131 = scmp.eq.s32.totalorder %s16, 0
    %p132 = por %p130, %p131
    %p133 = scmp.le.s32.totalorder 1, %s10
    %p134 = scmp.lt.s32.totalorder %s10, 3
    %p135 = pnand %p133, %p134
    %p136 = pneg %p135
    // Predicated region
    $region9: #{lenet_forward.4} parent=5 // pred_check
      _
    $region10: #{lenet_forward.4} parent=5 // pred_check_branch
      %138 = sbr.rel (%p135) target = $region12
    $region11: #{lenet_forward.4} parent=5 // pred_region
      %s139 = ssub.s32 %s10, 1
      // Predicated region
      $region13: #{lenet_forward.4} parent=11 // pred_check
        %p140 = pneg %p57
      $region14: #{lenet_forward.4} parent=11 // pred_check_branch
        %142 = sbr.rel (%p140) target = $region16
      $region15: #{lenet_forward.4} parent=11 // pred_region
        _
      $region16: #{lenet_forward.4} parent=11 // pred_fallthru
        _
      // Predicated region
      $region17: #{lenet_forward.4} parent=11 // pred_check
        %p143 = pneg %p78
      $region18: #{lenet_forward.4} parent=11 // pred_check_branch
        %145 = sbr.rel (%p143) target = $region20
      $region19: #{lenet_forward.4} parent=11 // pred_region
        _
      $region20: #{lenet_forward.4} parent=11 // pred_fallthru
        _
      // Predicated region
      $region21: #{lenet_forward.4} parent=11 // pred_check
        %p146 = pneg %p99
      $region22: #{lenet_forward.4} parent=11 // pred_check_branch
        %148 = sbr.rel (%p146) target = $region24
      $region23: #{lenet_forward.4} parent=11 // pred_region
        _
      $region24: #{lenet_forward.4} parent=11 // pred_fallthru
        _
    $region12: #{lenet_forward.4} parent=5 // pred_fallthru
      _
    %p149 = scmp.lt.s32.totalorder %s10, 2
    // Predicated region
    $region25: #{lenet_forward.4} parent=5 // pred_check
      %p150 = pneg %p149
    $region26: #{lenet_forward.4} parent=5 // pred_check_branch
      %152 = sbr.rel (%p150) target = $region28
    $region27: #{lenet_forward.4} parent=5 // pred_region
      // Predicated region
      $region29: #{lenet_forward.4} parent=27 // pred_check
        %p153 = pneg %p30
      $region30: #{lenet_forward.4} parent=27 // pred_check_branch
        %155 = sbr.rel (%p153) target = $region32
      $region31: #{lenet_forward.4} parent=27 // pred_region
        %s156 = smul.u32 8, %s10
        %p157 = scmp.lt.s32.totalorder %s156, 15
        %s158 = scalar_select %p157, %s156, 15
        %s159 = smul.addr %s158, 2
        %s160 = smul.addr %s159, 8
        %s161 = scalar_lea.vmem %s0, %s160
        %s162 = smul.u32 8, %s10
      $region32: #{lenet_forward.4} parent=27 // pred_fallthru
        _
    $region28: #{lenet_forward.4} parent=5 // pred_fallthru
      _
    %p163 = scmp.le.s32.totalorder 1, %s10
    %p164 = scmp.lt.s32.totalorder %s10, 3
    %p165 = pnand %p163, %p164
    %p166 = pneg %p165
    // Predicated region
    $region33: #{lenet_forward.4} parent=5 // pred_check
      _
    $region34: #{lenet_forward.4} parent=5 // pred_check_branch
      %168 = sbr.rel (%p165) target = $region36
    $region35: #{lenet_forward.4} parent=5 // pred_region
      %s169 = ssub.s32 %s10, 1
      %s170 = smul.u32 8, %s15
      %p171 = scmp.lt.s32.totalorder %s170, 15
      %s172 = scalar_select %p171, %s170, 15
      %s173 = smul.addr %s172, 2
      %s174 = smul.addr %s173, 8
      %s175 = scalar_lea.vmem %s0, %s174
      %p176 = pneg %p36
      %p177 = pneg %p33
      %p178 = pneg %p57
      %p179 = pneg %p54
      %p180 = pneg %p78
      %p181 = pneg %p75
      %p182 = pneg %p99
      %p183 = pneg %p96
      %p184 = pneg %p125
      %p185 = pneg %p122
      %s186 = smul.u32 2, %s15
      %p187 = scmp.lt.s32.totalorder %s186, 3
      %s188 = scalar_select %p187, %s186, 3
      %s189 = smul.addr %s188, 8
      %s190 = scalar_lea.vmem %s4, %s189
      %s191 = smul.u32 8, %s15
      %p192 = scmp.lt.s32.totalorder %s191, 15
      %s193 = scalar_select %p192, %s191, 15
      %s194 = smul.addr %s193, 2
      %s195 = smul.addr %s194, 8
      %s196 = scalar_lea.vmem %s0, %s195
      %s197 = smul.u32 8, %s15
      %s198 = smul.u32 2, %s15
      %p199 = scmp.lt.s32.totalorder %s198, 3
      %s200 = scalar_select %p199, %s198, 3
      %s201 = smul.addr %s200, 8
      %s202 = scalar_lea.vmem %s4, %s201
      %s203 = smul.u32 2, %s15
      %v204 = vld [vmem:[%s196] sm:$0xff]
      %v205 = vld [vmem:[%s196 + $0x8] sm:$0xff]
      %v206 = vld [vmem:[%s196 + $0x10] sm:$0xff]
      %v207 = vld [vmem:[%s196 + $0x18] sm:$0xff]
      %v208 = vld [vmem:[%s196 + $0x20] sm:$0xff]
      %v209 = vld [vmem:[%s196 + $0x28] sm:$0xff]
      %v210 = vld [vmem:[%s196 + $0x30] sm:$0xff]
      %v211 = vld [vmem:[%s196 + $0x38] sm:$0xff]
      %v212 = vld [vmem:[%s196 + $0x40] sm:$0xff]
      %v213 = vld [vmem:[%s196 + $0x48] sm:$0xff]
      %v214 = vld [vmem:[%s196 + $0x50] sm:$0xff]
      %v215 = vld [vmem:[%s196 + $0x58] sm:$0xff]
      %v216 = vld [vmem:[%s196 + $0x60] sm:$0xff]
      %v217 = vld [vmem:[%s196 + $0x68] sm:$0xff]
      %v218 = vld [vmem:[%s196 + $0x70] sm:$0xff]
      %v219 = vld [vmem:[%s196 + $0x78] sm:$0xff]
      %v220 = vld [vmem:[%s1] sm:$0xff]
      %v221 = vld [vmem:[%s1 + $0x8] sm:$0xff]
      %v222 = vld [vmem:[%s1 + $0x10] sm:$0xff]
      %v223 = vld [vmem:[%s1 + $0x18] sm:$0xff]
      %v224 = vld [vmem:[%s1 + $0x20] sm:$0xff]
      %v225 = vld [vmem:[%s1 + $0x28] sm:$0xff]
      %v226 = vld [vmem:[%s1 + $0x30] sm:$0xff]
      %v227 = vld [vmem:[%s1 + $0x38] sm:$0xff]
      %v228 = vld [vmem:[%s1 + $0x40] sm:$0xff]
      %v229 = vld [vmem:[%s1 + $0x48] sm:$0xff]
      %v230 = vld [vmem:[%s1 + $0x50] sm:$0xff]
      %v231 = vld [vmem:[%s1 + $0x58] sm:$0xff]
      %v232 = vld [vmem:[%s1 + $0x60] sm:$0xff]
      %v233 = vld [vmem:[%s1 + $0x68] sm:$0xff]
      %v234 = vld [vmem:[%s1 + $0x70] sm:$0xff]
      %v235 = vld [vmem:[%s1 + $0x78] sm:$0xff]
      %v236 = vld [vmem:[%s1 + $0x80] sm:$0xff]
      %v237 = vld [vmem:[%s1 + $0x88] sm:$0xff]
      %v238 = vld [vmem:[%s1 + $0x90] sm:$0x3f]
      %v239 = vld [vmem:[%s2] sm:$0x1]
      %v241 = vlaneseq
      %v242 = vshrl.u32 %v241, 7
      %v243 = vsub.s32 0, %v242
      %v244 = vrot.slane %v239, %v243
      %vm246 = vcmask 179200
      %v248 = vsel %vm246, %v205, 0
      %v251 = vsel %vm246, %v207, 0
      %v254 = vsel %vm246, %v209, 0
      %v257 = vsel %vm246, %v211, 0
      %v260 = vsel %vm246, %v213, 0
      %v263 = vsel %vm246, %v215, 0
      %v266 = vsel %vm246, %v217, 0
      %v269 = vsel %vm246, %v219, 0
      %vm271 = vcmask 1045504
      %v273 = vsel %vm271, %v238, 0
      %275 = vmatprep.subr.mxu0 0.0
      %276 = vmatpush1.msra.mxu0 %v220
      %277 = vmatprep.subr.mxu0 0.0
      %278 = vmatpush1.msra.mxu0 %v221
      %279 = vmatprep.subr.mxu0 0.0
      %280 = vmatpush1.msra.mxu0 %v222
      %281 = vmatprep.subr.mxu0 0.0
      %282 = vmatpush1.msra.mxu0 %v223
      %283 = vmatprep.subr.mxu0 0.0
      %284 = vmatpush1.msra.mxu0 %v224
      %285 = vmatprep.subr.mxu0 0.0
      %286 = vmatpush1.msra.mxu0 %v225
      %287 = vmatprep.subr.mxu0 0.0
      %288 = vmatpush1.msra.mxu0 %v226
      %289 = vmatprep.subr.mxu0 0.0
      %290 = vmatpush1.msra.mxu0 %v227
      %291 = vmatprep.subr.mxu0 0.0
      %292 = vmatpush1.msra.mxu0 %v228
      %293 = vmatprep.subr.mxu0 0.0
      %294 = vmatpush1.msra.mxu0 %v229
      %295 = vmatprep.subr.mxu0 0.0
      %296 = vmatpush1.msra.mxu0 %v230
      %297 = vmatprep.subr.mxu0 0.0
      %298 = vmatpush1.msra.mxu0 %v231
      %299 = vmatprep.subr.mxu0 0.0
      %300 = vmatpush1.msra.mxu0 %v232
      %301 = vmatprep.subr.mxu0 0.0
      %302 = vmatpush1.msra.mxu0 %v233
      %303 = vmatprep.subr.mxu0 0.0
      %304 = vmatpush1.msra.mxu0 %v234
      %305 = vmatprep.subr.mxu0 0.0
      %306 = vmatpush1.msra.mxu0 %v235
      %307 = vmatprep.subr.mxu0 0.0
      %308 = vmatpush1.msra.mxu0 %v236
      %309 = vmatprep.subr.mxu0 0.0
      %310 = vmatpush1.msra.mxu0 %v237
      %311 = vmatprep.subr.mxu0 0.0
      %312 = vmatpush1.msra.mxu0 %v273
      %313 = vmatprep.subr.mxu0 0.0
      %314 = vmatpush1.msra.mxu0 0.0
      %315 = vmatprep.subr.mxu0 0.0
      %316 = vmatpush1.msra.mxu0 0.0
      %317 = vmatprep.subr.mxu0 0.0
      %318 = vmatpush1.msra.mxu0 0.0
      %319 = vmatprep.subr.mxu0 0.0
      %320 = vmatpush1.msra.mxu0 0.0
      %321 = vmatprep.subr.mxu0 0.0
      %322 = vmatpush1.msra.mxu0 0.0
      %323 = vmatprep.subr.mxu0 0.0
      %324 = vmatpush1.msra.mxu0 0.0
      %325 = vmatprep.subr.mxu0 0.0
      %326 = vmatpush1.msra.mxu0 0.0
      %327 = vmatprep.subr.mxu0 0.0
      %328 = vmatpush1.msra.mxu0 0.0
      %329 = vmatprep.subr.mxu0 0.0
      %330 = vmatpush1.msra.mxu0 0.0
      %331 = vmatprep.subr.mxu0 0.0
      %332 = vmatpush1.msra.mxu0 0.0
      %333 = vmatprep.subr.mxu0 0.0
      %334 = vmatpush1.msra.mxu0 0.0
      %335 = vmatprep.subr.mxu0 0.0
      %336 = vmatpush1.msra.mxu0 0.0
      %337 = vmatprep.subr.mxu0 0.0
      %338 = vmatpush1.msra.mxu0 0.0
      %339 = vmatprep.mubr.f32.mxu0 %v248
      %340 = vmatmul.mubr.f32.gmra.mrb[0].mxu0 %v204
      %v341 = vpop.f32.mrb[0].mxu0
      %v342 = vadd.f32 %v244, %v341
      %v343 = vpop.f32.mrb[0].mxu0
      %344 = vmatprep.mubr.f32.mxu0 %v251
      %345 = vmatmul.mubr.f32.gmra.mrb[0].mxu0 %v206
      %v346 = vpop.f32.mrb[0].mxu0
      %v347 = vadd.f32 %v244, %v346
      %v348 = vpop.f32.mrb[0].mxu0
      %349 = vmatprep.mubr.f32.mxu0 %v254
      %350 = vmatmul.mubr.f32.gmra.mrb[0].mxu0 %v208
      %v351 = vpop.f32.mrb[0].mxu0
      %v352 = vadd.f32 %v244, %v351
      %v353 = vpop.f32.mrb[0].mxu0
      %354 = vmatprep.mubr.f32.mxu0 %v257
      %355 = vmatmul.mubr.f32.gmra.mrb[0].mxu0 %v210
      %v356 = vpop.f32.mrb[0].mxu0
      %v357 = vadd.f32 %v244, %v356
      %v358 = vpop.f32.mrb[0].mxu0
      %359 = vmatprep.mubr.f32.mxu0 %v260
      %360 = vmatmul.mubr.f32.gmra.mrb[0].mxu0 %v212
      %v361 = vpop.f32.mrb[0].mxu0
      %v362 = vadd.f32 %v244, %v361
      %v363 = vpop.f32.mrb[0].mxu0
      %364 = vmatprep.mubr.f32.mxu0 %v263
      %365 = vmatmul.mubr.f32.gmra.mrb[0].mxu0 %v214
      %v366 = vpop.f32.mrb[0].mxu0
      %v367 = vadd.f32 %v244, %v366
      %v368 = vpop.f32.mrb[0].mxu0
      %369 = vmatprep.mubr.f32.mxu0 %v266
      %370 = vmatmul.mubr.f32.gmra.mrb[0].mxu0 %v216
      %v371 = vpop.f32.mrb[0].mxu0
      %v372 = vadd.f32 %v244, %v371
      %v373 = vpop.f32.mrb[0].mxu0
      %374 = vmatprep.mubr.f32.mxu0 %v269
      %375 = vmatmul.mubr.f32.gmra.mrb[0].mxu0 %v218
      %v376 = vpop.f32.mrb[0].mxu0
      %v377 = vadd.f32 %v244, %v376
      %v378 = vpop.f32.mrb[0].mxu0
      %379 = vdwg.mxu0
      %v380 = vmax.f32 %v342, 0.0
      %v381 = vmax.f32 %v347, 0.0
      %v382 = vmax.f32 %v352, 0.0
      %v383 = vmax.f32 %v357, 0.0
      %v384 = vmax.f32 %v362, 0.0
      %v385 = vmax.f32 %v367, 0.0
      %v386 = vmax.f32 %v372, 0.0
      %v387 = vmax.f32 %v377, 0.0
      %v388 = vld [vmem:[%s3] sm:$0xff]
      %v389 = vld [vmem:[%s3 + $0x8] sm:$0xff]
      %vm390 = vcmask 523264
      %v392 = vsel %vm390, %v388, 0
      %v395 = vsel %vm390, %v389, 0
      %397 = vmatprep.subr.mxu0 0.0
      %398 = vmatpush1.msra.mxu0 %v380
      %399 = vmatprep.subr.mxu0 0.0
      %400 = vmatpush1.msra.mxu0 %v381
      %401 = vmatprep.subr.mxu0 0.0
      %402 = vmatpush1.msra.mxu0 %v382
      %403 = vmatprep.subr.mxu0 0.0
      %404 = vmatpush1.msra.mxu0 %v383
      %405 = vmatprep.subr.mxu0 0.0
      %406 = vmatpush1.msra.mxu0 %v384
      %407 = vmatprep.subr.mxu0 0.0
      %408 = vmatpush1.msra.mxu0 %v385
      %409 = vmatprep.subr.mxu0 0.0
      %410 = vmatpush1.msra.mxu0 %v386
      %411 = vmatprep.subr.mxu0 0.0
      %412 = vmatpush1.msra.mxu0 %v387
      %413 = vmatprep.subr.mxu0 0.0
      %414 = vmatpush1.msra.mxu0 0.0
      %415 = vmatprep.subr.mxu0 0.0
      %416 = vmatpush1.msra.mxu0 0.0
      %417 = vmatprep.subr.mxu0 0.0
      %418 = vmatpush1.msra.mxu0 0.0
      %419 = vmatprep.subr.mxu0 0.0
      %420 = vmatpush1.msra.mxu0 0.0
      %421 = vmatprep.subr.mxu0 0.0
      %422 = vmatpush1.msra.mxu0 0.0
      %423 = vmatprep.subr.mxu0 0.0
      %424 = vmatpush1.msra.mxu0 0.0
      %425 = vmatprep.subr.mxu0 0.0
      %426 = vmatpush1.msra.mxu0 0.0
      %427 = vmatprep.subr.mxu0 0.0
      %428 = vmatpush1.msra.mxu0 0.0
      %429 = vmatprep.subr.mxu0 0.0
      %430 = vmatpush1.msra.mxu0 0.0
      %431 = vmatprep.subr.mxu0 0.0
      %432 = vmatpush1.msra.mxu0 0.0
      %433 = vmatprep.subr.mxu0 0.0
      %434 = vmatpush1.msra.mxu0 0.0
      %435 = vmatprep.subr.mxu0 0.0
      %436 = vmatpush1.msra.mxu0 0.0
      %437 = vmatprep.subr.mxu0 0.0
      %438 = vmatpush1.msra.mxu0 0.0
      %439 = vmatprep.subr.mxu0 0.0
      %440 = vmatpush1.msra.mxu0 0.0
      %441 = vmatprep.subr.mxu0 0.0
      %442 = vmatpush1.msra.mxu0 0.0
      %443 = vmatprep.subr.mxu0 0.0
      %444 = vmatpush1.msra.mxu0 0.0
      %445 = vmatprep.subr.mxu0 0.0
      %446 = vmatpush1.msra.mxu0 0.0
      %447 = vmatprep.subr.mxu0 0.0
      %448 = vmatpush1.msra.mxu0 0.0
      %449 = vmatprep.subr.mxu0 0.0
      %450 = vmatpush1.msra.mxu0 0.0
      %451 = vmatprep.subr.mxu0 0.0
      %452 = vmatpush1.msra.mxu0 0.0
      %453 = vmatprep.subr.mxu0 0.0
      %454 = vmatpush1.msra.mxu0 0.0
      %455 = vmatprep.subr.mxu0 0.0
      %456 = vmatpush1.msra.mxu0 0.0
      %457 = vmatprep.subr.mxu0 0.0
      %458 = vmatpush1.msra.mxu0 0.0
      %459 = vmatprep.subr.mxu0 0.0
      %460 = vmatpush1.msra.mxu0 0.0
      %461 = vmatprep.mubr.f32.mxu0 0.0
      %462 = vmatmul.mubr.f32.gmra.mrb[0].mxu0 %v392
      %v463 = vpop.f32.mrb[0].mxu0
      %v464 = vadd.f32 0.0, %v463
      %v465 = vpop.f32.mrb[0].mxu0
      %466 = vmatprep.mubr.f32.mxu0 0.0
      %467 = vmatmul.mubr.f32.gmra.mrb[0].mxu0 %v395
      %v468 = vpop.f32.mrb[0].mxu0
      %v469 = vadd.f32 0.0, %v468
      %v470 = vpop.f32.mrb[0].mxu0
      %471 = vdwg.mxu0
      %472 = vst [vmem:[%s202] sm:$0xff] %v464
      %473 = vst [vmem:[%s202 + $0x8] sm:$0xff] %v469
      %s474 = smul.u32 2, %s15
      %p475 = scmp.lt.s32.totalorder %s474, 3
      %s476 = scalar_select %p475, %s474, 3
      %s477 = smul.addr %s476, 8
      %s478 = scalar_lea.vmem %s4, %s477
      // Predicated region
      $region37: #{lenet_forward.4} parent=35 // pred_check
        %p479 = pneg %p122
      $region38: #{lenet_forward.4} parent=35 // pred_check_branch
        %481 = sbr.rel (%p479) target = $region40
      $region39: #{lenet_forward.4} parent=35 // pred_region
        %s482 = smul.u32 2, %s15
      $region40: #{lenet_forward.4} parent=35 // pred_fallthru
        _
    $region36: #{lenet_forward.4} parent=5 // pred_fallthru
      _
    %p483 = scmp.le.s32.totalorder 2, %s10
    // Predicated region
    $region41: #{lenet_forward.4} parent=5 // pred_check
      %p484 = pneg %p483
    $region42: #{lenet_forward.4} parent=5 // pred_check_branch
      %486 = sbr.rel (%p484) target = $region44
    $region43: #{lenet_forward.4} parent=5 // pred_region
      %s487 = ssub.s32 %s10, 2
      // Predicated region
      $region45: #{lenet_forward.4} parent=43 // pred_check
        %p488 = pneg %p128
      $region46: #{lenet_forward.4} parent=43 // pred_check_branch
        %490 = sbr.rel (%p488) target = $region48
      $region47: #{lenet_forward.4} parent=43 // pred_region
        %s491 = smul.u32 2, %s16
        %p492 = scmp.lt.s32.totalorder %s491, 3
        %s493 = scalar_select %p492, %s491, 3
        %s494 = smul.addr %s493, 8
        %s495 = scalar_lea.vmem %s4, %s494
      $region48: #{lenet_forward.4} parent=43 // pred_fallthru
        _
    $region44: #{lenet_forward.4} parent=5 // pred_fallthru
      _
  $region6: #{lenet_forward.4} parent=0 // loop_footer
    %s14 = sadd.s32 1, %s10
  $region7: #{lenet_forward.4} parent=0 // loop_footer_branch
    %9 = sbr.rel target = $region3
  $region8: #{lenet_forward.4} parent=0 // loop_exit
    _

// kernel: lenet_forward.5
$region0: #{lenet_forward.5}
  #allocation0 [shape = 'u32[]', space=smem, size = 0x4, offset = 0x4, fixed_abs, tag = 'smem constant byte address 0x4 - core index']
  #allocation1 [shape = 'u32[144,128]{1,0:T(1,128)}', space=vmem, size = 0x12000, scoped, tag = 'internal scratch']
  %s0 = inlined_call_operand.vmem [shape: f32[2,2048], index: 0, kind: input, shape index: {}]
  %s1 = inlined_call_operand.vmem [shape: f32[2048,128], index: 1, kind: input, shape index: {}]
  %s2 = inlined_call_operand.vmem [shape: f32[1,128], index: 2, kind: input, shape index: {}]
  %s3 = inlined_call_operand.vmem [shape: f32[128,128], index: 3, kind: input, shape index: {}]
  %s4 = inlined_call_operand.vmem [shape: f32[1,128], index: 4, kind: input, shape index: {}]
  %s5 = inlined_call_operand.vmem [shape: f32[128,128], index: 5, kind: input, shape index: {}]
  %s6 = inlined_call_operand.vmem [shape: f32[1,128], index: 6, kind: input, shape index: {}]
  %s7 = inlined_call_operand.hbm [shape: f32[2,128], index: 7, kind: output, shape index: {}]
  %s8 = sld [smem:[#allocation0]]
  $region38: #{lenet_forward.5} parent=0
    _
  %s10 = ssub.s32 1, %s8
  %s11 = scalar_select 0, %s10, %s8
  $region1: #{lenet_forward.5} parent=0
    #allocation2 [shape = 'u8[1024]{0}', space=vmem, size = 0x400, scoped, tag = 'output window, operand 0, single buffered']
    #allocation3 [shape = 's32[1]{0}', space=sflag, size = 0x4, scoped, tag = 'scoped memory for lenet_forward.5']
    %12 = vsyncpa [#allocation3], 0
    // Predicated region
    $region2: #{lenet_forward.5} parent=1 // pred_check
      _
    $region3: #{lenet_forward.5} parent=1 // pred_check_branch
      %14 = sbr.rel (0) target = $region5
    $region4: #{lenet_forward.5} parent=1 // pred_region
      _
    $region5: #{lenet_forward.5} parent=1 // pred_fallthru
      _
    // Predicated region
    $region6: #{lenet_forward.5} parent=1 // pred_check
      _
    $region7: #{lenet_forward.5} parent=1 // pred_check_branch
      %16 = sbr.rel (0) target = $region9
    $region8: #{lenet_forward.5} parent=1 // pred_region
      _
    $region9: #{lenet_forward.5} parent=1 // pred_fallthru
      _
    // Predicated region
    $region10: #{lenet_forward.5} parent=1 // pred_check
      _
    $region11: #{lenet_forward.5} parent=1 // pred_check_branch
      %18 = sbr.rel (0) target = $region13
    $region12: #{lenet_forward.5} parent=1 // pred_region
      _
    $region13: #{lenet_forward.5} parent=1 // pred_fallthru
      _
    // Predicated region
    $region14: #{lenet_forward.5} parent=1 // pred_check
      _
    $region15: #{lenet_forward.5} parent=1 // pred_check_branch
      %20 = sbr.rel (0) target = $region17
    $region16: #{lenet_forward.5} parent=1 // pred_region
      _
    $region17: #{lenet_forward.5} parent=1 // pred_fallthru
      _
    // Predicated region
    $region18: #{lenet_forward.5} parent=1 // pred_check
      _
    $region19: #{lenet_forward.5} parent=1 // pred_check_branch
      %22 = sbr.rel (0) target = $region21
    $region20: #{lenet_forward.5} parent=1 // pred_region
      _
    $region21: #{lenet_forward.5} parent=1 // pred_fallthru
      _
    // Predicated region
    $region22: #{lenet_forward.5} parent=1 // pred_check
      _
    $region23: #{lenet_forward.5} parent=1 // pred_check_branch
      %24 = sbr.rel (0) target = $region25
    $region24: #{lenet_forward.5} parent=1 // pred_region
      _
    $region25: #{lenet_forward.5} parent=1 // pred_fallthru
      _
    // Predicated region
    $region26: #{lenet_forward.5} parent=1 // pred_check
      _
    $region27: #{lenet_forward.5} parent=1 // pred_check_branch
      %26 = sbr.rel (0) target = $region29
    $region28: #{lenet_forward.5} parent=1 // pred_region
      _
    $region29: #{lenet_forward.5} parent=1 // pred_fallthru
      _
    %v27 = vld [vmem:[%s0] sm:$0xff]
    %v28 = vld [vmem:[%s0 + $0x8] sm:$0xff]
    %v29 = vld [vmem:[%s0 + $0x10] sm:$0xff]
    %v30 = vld [vmem:[%s0 + $0x18] sm:$0xff]
    %v31 = vld [vmem:[%s1] sm:$0xff]
    %v32 = vld [vmem:[%s1 + $0x8] sm:$0xff]
    %v33 = vld [vmem:[%s1 + $0x10] sm:$0xff]
    %v34 = vld [vmem:[%s1 + $0x18] sm:$0xff]
    %v35 = vld [vmem:[%s1 + $0x20] sm:$0xff]
    %v36 = vld [vmem:[%s1 + $0x28] sm:$0xff]
    %v37 = vld [vmem:[%s1 + $0x30] sm:$0xff]
    %v38 = vld [vmem:[%s1 + $0x38] sm:$0xff]
    %v39 = vld [vmem:[%s1 + $0x40] sm:$0xff]
    %v40 = vld [vmem:[%s1 + $0x48] sm:$0xff]
    %v41 = vld [vmem:[%s1 + $0x50] sm:$0xff]
    %v42 = vld [vmem:[%s1 + $0x58] sm:$0xff]
    %v43 = vld [vmem:[%s1 + $0x60] sm:$0xff]
    %v44 = vld [vmem:[%s1 + $0x68] sm:$0xff]
    %v45 = vld [vmem:[%s1 + $0x70] sm:$0xff]
    %v46 = vld [vmem:[%s1 + $0x78] sm:$0xff]
    %v47 = vld [vmem:[%s1 + $0x80] sm:$0xff]
    %v48 = vld [vmem:[%s1 + $0x88] sm:$0xff]
    %v49 = vld [vmem:[%s1 + $0x90] sm:$0xff]
    %v50 = vld [vmem:[%s1 + $0x98] sm:$0xff]
    %v51 = vld [vmem:[%s1 + $0xa0] sm:$0xff]
    %v52 = vld [vmem:[%s1 + $0xa8] sm:$0xff]
    %v53 = vld [vmem:[%s1 + $0xb0] sm:$0xff]
    %v54 = vld [vmem:[%s1 + $0xb8] sm:$0xff]
    %v55 = vld [vmem:[%s1 + $0xc0] sm:$0xff]
    %v56 = vld [vmem:[%s1 + $0xc8] sm:$0xff]
    %v57 = vld [vmem:[%s1 + $0xd0] sm:$0xff]
    %v58 = vld [vmem:[%s1 + $0xd8] sm:$0xff]
    %v59 = vld [vmem:[%s1 + $0xe0] sm:$0xff]
    %v60 = vld [vmem:[%s1 + $0xe8] sm:$0xff]
    %v61 = vld [vmem:[%s1 + $0xf0] sm:$0xff]
    %v62 = vld [vmem:[%s1 + $0xf8] sm:$0xff]
    %v63 = vld [vmem:[%s1 + $0x100] sm:$0xff]
    %v64 = vld [vmem:[%s1 + $0x108] sm:$0xff]
    %v65 = vld [vmem:[%s1 + $0x110] sm:$0xff]
    %v66 = vld [vmem:[%s1 + $0x118] sm:$0xff]
    %v67 = vld [vmem:[%s1 + $0x120] sm:$0xff]
    %v68 = vld [vmem:[%s1 + $0x128] sm:$0xff]
    %v69 = vld [vmem:[%s1 + $0x130] sm:$0xff]
    %v70 = vld [vmem:[%s1 + $0x138] sm:$0xff]
    %v71 = vld [vmem:[%s1 + $0x140] sm:$0xff]
    %v72 = vld [vmem:[%s1 + $0x148] sm:$0xff]
    %v73 = vld [vmem:[%s1 + $0x150] sm:$0xff]
    %v74 = vld [vmem:[%s1 + $0x158] sm:$0xff]
    %v75 = vld [vmem:[%s1 + $0x160] sm:$0xff]
    %v76 = vld [vmem:[%s1 + $0x168] sm:$0xff]
    %v77 = vld [vmem:[%s1 + $0x170] sm:$0xff]
    %v78 = vld [vmem:[%s1 + $0x178] sm:$0xff]
    %v79 = vld [vmem:[%s1 + $0x180] sm:$0xff]
    %v80 = vld [vmem:[%s1 + $0x188] sm:$0xff]
    %v81 = vld [vmem:[%s1 + $0x190] sm:$0xff]
    %v82 = vld [vmem:[%s1 + $0x198] sm:$0xff]
    %v83 = vld [vmem:[%s1 + $0x1a0] sm:$0xff]
    %v84 = vld [vmem:[%s1 + $0x1a8] sm:$0xff]
    %v85 = vld [vmem:[%s1 + $0x1b0] sm:$0xff]
    %v86 = vld [vmem:[%s1 + $0x1b8] sm:$0xff]
    %v87 = vld [vmem:[%s1 + $0x1c0] sm:$0xff]
    %v88 = vld [vmem:[%s1 + $0x1c8] sm:$0xff]
    %v89 = vld [vmem:[%s1 + $0x1d0] sm:$0xff]
    %v90 = vld [vmem:[%s1 + $0x1d8] sm:$0xff]
    %v91 = vld [vmem:[%s1 + $0x1e0] sm:$0xff]
    %v92 = vld [vmem:[%s1 + $0x1e8] sm:$0xff]
    %v93 = vld [vmem:[%s1 + $0x1f0] sm:$0xff]
    %v94 = vld [vmem:[%s1 + $0x1f8] sm:$0xff]
    %v95 = vld [vmem:[%s1 + $0x200] sm:$0xff]
    %v96 = vld [vmem:[%s1 + $0x208] sm:$0xff]
    %v97 = vld [vmem:[%s1 + $0x210] sm:$0xff]
    %v98 = vld [vmem:[%s1 + $0x218] sm:$0xff]
    %v99 = vld [vmem:[%s1 + $0x220] sm:$0xff]
    %v100 = vld [vmem:[%s1 + $0x228] sm:$0xff]
    %v101 = vld [vmem:[%s1 + $0x230] sm:$0xff]
    %v102 = vld [vmem:[%s1 + $0x238] sm:$0xff]
    %v103 = vld [vmem:[%s1 + $0x240] sm:$0xff]
    %v104 = vld [vmem:[%s1 + $0x248] sm:$0xff]
    %v105 = vld [vmem:[%s1 + $0x250] sm:$0xff]
    %v106 = vld [vmem:[%s1 + $0x258] sm:$0xff]
    %v107 = vld [vmem:[%s1 + $0x260] sm:$0xff]
    %v108 = vld [vmem:[%s1 + $0x268] sm:$0xff]
    %v109 = vld [vmem:[%s1 + $0x270] sm:$0xff]
    %v110 = vld [vmem:[%s1 + $0x278] sm:$0xff]
    %v111 = vld [vmem:[%s1 + $0x280] sm:$0xff]
    %v112 = vld [vmem:[%s1 + $0x288] sm:$0xff]
    %v113 = vld [vmem:[%s1 + $0x290] sm:$0xff]
    %v114 = vld [vmem:[%s1 + $0x298] sm:$0xff]
    %v115 = vld [vmem:[%s1 + $0x2a0] sm:$0xff]
    %v116 = vld [vmem:[%s1 + $0x2a8] sm:$0xff]
    %v117 = vld [vmem:[%s1 + $0x2b0] sm:$0xff]
    %v118 = vld [vmem:[%s1 + $0x2b8] sm:$0xff]
    %v119 = vld [vmem:[%s1 + $0x2c0] sm:$0xff]
    %v120 = vld [vmem:[%s1 + $0x2c8] sm:$0xff]
    %v121 = vld [vmem:[%s1 + $0x2d0] sm:$0xff]
    %v122 = vld [vmem:[%s1 + $0x2d8] sm:$0xff]
    %v123 = vld [vmem:[%s1 + $0x2e0] sm:$0xff]
    %v124 = vld [vmem:[%s1 + $0x2e8] sm:$0xff]
    %v125 = vld [vmem:[%s1 + $0x2f0] sm:$0xff]
    %v126 = vld [vmem:[%s1 + $0x2f8] sm:$0xff]
    %v127 = vld [vmem:[%s1 + $0x300] sm:$0xff]
    %v128 = vld [vmem:[%s1 + $0x308] sm:$0xff]
    %v129 = vld [vmem:[%s1 + $0x310] sm:$0xff]
    %v130 = vld [vmem:[%s1 + $0x318] sm:$0xff]
    %v131 = vld [vmem:[%s1 + $0x320] sm:$0xff]
    %v132 = vld [vmem:[%s1 + $0x328] sm:$0xff]
    %v133 = vld [vmem:[%s1 + $0x330] sm:$0xff]
    %v134 = vld [vmem:[%s1 + $0x338] sm:$0xff]
    %v135 = vld [vmem:[%s1 + $0x340] sm:$0xff]
    %v136 = vld [vmem:[%s1 + $0x348] sm:$0xff]
    %v137 = vld [vmem:[%s1 + $0x350] sm:$0xff]
    %v138 = vld [vmem:[%s1 + $0x358] sm:$0xff]
    %v139 = vld [vmem:[%s1 + $0x360] sm:$0xff]
    %v140 = vld [vmem:[%s1 + $0x368] sm:$0xff]
    %v141 = vld [vmem:[%s1 + $0x370] sm:$0xff]
    %v142 = vld [vmem:[%s1 + $0x378] sm:$0xff]
    %v143 = vld [vmem:[%s1 + $0x380] sm:$0xff]
    %v144 = vld [vmem:[%s1 + $0x388] sm:$0xff]
    %v145 = vld [vmem:[%s1 + $0x390] sm:$0xff]
    %v146 = vld [vmem:[%s1 + $0x398] sm:$0xff]
    %v147 = vld [vmem:[%s1 + $0x3a0] sm:$0xff]
    %v148 = vld [vmem:[%s1 + $0x3a8] sm:$0xff]
    %v149 = vld [vmem:[%s1 + $0x3b0] sm:$0xff]
    %v150 = vld [vmem:[%s1 + $0x3b8] sm:$0xff]
    %v151 = vld [vmem:[%s1 + $0x3c0] sm:$0xff]
    %v152 = vld [vmem:[%s1 + $0x3c8] sm:$0xff]
    %v153 = vld [vmem:[%s1 + $0x3d0] sm:$0xff]
    %v154 = vld [vmem:[%s1 + $0x3d8] sm:$0xff]
    %v155 = vld [vmem:[%s1 + $0x3e0] sm:$0xff]
    %v156 = vld [vmem:[%s1 + $0x3e8] sm:$0xff]
    %v157 = vld [vmem:[%s1 + $0x3f0] sm:$0xff]
    %v158 = vld [vmem:[%s1 + $0x3f8] sm:$0xff]
    %v159 = vld [vmem:[%s1 + $0x400] sm:$0xff]
    %v160 = vld [vmem:[%s1 + $0x408] sm:$0xff]
    %v161 = vld [vmem:[%s1 + $0x410] sm:$0xff]
    %v162 = vld [vmem:[%s1 + $0x418] sm:$0xff]
    %v163 = vld [vmem:[%s1 + $0x420] sm:$0xff]
    %v164 = vld [vmem:[%s1 + $0x428] sm:$0xff]
    %v165 = vld [vmem:[%s1 + $0x430] sm:$0xff]
    %v166 = vld [vmem:[%s1 + $0x438] sm:$0xff]
    %v167 = vld [vmem:[%s1 + $0x440] sm:$0xff]
    %v168 = vld [vmem:[%s1 + $0x448] sm:$0xff]
    %v169 = vld [vmem:[%s1 + $0x450] sm:$0xff]
    %v170 = vld [vmem:[%s1 + $0x458] sm:$0xff]
    %v171 = vld [vmem:[%s1 + $0x460] sm:$0xff]
    %v172 = vld [vmem:[%s1 + $0x468] sm:$0xff]
    %v173 = vld [vmem:[%s1 + $0x470] sm:$0xff]
    %v174 = vld [vmem:[%s1 + $0x478] sm:$0xff]
    %v175 = vld [vmem:[%s1 + $0x480] sm:$0xff]
    %v176 = vld [vmem:[%s1 + $0x488] sm:$0xff]
    %v177 = vld [vmem:[%s1 + $0x490] sm:$0xff]
    %v178 = vld [vmem:[%s1 + $0x498] sm:$0xff]
    %v179 = vld [vmem:[%s1 + $0x4a0] sm:$0xff]
    %v180 = vld [vmem:[%s1 + $0x4a8] sm:$0xff]
    %v181 = vld [vmem:[%s1 + $0x4b0] sm:$0xff]
    %v182 = vld [vmem:[%s1 + $0x4b8] sm:$0xff]
    %v183 = vld [vmem:[%s1 + $0x4c0] sm:$0xff]
    %v184 = vld [vmem:[%s1 + $0x4c8] sm:$0xff]
    %v185 = vld [vmem:[%s1 + $0x4d0] sm:$0xff]
    %v186 = vld [vmem:[%s1 + $0x4d8] sm:$0xff]
    %v187 = vld [vmem:[%s1 + $0x4e0] sm:$0xff]
    %v188 = vld [vmem:[%s1 + $0x4e8] sm:$0xff]
    %v189 = vld [vmem:[%s1 + $0x4f0] sm:$0xff]
    %v190 = vld [vmem:[%s1 + $0x4f8] sm:$0xff]
    %v191 = vld [vmem:[%s1 + $0x500] sm:$0xff]
    %v192 = vld [vmem:[%s1 + $0x508] sm:$0xff]
    %v193 = vld [vmem:[%s1 + $0x510] sm:$0xff]
    %v194 = vld [vmem:[%s1 + $0x518] sm:$0xff]
    %v195 = vld [vmem:[%s1 + $0x520] sm:$0xff]
    %v196 = vld [vmem:[%s1 + $0x528] sm:$0xff]
    %v197 = vld [vmem:[%s1 + $0x530] sm:$0xff]
    %v198 = vld [vmem:[%s1 + $0x538] sm:$0xff]
    %v199 = vld [vmem:[%s1 + $0x540] sm:$0xff]
    %v200 = vld [vmem:[%s1 + $0x548] sm:$0xff]
    %v201 = vld [vmem:[%s1 + $0x550] sm:$0xff]
    %v202 = vld [vmem:[%s1 + $0x558] sm:$0xff]
    %v203 = vld [vmem:[%s1 + $0x560] sm:$0xff]
    %v204 = vld [vmem:[%s1 + $0x568] sm:$0xff]
    %v205 = vld [vmem:[%s1 + $0x570] sm:$0xff]
    %v206 = vld [vmem:[%s1 + $0x578] sm:$0xff]
    %v207 = vld [vmem:[%s1 + $0x580] sm:$0xff]
    %v208 = vld [vmem:[%s1 + $0x588] sm:$0xff]
    %v209 = vld [vmem:[%s1 + $0x590] sm:$0xff]
    %v210 = vld [vmem:[%s1 + $0x598] sm:$0xff]
    %v211 = vld [vmem:[%s1 + $0x5a0] sm:$0xff]
    %v212 = vld [vmem:[%s1 + $0x5a8] sm:$0xff]
    %v213 = vld [vmem:[%s1 + $0x5b0] sm:$0xff]
    %v214 = vld [vmem:[%s1 + $0x5b8] sm:$0xff]
    %v215 = vld [vmem:[%s1 + $0x5c0] sm:$0xff]
    %v216 = vld [vmem:[%s1 + $0x5c8] sm:$0xff]
    %v217 = vld [vmem:[%s1 + $0x5d0] sm:$0xff]
    %v218 = vld [vmem:[%s1 + $0x5d8] sm:$0xff]
    %v219 = vld [vmem:[%s1 + $0x5e0] sm:$0xff]
    %v220 = vld [vmem:[%s1 + $0x5e8] sm:$0xff]
    %v221 = vld [vmem:[%s1 + $0x5f0] sm:$0xff]
    %v222 = vld [vmem:[%s1 + $0x5f8] sm:$0xff]
    %v223 = vld [vmem:[%s1 + $0x600] sm:$0xff]
    %v224 = vld [vmem:[%s1 + $0x608] sm:$0xff]
    %v225 = vld [vmem:[%s1 + $0x610] sm:$0xff]
    %v226 = vld [vmem:[%s1 + $0x618] sm:$0xff]
    %v227 = vld [vmem:[%s1 + $0x620] sm:$0xff]
    %v228 = vld [vmem:[%s1 + $0x628] sm:$0xff]
    %v229 = vld [vmem:[%s1 + $0x630] sm:$0xff]
    %v230 = vld [vmem:[%s1 + $0x638] sm:$0xff]
    %v231 = vld [vmem:[%s1 + $0x640] sm:$0xff]
    %v232 = vld [vmem:[%s1 + $0x648] sm:$0xff]
    %v233 = vld [vmem:[%s1 + $0x650] sm:$0xff]
    %v234 = vld [vmem:[%s1 + $0x658] sm:$0xff]
    %v235 = vld [vmem:[%s1 + $0x660] sm:$0xff]
    %v236 = vld [vmem:[%s1 + $0x668] sm:$0xff]
    %v237 = vld [vmem:[%s1 + $0x670] sm:$0xff]
    %v238 = vld [vmem:[%s1 + $0x678] sm:$0xff]
    %v239 = vld [vmem:[%s1 + $0x680] sm:$0xff]
    %v240 = vld [vmem:[%s1 + $0x688] sm:$0xff]
    %v241 = vld [vmem:[%s1 + $0x690] sm:$0xff]
    %v242 = vld [vmem:[%s1 + $0x698] sm:$0xff]
    %v243 = vld [vmem:[%s1 + $0x6a0] sm:$0xff]
    %v244 = vld [vmem:[%s1 + $0x6a8] sm:$0xff]
    %v245 = vld [vmem:[%s1 + $0x6b0] sm:$0xff]
    %v246 = vld [vmem:[%s1 + $0x6b8] sm:$0xff]
    %v247 = vld [vmem:[%s1 + $0x6c0] sm:$0xff]
    %v248 = vld [vmem:[%s1 + $0x6c8] sm:$0xff]
    %v249 = vld [vmem:[%s1 + $0x6d0] sm:$0xff]
    %v250 = vld [vmem:[%s1 + $0x6d8] sm:$0xff]
    %v251 = vld [vmem:[%s1 + $0x6e0] sm:$0xff]
    %v252 = vld [vmem:[%s1 + $0x6e8] sm:$0xff]
    %v253 = vld [vmem:[%s1 + $0x6f0] sm:$0xff]
    %v254 = vld [vmem:[%s1 + $0x6f8] sm:$0xff]
    %v255 = vld [vmem:[%s1 + $0x700] sm:$0xff]
    %v256 = vld [vmem:[%s1 + $0x708] sm:$0xff]
    %v257 = vld [vmem:[%s1 + $0x710] sm:$0xff]
    %v258 = vld [vmem:[%s1 + $0x718] sm:$0xff]
    %v259 = vld [vmem:[%s1 + $0x720] sm:$0xff]
    %v260 = vld [vmem:[%s1 + $0x728] sm:$0xff]
    %v261 = vld [vmem:[%s1 + $0x730] sm:$0xff]
    %v262 = vld [vmem:[%s1 + $0x738] sm:$0xff]
    %v263 = vld [vmem:[%s1 + $0x740] sm:$0xff]
    %v264 = vld [vmem:[%s1 + $0x748] sm:$0xff]
    %v265 = vld [vmem:[%s1 + $0x750] sm:$0xff]
    %v266 = vld [vmem:[%s1 + $0x758] sm:$0xff]
    %v267 = vld [vmem:[%s1 + $0x760] sm:$0xff]
    %v268 = vld [vmem:[%s1 + $0x768] sm:$0xff]
    %v269 = vld [vmem:[%s1 + $0x770] sm:$0xff]
    %v270 = vld [vmem:[%s1 + $0x778] sm:$0xff]
    %v271 = vld [vmem:[%s1 + $0x780] sm:$0xff]
    %v272 = vld [vmem:[%s1 + $0x788] sm:$0xff]
    %v273 = vld [vmem:[%s1 + $0x790] sm:$0xff]
    %v274 = vld [vmem:[%s1 + $0x798] sm:$0xff]
    %v275 = vld [vmem:[%s1 + $0x7a0] sm:$0xff]
    %v276 = vld [vmem:[%s1 + $0x7a8] sm:$0xff]
    %v277 = vld [vmem:[%s1 + $0x7b0] sm:$0xff]
    %v278 = vld [vmem:[%s1 + $0x7b8] sm:$0xff]
    %v279 = vld [vmem:[%s1 + $0x7c0] sm:$0xff]
    %v280 = vld [vmem:[%s1 + $0x7c8] sm:$0xff]
    %v281 = vld [vmem:[%s1 + $0x7d0] sm:$0xff]
    %v282 = vld [vmem:[%s1 + $0x7d8] sm:$0xff]
    %v283 = vld [vmem:[%s1 + $0x7e0] sm:$0xff]
    %v284 = vld [vmem:[%s1 + $0x7e8] sm:$0xff]
    %v285 = vld [vmem:[%s1 + $0x7f0] sm:$0xff]
    %v286 = vld [vmem:[%s1 + $0x7f8] sm:$0xff]
    %v287 = vld [vmem:[%s2] sm:$0x1]
    %v289 = vlaneseq
    %v290 = vshrl.u32 %v289, 7
    %v291 = vsub.s32 0, %v290
    %v292 = vrot.slane %v287, %v291
    %v298 = vcombine.high %v27, %v27
    %v300 = vunpack.c.l.s4 1983009808
    %v301 = vunpack.c.0.s8 %v300
    %v302 = vlaneseq
    %v303 = vshrl.u32 %v302, 7
    %v304 = vsub.s32 %v301, %v303
    %v305 = vrot.slane %v27, %v304
    %v307 = vunpack.c.l.s4 1983009808
    %v308 = vunpack.c.0.s8 %v307
    %v309 = vlaneseq
    %v310 = vshrl.u32 %v309, 7
    %v311 = vsub.s32 %v308, %v310
    %v312 = vrot.slane %v298, %v311
    %v313 = vcombine.high %v305, %v305
    %v314 = vcombine.high %v312, %v312
    %v315 = vcombine.high %v28, %v28
    %v317 = vunpack.c.l.s4 1983009808
    %v318 = vunpack.c.0.s8 %v317
    %v319 = vlaneseq
    %v320 = vshrl.u32 %v319, 7
    %v321 = vsub.s32 %v318, %v320
    %v322 = vrot.slane %v28, %v321
    %v324 = vunpack.c.l.s4 1983009808
    %v325 = vunpack.c.0.s8 %v324
    %v326 = vlaneseq
    %v327 = vshrl.u32 %v326, 7
    %v328 = vsub.s32 %v325, %v327
    %v329 = vrot.slane %v315, %v328
    %v330 = vcombine.high %v322, %v322
    %v331 = vcombine.high %v329, %v329
    %v332 = vcombine.high %v29, %v29
    %v334 = vunpack.c.l.s4 1983009808
    %v335 = vunpack.c.0.s8 %v334
    %v336 = vlaneseq
    %v337 = vshrl.u32 %v336, 7
    %v338 = vsub.s32 %v335, %v337
    %v339 = vrot.slane %v29, %v338
    %v341 = vunpack.c.l.s4 1983009808
    %v342 = vunpack.c.0.s8 %v341
    %v343 = vlaneseq
    %v344 = vshrl.u32 %v343, 7
    %v345 = vsub.s32 %v342, %v344
    %v346 = vrot.slane %v332, %v345
    %v347 = vcombine.high %v339, %v339
    %v348 = vcombine.high %v346, %v346
    %v349 = vcombine.high %v30, %v30
    %v351 = vunpack.c.l.s4 1983009808
    %v352 = vunpack.c.0.s8 %v351
    %v353 = vlaneseq
    %v354 = vshrl.u32 %v353, 7
    %v355 = vsub.s32 %v352, %v354
    %v356 = vrot.slane %v30, %v355
    %v358 = vunpack.c.l.s4 1983009808
    %v359 = vunpack.c.0.s8 %v358
    %v360 = vlaneseq
    %v361 = vshrl.u32 %v360, 7
    %v362 = vsub.s32 %v359, %v361
    %v363 = vrot.slane %v349, %v362
    %v364 = vcombine.high %v356, %v356
    %v365 = vcombine.high %v363, %v363
    %382 = vmatprep.subr.mxu0 0.0
    %383 = vmatpush1.msra.mxu0 %v31
    %384 = vmatprep.subr.mxu0 0.0
    %385 = vmatpush1.msra.mxu0 %v32
    %386 = vmatprep.subr.mxu0 0.0
    %387 = vmatpush1.msra.mxu0 %v33
    %388 = vmatprep.subr.mxu0 0.0
    %389 = vmatpush1.msra.mxu0 %v34
    %390 = vmatprep.subr.mxu0 0.0
    %391 = vmatpush1.msra.mxu0 %v35
    %392 = vmatprep.subr.mxu0 0.0
    %393 = vmatpush1.msra.mxu0 %v36
    %394 = vmatprep.subr.mxu0 0.0
    %395 = vmatpush1.msra.mxu0 %v37
    %396 = vmatprep.subr.mxu0 0.0
    %397 = vmatpush1.msra.mxu0 %v38
    %398 = vmatprep.subr.mxu0 0.0
    %399 = vmatpush1.msra.mxu0 %v39
    %400 = vmatprep.subr.mxu0 0.0
    %401 = vmatpush1.msra.mxu0 %v40
    %402 = vmatprep.subr.mxu0 0.0
    %403 = vmatpush1.msra.mxu0 %v41
    %404 = vmatprep.subr.mxu0 0.0
    %405 = vmatpush1.msra.mxu0 %v42
    %406 = vmatprep.subr.mxu0 0.0
    %407 = vmatpush1.msra.mxu0 %v43
    %408 = vmatprep.subr.mxu0 0.0
    %409 = vmatpush1.msra.mxu0 %v44
    %410 = vmatprep.subr.mxu0 0.0
    %411 = vmatpush1.msra.mxu0 %v45
    %412 = vmatprep.subr.mxu0 0.0
    %413 = vmatpush1.msra.mxu0 %v46
    %414 = vmatprep.subr.mxu0 0.0
    %415 = vmatpush1.msra.mxu0 %v47
    %416 = vmatprep.subr.mxu0 0.0
    %417 = vmatpush1.msra.mxu0 %v48
    %418 = vmatprep.subr.mxu0 0.0
    %419 = vmatpush1.msra.mxu0 %v49
    %420 = vmatprep.subr.mxu0 0.0
    %421 = vmatpush1.msra.mxu0 %v50
    %422 = vmatprep.subr.mxu0 0.0
    %423 = vmatpush1.msra.mxu0 %v51
    %424 = vmatprep.subr.mxu0 0.0
    %425 = vmatpush1.msra.mxu0 %v52
    %426 = vmatprep.subr.mxu0 0.0
    %427 = vmatpush1.msra.mxu0 %v53
    %428 = vmatprep.subr.mxu0 0.0
    %429 = vmatpush1.msra.mxu0 %v54
    %430 = vmatprep.subr.mxu0 0.0
    %431 = vmatpush1.msra.mxu0 %v55
    %432 = vmatprep.subr.mxu0 0.0
    %433 = vmatpush1.msra.mxu0 %v56
    %434 = vmatprep.subr.mxu0 0.0
    %435 = vmatpush1.msra.mxu0 %v57
    %436 = vmatprep.subr.mxu0 0.0
    %437 = vmatpush1.msra.mxu0 %v58
    %438 = vmatprep.subr.mxu0 0.0
    %439 = vmatpush1.msra.mxu0 %v59
    %440 = vmatprep.subr.mxu0 0.0
    %441 = vmatpush1.msra.mxu0 %v60
    %442 = vmatprep.subr.mxu0 0.0
    %443 = vmatpush1.msra.mxu0 %v61
    %444 = vmatprep.subr.mxu0 0.0
    %445 = vmatpush1.msra.mxu0 %v62
    %446 = vmatprep.mubr.f32.mxu0 %v313
    %447 = vmatmul.mubr.f32.gmra.mrb[0].mxu0 %v305
    %v448 = vpop.f32.mrb[0].mxu0
    %v449 = vadd.f32 %v292, %v448
    %v450 = vpop.f32.mrb[0].mxu0
    %451 = vdwg.mxu0
    %452 = vmatprep.subr.mxu0 0.0
    %453 = vmatpush1.msra.mxu0 %v63
    %454 = vmatprep.subr.mxu0 0.0
    %455 = vmatpush1.msra.mxu0 %v64
    %456 = vmatprep.subr.mxu0 0.0
    %457 = vmatpush1.msra.mxu0 %v65
    %458 = vmatprep.subr.mxu0 0.0
    %459 = vmatpush1.msra.mxu0 %v66
    %460 = vmatprep.subr.mxu0 0.0
    %461 = vmatpush1.msra.mxu0 %v67
    %462 = vmatprep.subr.mxu0 0.0
    %463 = vmatpush1.msra.mxu0 %v68
    %464 = vmatprep.subr.mxu0 0.0
    %465 = vmatpush1.msra.mxu0 %v69
    %466 = vmatprep.subr.mxu0 0.0
    %467 = vmatpush1.msra.mxu0 %v70
    %468 = vmatprep.subr.mxu0 0.0
    %469 = vmatpush1.msra.mxu0 %v71
    %470 = vmatprep.subr.mxu0 0.0
    %471 = vmatpush1.msra.mxu0 %v72
    %472 = vmatprep.subr.mxu0 0.0
    %473 = vmatpush1.msra.mxu0 %v73
    %474 = vmatprep.subr.mxu0 0.0
    %475 = vmatpush1.msra.mxu0 %v74
    %476 = vmatprep.subr.mxu0 0.0
    %477 = vmatpush1.msra.mxu0 %v75
    %478 = vmatprep.subr.mxu0 0.0
    %479 = vmatpush1.msra.mxu0 %v76
    %480 = vmatprep.subr.mxu0 0.0
    %481 = vmatpush1.msra.mxu0 %v77
    %482 = vmatprep.subr.mxu0 0.0
    %483 = vmatpush1.msra.mxu0 %v78
    %484 = vmatprep.subr.mxu0 0.0
    %485 = vmatpush1.msra.mxu0 %v79
    %486 = vmatprep.subr.mxu0 0.0
    %487 = vmatpush1.msra.mxu0 %v80
    %488 = vmatprep.subr.mxu0 0.0
    %489 = vmatpush1.msra.mxu0 %v81
    %490 = vmatprep.subr.mxu0 0.0
    %491 = vmatpush1.msra.mxu0 %v82
    %492 = vmatprep.subr.mxu0 0.0
    %493 = vmatpush1.msra.mxu0 %v83
    %494 = vmatprep.subr.mxu0 0.0
    %495 = vmatpush1.msra.mxu0 %v84
    %496 = vmatprep.subr.mxu0 0.0
    %497 = vmatpush1.msra.mxu0 %v85
    %498 = vmatprep.subr.mxu0 0.0
    %499 = vmatpush1.msra.mxu0 %v86
    %500 = vmatprep.subr.mxu0 0.0
    %501 = vmatpush1.msra.mxu0 %v87
    %502 = vmatprep.subr.mxu0 0.0
    %503 = vmatpush1.msra.mxu0 %v88
    %504 = vmatprep.subr.mxu0 0.0
    %505 = vmatpush1.msra.mxu0 %v89
    %506 = vmatprep.subr.mxu0 0.0
    %507 = vmatpush1.msra.mxu0 %v90
    %508 = vmatprep.subr.mxu0 0.0
    %509 = vmatpush1.msra.mxu0 %v91
    %510 = vmatprep.subr.mxu0 0.0
    %511 = vmatpush1.msra.mxu0 %v92
    %512 = vmatprep.subr.mxu0 0.0
    %513 = vmatpush1.msra.mxu0 %v93
    %514 = vmatprep.subr.mxu0 0.0
    %515 = vmatpush1.msra.mxu0 %v94
    %516 = vmatprep.mubr.f32.mxu0 %v314
    %517 = vmatmul.mubr.f32.gmra.mrb[0].mxu0 %v312
    %v518 = vpop.f32.mrb[0].mxu0
    %v519 = vadd.f32 %v449, %v518
    %v520 = vpop.f32.mrb[0].mxu0
    %521 = vdwg.mxu0
    %522 = vmatprep.subr.mxu0 0.0
    %523 = vmatpush1.msra.mxu0 %v95
    %524 = vmatprep.subr.mxu0 0.0
    %525 = vmatpush1.msra.mxu0 %v96
    %526 = vmatprep.subr.mxu0 0.0
    %527 = vmatpush1.msra.mxu0 %v97
    %528 = vmatprep.subr.mxu0 0.0
    %529 = vmatpush1.msra.mxu0 %v98
    %530 = vmatprep.subr.mxu0 0.0
    %531 = vmatpush1.msra.mxu0 %v99
    %532 = vmatprep.subr.mxu0 0.0
    %533 = vmatpush1.msra.mxu0 %v100
    %534 = vmatprep.subr.mxu0 0.0
    %535 = vmatpush1.msra.mxu0 %v101
    %536 = vmatprep.subr.mxu0 0.0
    %537 = vmatpush1.msra.mxu0 %v102
    %538 = vmatprep.subr.mxu0 0.0
    %539 = vmatpush1.msra.mxu0 %v103
    %540 = vmatprep.subr.mxu0 0.0
    %541 = vmatpush1.msra.mxu0 %v104
    %542 = vmatprep.subr.mxu0 0.0
    %543 = vmatpush1.msra.mxu0 %v105
    %544 = vmatprep.subr.mxu0 0.0
    %545 = vmatpush1.msra.mxu0 %v106
    %546 = vmatprep.subr.mxu0 0.0
    %547 = vmatpush1.msra.mxu0 %v107
    %548 = vmatprep.subr.mxu0 0.0
    %549 = vmatpush1.msra.mxu0 %v108
    %550 = vmatprep.subr.mxu0 0.0
    %551 = vmatpush1.msra.mxu0 %v109
    %552 = vmatprep.subr.mxu0 0.0
    %553 = vmatpush1.msra.mxu0 %v110
    %554 = vmatprep.subr.mxu0 0.0
    %555 = vmatpush1.msra.mxu0 %v111
    %556 = vmatprep.subr.mxu0 0.0
    %557 = vmatpush1.msra.mxu0 %v112
    %558 = vmatprep.subr.mxu0 0.0
    %559 = vmatpush1.msra.mxu0 %v113
    %560 = vmatprep.subr.mxu0 0.0
    %561 = vmatpush1.msra.mxu0 %v114
    %562 = vmatprep.subr.mxu0 0.0
    %563 = vmatpush1.msra.mxu0 %v115
    %564 = vmatprep.subr.mxu0 0.0
    %565 = vmatpush1.msra.mxu0 %v116
    %566 = vmatprep.subr.mxu0 0.0
    %567 = vmatpush1.msra.mxu0 %v117
    %568 = vmatprep.subr.mxu0 0.0
    %569 = vmatpush1.msra.mxu0 %v118
    %570 = vmatprep.subr.mxu0 0.0
    %571 = vmatpush1.msra.mxu0 %v119
    %572 = vmatprep.subr.mxu0 0.0
    %573 = vmatpush1.msra.mxu0 %v120
    %574 = vmatprep.subr.mxu0 0.0
    %575 = vmatpush1.msra.mxu0 %v121
    %576 = vmatprep.subr.mxu0 0.0
    %577 = vmatpush1.msra.mxu0 %v122
    %578 = vmatprep.subr.mxu0 0.0
    %579 = vmatpush1.msra.mxu0 %v123
    %580 = vmatprep.subr.mxu0 0.0
    %581 = vmatpush1.msra.mxu0 %v124
    %582 = vmatprep.subr.mxu0 0.0
    %583 = vmatpush1.msra.mxu0 %v125
    %584 = vmatprep.subr.mxu0 0.0
    %585 = vmatpush1.msra.mxu0 %v126
    %586 = vmatprep.mubr.f32.mxu0 %v330
    %587 = vmatmul.mubr.f32.gmra.mrb[0].mxu0 %v322
    %v588 = vpop.f32.mrb[0].mxu0
    %v589 = vadd.f32 %v519, %v588
    %v590 = vpop.f32.mrb[0].mxu0
    %591 = vdwg.mxu0
    %592 = vmatprep.subr.mxu0 0.0
    %593 = vmatpush1.msra.mxu0 %v127
    %594 = vmatprep.subr.mxu0 0.0
    %595 = vmatpush1.msra.mxu0 %v128
    %596 = vmatprep.subr.mxu0 0.0
    %597 = vmatpush1.msra.mxu0 %v129
    %598 = vmatprep.subr.mxu0 0.0
    %599 = vmatpush1.msra.mxu0 %v130
    %600 = vmatprep.subr.mxu0 0.0
    %601 = vmatpush1.msra.mxu0 %v131
    %602 = vmatprep.subr.mxu0 0.0
    %603 = vmatpush1.msra.mxu0 %v132
    %604 = vmatprep.subr.mxu0 0.0
    %605 = vmatpush1.msra.mxu0 %v133
    %606 = vmatprep.subr.mxu0 0.0
    %607 = vmatpush1.msra.mxu0 %v134
    %608 = vmatprep.subr.mxu0 0.0
    %609 = vmatpush1.msra.mxu0 %v135
    %610 = vmatprep.subr.mxu0 0.0
    %611 = vmatpush1.msra.mxu0 %v136
    %612 = vmatprep.subr.mxu0 0.0
    %613 = vmatpush1.msra.mxu0 %v137
    %614 = vmatprep.subr.mxu0 0.0
    %615 = vmatpush1.msra.mxu0 %v138
    %616 = vmatprep.subr.mxu0 0.0
    %617 = vmatpush1.msra.mxu0 %v139
    %618 = vmatprep.subr.mxu0 0.0
    %619 = vmatpush1.msra.mxu0 %v140
    %620 = vmatprep.subr.mxu0 0.0
    %621 = vmatpush1.msra.mxu0 %v141
    %622 = vmatprep.subr.mxu0 0.0
    %623 = vmatpush1.msra.mxu0 %v142
    %624 = vmatprep.subr.mxu0 0.0
    %625 = vmatpush1.msra.mxu0 %v143
    %626 = vmatprep.subr.mxu0 0.0
    %627 = vmatpush1.msra.mxu0 %v144
    %628 = vmatprep.subr.mxu0 0.0
    %629 = vmatpush1.msra.mxu0 %v145
    %630 = vmatprep.subr.mxu0 0.0
    %631 = vmatpush1.msra.mxu0 %v146
    %632 = vmatprep.subr.mxu0 0.0
    %633 = vmatpush1.msra.mxu0 %v147
    %634 = vmatprep.subr.mxu0 0.0
    %635 = vmatpush1.msra.mxu0 %v148
    %636 = vmatprep.subr.mxu0 0.0
    %637 = vmatpush1.msra.mxu0 %v149
    %638 = vmatprep.subr.mxu0 0.0
    %639 = vmatpush1.msra.mxu0 %v150
    %640 = vmatprep.subr.mxu0 0.0
    %641 = vmatpush1.msra.mxu0 %v151
    %642 = vmatprep.subr.mxu0 0.0
    %643 = vmatpush1.msra.mxu0 %v152
    %644 = vmatprep.subr.mxu0 0.0
    %645 = vmatpush1.msra.mxu0 %v153
    %646 = vmatprep.subr.mxu0 0.0
    %647 = vmatpush1.msra.mxu0 %v154
    %648 = vmatprep.subr.mxu0 0.0
    %649 = vmatpush1.msra.mxu0 %v155
    %650 = vmatprep.subr.mxu0 0.0
    %651 = vmatpush1.msra.mxu0 %v156
    %652 = vmatprep.subr.mxu0 0.0
    %653 = vmatpush1.msra.mxu0 %v157
    %654 = vmatprep.subr.mxu0 0.0
    %655 = vmatpush1.msra.mxu0 %v158
    %656 = vmatprep.mubr.f32.mxu0 %v331
    %657 = vmatmul.mubr.f32.gmra.mrb[0].mxu0 %v329
    %v658 = vpop.f32.mrb[0].mxu0
    %v659 = vadd.f32 %v589, %v658
    %v660 = vpop.f32.mrb[0].mxu0
    %661 = vdwg.mxu0
    %662 = vmatprep.subr.mxu0 0.0
    %663 = vmatpush1.msra.mxu0 %v159
    %664 = vmatprep.subr.mxu0 0.0
    %665 = vmatpush1.msra.mxu0 %v160
    %666 = vmatprep.subr.mxu0 0.0
    %667 = vmatpush1.msra.mxu0 %v161
    %668 = vmatprep.subr.mxu0 0.0
    %669 = vmatpush1.msra.mxu0 %v162
    %670 = vmatprep.subr.mxu0 0.0
    %671 = vmatpush1.msra.mxu0 %v163
    %672 = vmatprep.subr.mxu0 0.0
    %673 = vmatpush1.msra.mxu0 %v164
    %674 = vmatprep.subr.mxu0 0.0
    %675 = vmatpush1.msra.mxu0 %v165
    %676 = vmatprep.subr.mxu0 0.0
    %677 = vmatpush1.msra.mxu0 %v166
    %678 = vmatprep.subr.mxu0 0.0
    %679 = vmatpush1.msra.mxu0 %v167
    %680 = vmatprep.subr.mxu0 0.0
    %681 = vmatpush1.msra.mxu0 %v168
    %682 = vmatprep.subr.mxu0 0.0
    %683 = vmatpush1.msra.mxu0 %v169
    %684 = vmatprep.subr.mxu0 0.0
    %685 = vmatpush1.msra.mxu0 %v170
    %686 = vmatprep.subr.mxu0 0.0
    %687 = vmatpush1.msra.mxu0 %v171
    %688 = vmatprep.subr.mxu0 0.0
    %689 = vmatpush1.msra.mxu0 %v172
    %690 = vmatprep.subr.mxu0 0.0
    %691 = vmatpush1.msra.mxu0 %v173
    %692 = vmatprep.subr.mxu0 0.0
    %693 = vmatpush1.msra.mxu0 %v174
    %694 = vmatprep.subr.mxu0 0.0
    %695 = vmatpush1.msra.mxu0 %v175
    %696 = vmatprep.subr.mxu0 0.0
    %697 = vmatpush1.msra.mxu0 %v176
    %698 = vmatprep.subr.mxu0 0.0
    %699 = vmatpush1.msra.mxu0 %v177
    %700 = vmatprep.subr.mxu0 0.0
    %701 = vmatpush1.msra.mxu0 %v178
    %702 = vmatprep.subr.mxu0 0.0
    %703 = vmatpush1.msra.mxu0 %v179
    %704 = vmatprep.subr.mxu0 0.0
    %705 = vmatpush1.msra.mxu0 %v180
    %706 = vmatprep.subr.mxu0 0.0
    %707 = vmatpush1.msra.mxu0 %v181
    %708 = vmatprep.subr.mxu0 0.0
    %709 = vmatpush1.msra.mxu0 %v182
    %710 = vmatprep.subr.mxu0 0.0
    %711 = vmatpush1.msra.mxu0 %v183
    %712 = vmatprep.subr.mxu0 0.0
    %713 = vmatpush1.msra.mxu0 %v184
    %714 = vmatprep.subr.mxu0 0.0
    %715 = vmatpush1.msra.mxu0 %v185
    %716 = vmatprep.subr.mxu0 0.0
    %717 = vmatpush1.msra.mxu0 %v186
    %718 = vmatprep.subr.mxu0 0.0
    %719 = vmatpush1.msra.mxu0 %v187
    %720 = vmatprep.subr.mxu0 0.0
    %721 = vmatpush1.msra.mxu0 %v188
    %722 = vmatprep.subr.mxu0 0.0
    %723 = vmatpush1.msra.mxu0 %v189
    %724 = vmatprep.subr.mxu0 0.0
    %725 = vmatpush1.msra.mxu0 %v190
    %726 = vmatprep.mubr.f32.mxu0 %v347
    %727 = vmatmul.mubr.f32.gmra.mrb[0].mxu0 %v339
    %v728 = vpop.f32.mrb[0].mxu0
    %v729 = vadd.f32 %v659, %v728
    %v730 = vpop.f32.mrb[0].mxu0
    %731 = vdwg.mxu0
    %732 = vmatprep.subr.mxu0 0.0
    %733 = vmatpush1.msra.mxu0 %v191
    %734 = vmatprep.subr.mxu0 0.0
    %735 = vmatpush1.msra.mxu0 %v192
    %736 = vmatprep.subr.mxu0 0.0
    %737 = vmatpush1.msra.mxu0 %v193
    %738 = vmatprep.subr.mxu0 0.0
    %739 = vmatpush1.msra.mxu0 %v194
    %740 = vmatprep.subr.mxu0 0.0
    %741 = vmatpush1.msra.mxu0 %v195
    %742 = vmatprep.subr.mxu0 0.0
    %743 = vmatpush1.msra.mxu0 %v196
    %744 = vmatprep.subr.mxu0 0.0
    %745 = vmatpush1.msra.mxu0 %v197
    %746 = vmatprep.subr.mxu0 0.0
    %747 = vmatpush1.msra.mxu0 %v198
    %748 = vmatprep.subr.mxu0 0.0
    %749 = vmatpush1.msra.mxu0 %v199
    %750 = vmatprep.subr.mxu0 0.0
    %751 = vmatpush1.msra.mxu0 %v200
    %752 = vmatprep.subr.mxu0 0.0
    %753 = vmatpush1.msra.mxu0 %v201
    %754 = vmatprep.subr.mxu0 0.0
    %755 = vmatpush1.msra.mxu0 %v202
    %756 = vmatprep.subr.mxu0 0.0
    %757 = vmatpush1.msra.mxu0 %v203
    %758 = vmatprep.subr.mxu0 0.0
    %759 = vmatpush1.msra.mxu0 %v204
    %760 = vmatprep.subr.mxu0 0.0
    %761 = vmatpush1.msra.mxu0 %v205
    %762 = vmatprep.subr.mxu0 0.0
    %763 = vmatpush1.msra.mxu0 %v206
    %764 = vmatprep.subr.mxu0 0.0
    %765 = vmatpush1.msra.mxu0 %v207
    %766 = vmatprep.subr.mxu0 0.0
    %767 = vmatpush1.msra.mxu0 %v208
    %768 = vmatprep.subr.mxu0 0.0
    %769 = vmatpush1.msra.mxu0 %v209
    %770 = vmatprep.subr.mxu0 0.0
    %771 = vmatpush1.msra.mxu0 %v210
    %772 = vmatprep.subr.mxu0 0.0
    %773 = vmatpush1.msra.mxu0 %v211
    %774 = vmatprep.subr.mxu0 0.0
    %775 = vmatpush1.msra.mxu0 %v212
    %776 = vmatprep.subr.mxu0 0.0
    %777 = vmatpush1.msra.mxu0 %v213
    %778 = vmatprep.subr.mxu0 0.0
    %779 = vmatpush1.msra.mxu0 %v214
    %780 = vmatprep.subr.mxu0 0.0
    %781 = vmatpush1.msra.mxu0 %v215
    %782 = vmatprep.subr.mxu0 0.0
    %783 = vmatpush1.msra.mxu0 %v216
    %784 = vmatprep.subr.mxu0 0.0
    %785 = vmatpush1.msra.mxu0 %v217
    %786 = vmatprep.subr.mxu0 0.0
    %787 = vmatpush1.msra.mxu0 %v218
    %788 = vmatprep.subr.mxu0 0.0
    %789 = vmatpush1.msra.mxu0 %v219
    %790 = vmatprep.subr.mxu0 0.0
    %791 = vmatpush1.msra.mxu0 %v220
    %792 = vmatprep.subr.mxu0 0.0
    %793 = vmatpush1.msra.mxu0 %v221
    %794 = vmatprep.subr.mxu0 0.0
    %795 = vmatpush1.msra.mxu0 %v222
    %796 = vmatprep.mubr.f32.mxu0 %v348
    %797 = vmatmul.mubr.f32.gmra.mrb[0].mxu0 %v346
    %v798 = vpop.f32.mrb[0].mxu0
    %v799 = vadd.f32 %v729, %v798
    %v800 = vpop.f32.mrb[0].mxu0
    %801 = vdwg.mxu0
    %802 = vmatprep.subr.mxu0 0.0
    %803 = vmatpush1.msra.mxu0 %v223
    %804 = vmatprep.subr.mxu0 0.0
    %805 = vmatpush1.msra.mxu0 %v224
    %806 = vmatprep.subr.mxu0 0.0
    %807 = vmatpush1.msra.mxu0 %v225
    %808 = vmatprep.subr.mxu0 0.0
    %809 = vmatpush1.msra.mxu0 %v226
    %810 = vmatprep.subr.mxu0 0.0
    %811 = vmatpush1.msra.mxu0 %v227
    %812 = vmatprep.subr.mxu0 0.0
    %813 = vmatpush1.msra.mxu0 %v228
    %814 = vmatprep.subr.mxu0 0.0
    %815 = vmatpush1.msra.mxu0 %v229
    %816 = vmatprep.subr.mxu0 0.0
    %817 = vmatpush1.msra.mxu0 %v230
    %818 = vmatprep.subr.mxu0 0.0
    %819 = vmatpush1.msra.mxu0 %v231
    %820 = vmatprep.subr.mxu0 0.0
    %821 = vmatpush1.msra.mxu0 %v232
    %822 = vmatprep.subr.mxu0 0.0
    %823 = vmatpush1.msra.mxu0 %v233
    %824 = vmatprep.subr.mxu0 0.0
    %825 = vmatpush1.msra.mxu0 %v234
    %826 = vmatprep.subr.mxu0 0.0
    %827 = vmatpush1.msra.mxu0 %v235
    %828 = vmatprep.subr.mxu0 0.0
    %829 = vmatpush1.msra.mxu0 %v236
    %830 = vmatprep.subr.mxu0 0.0
    %831 = vmatpush1.msra.mxu0 %v237
    %832 = vmatprep.subr.mxu0 0.0
    %833 = vmatpush1.msra.mxu0 %v238
    %834 = vmatprep.subr.mxu0 0.0
    %835 = vmatpush1.msra.mxu0 %v239
    %836 = vmatprep.subr.mxu0 0.0
    %837 = vmatpush1.msra.mxu0 %v240
    %838 = vmatprep.subr.mxu0 0.0
    %839 = vmatpush1.msra.mxu0 %v241
    %840 = vmatprep.subr.mxu0 0.0
    %841 = vmatpush1.msra.mxu0 %v242
    %842 = vmatprep.subr.mxu0 0.0
    %843 = vmatpush1.msra.mxu0 %v243
    %844 = vmatprep.subr.mxu0 0.0
    %845 = vmatpush1.msra.mxu0 %v244
    %846 = vmatprep.subr.mxu0 0.0
    %847 = vmatpush1.msra.mxu0 %v245
    %848 = vmatprep.subr.mxu0 0.0
    %849 = vmatpush1.msra.mxu0 %v246
    %850 = vmatprep.subr.mxu0 0.0
    %851 = vmatpush1.msra.mxu0 %v247
    %852 = vmatprep.subr.mxu0 0.0
    %853 = vmatpush1.msra.mxu0 %v248
    %854 = vmatprep.subr.mxu0 0.0
    %855 = vmatpush1.msra.mxu0 %v249
    %856 = vmatprep.subr.mxu0 0.0
    %857 = vmatpush1.msra.mxu0 %v250
    %858 = vmatprep.subr.mxu0 0.0
    %859 = vmatpush1.msra.mxu0 %v251
    %860 = vmatprep.subr.mxu0 0.0
    %861 = vmatpush1.msra.mxu0 %v252
    %862 = vmatprep.subr.mxu0 0.0
    %863 = vmatpush1.msra.mxu0 %v253
    %864 = vmatprep.subr.mxu0 0.0
    %865 = vmatpush1.msra.mxu0 %v254
    %866 = vmatprep.mubr.f32.mxu0 %v364
    %867 = vmatmul.mubr.f32.gmra.mrb[0].mxu0 %v356
    %v868 = vpop.f32.mrb[0].mxu0
    %v869 = vadd.f32 %v799, %v868
    %v870 = vpop.f32.mrb[0].mxu0
    %871 = vdwg.mxu0
    %872 = vmatprep.subr.mxu0 0.0
    %873 = vmatpush1.msra.mxu0 %v255
    %874 = vmatprep.subr.mxu0 0.0
    %875 = vmatpush1.msra.mxu0 %v256
    %876 = vmatprep.subr.mxu0 0.0
    %877 = vmatpush1.msra.mxu0 %v257
    %878 = vmatprep.subr.mxu0 0.0
    %879 = vmatpush1.msra.mxu0 %v258
    %880 = vmatprep.subr.mxu0 0.0
    %881 = vmatpush1.msra.mxu0 %v259
    %882 = vmatprep.subr.mxu0 0.0
    %883 = vmatpush1.msra.mxu0 %v260
    %884 = vmatprep.subr.mxu0 0.0
    %885 = vmatpush1.msra.mxu0 %v261
    %886 = vmatprep.subr.mxu0 0.0
    %887 = vmatpush1.msra.mxu0 %v262
    %888 = vmatprep.subr.mxu0 0.0
    %889 = vmatpush1.msra.mxu0 %v263
    %890 = vmatprep.subr.mxu0 0.0
    %891 = vmatpush1.msra.mxu0 %v264
    %892 = vmatprep.subr.mxu0 0.0
    %893 = vmatpush1.msra.mxu0 %v265
    %894 = vmatprep.subr.mxu0 0.0
    %895 = vmatpush1.msra.mxu0 %v266
    %896 = vmatprep.subr.mxu0 0.0
    %897 = vmatpush1.msra.mxu0 %v267
    %898 = vmatprep.subr.mxu0 0.0
    %899 = vmatpush1.msra.mxu0 %v268
    %900 = vmatprep.subr.mxu0 0.0
    %901 = vmatpush1.msra.mxu0 %v269
    %902 = vmatprep.subr.mxu0 0.0
    %903 = vmatpush1.msra.mxu0 %v270
    %904 = vmatprep.subr.mxu0 0.0
    %905 = vmatpush1.msra.mxu0 %v271
    %906 = vmatprep.subr.mxu0 0.0
    %907 = vmatpush1.msra.mxu0 %v272
    %908 = vmatprep.subr.mxu0 0.0
    %909 = vmatpush1.msra.mxu0 %v273
    %910 = vmatprep.subr.mxu0 0.0
    %911 = vmatpush1.msra.mxu0 %v274
    %912 = vmatprep.subr.mxu0 0.0
    %913 = vmatpush1.msra.mxu0 %v275
    %914 = vmatprep.subr.mxu0 0.0
    %915 = vmatpush1.msra.mxu0 %v276
    %916 = vmatprep.subr.mxu0 0.0
    %917 = vmatpush1.msra.mxu0 %v277
    %918 = vmatprep.subr.mxu0 0.0
    %919 = vmatpush1.msra.mxu0 %v278
    %920 = vmatprep.subr.mxu0 0.0
    %921 = vmatpush1.msra.mxu0 %v279
    %922 = vmatprep.subr.mxu0 0.0
    %923 = vmatpush1.msra.mxu0 %v280
    %924 = vmatprep.subr.mxu0 0.0
    %925 = vmatpush1.msra.mxu0 %v281
    %926 = vmatprep.subr.mxu0 0.0
    %927 = vmatpush1.msra.mxu0 %v282
    %928 = vmatprep.subr.mxu0 0.0
    %929 = vmatpush1.msra.mxu0 %v283
    %930 = vmatprep.subr.mxu0 0.0
    %931 = vmatpush1.msra.mxu0 %v284
    %932 = vmatprep.subr.mxu0 0.0
    %933 = vmatpush1.msra.mxu0 %v285
    %934 = vmatprep.subr.mxu0 0.0
    %935 = vmatpush1.msra.mxu0 %v286
    %936 = vmatprep.mubr.f32.mxu0 %v365
    %937 = vmatmul.mubr.f32.gmra.mrb[0].mxu0 %v363
    %v938 = vpop.f32.mrb[0].mxu0
    %v939 = vadd.f32 %v869, %v938
    %v940 = vpop.f32.mrb[0].mxu0
    %941 = vdwg.mxu0
    %v942 = vmax.f32 %v939, 0.0
    %v943 = vld [vmem:[%s3] sm:$0xff]
    %v944 = vld [vmem:[%s3 + $0x8] sm:$0xff]
    %v945 = vld [vmem:[%s3 + $0x10] sm:$0xff]
    %v946 = vld [vmem:[%s3 + $0x18] sm:$0xff]
    %v947 = vld [vmem:[%s3 + $0x20] sm:$0xff]
    %v948 = vld [vmem:[%s3 + $0x28] sm:$0xff]
    %v949 = vld [vmem:[%s3 + $0x30] sm:$0xff]
    %v950 = vld [vmem:[%s3 + $0x38] sm:$0xff]
    %v951 = vld [vmem:[%s3 + $0x40] sm:$0xff]
    %v952 = vld [vmem:[%s3 + $0x48] sm:$0xff]
    %v953 = vld [vmem:[%s3 + $0x50] sm:$0xff]
    %v954 = vld [vmem:[%s3 + $0x58] sm:$0xff]
    %v955 = vld [vmem:[%s3 + $0x60] sm:$0xff]
    %v956 = vld [vmem:[%s3 + $0x68] sm:$0xff]
    %v957 = vld [vmem:[%s3 + $0x70] sm:$0xff]
    %v958 = vld [vmem:[%s3 + $0x78] sm:$0xff]
    %v959 = vld [vmem:[%s4] sm:$0x1]
    %v961 = vlaneseq
    %v962 = vshrl.u32 %v961, 7
    %v963 = vsub.s32 0, %v962
    %v964 = vrot.slane %v959, %v963
    %966 = vmatprep.subr.mxu0 0.0
    %967 = vmatpush1.msra.mxu0 %v943
    %968 = vmatprep.subr.mxu0 0.0
    %969 = vmatpush1.msra.mxu0 %v944
    %970 = vmatprep.subr.mxu0 0.0
    %971 = vmatpush1.msra.mxu0 %v945
    %972 = vmatprep.subr.mxu0 0.0
    %973 = vmatpush1.msra.mxu0 %v946
    %974 = vmatprep.subr.mxu0 0.0
    %975 = vmatpush1.msra.mxu0 %v947
    %976 = vmatprep.subr.mxu0 0.0
    %977 = vmatpush1.msra.mxu0 %v948
    %978 = vmatprep.subr.mxu0 0.0
    %979 = vmatpush1.msra.mxu0 %v949
    %980 = vmatprep.subr.mxu0 0.0
    %981 = vmatpush1.msra.mxu0 %v950
    %982 = vmatprep.subr.mxu0 0.0
    %983 = vmatpush1.msra.mxu0 %v951
    %984 = vmatprep.subr.mxu0 0.0
    %985 = vmatpush1.msra.mxu0 %v952
    %986 = vmatprep.subr.mxu0 0.0
    %987 = vmatpush1.msra.mxu0 %v953
    %988 = vmatprep.subr.mxu0 0.0
    %989 = vmatpush1.msra.mxu0 %v954
    %990 = vmatprep.subr.mxu0 0.0
    %991 = vmatpush1.msra.mxu0 %v955
    %992 = vmatprep.subr.mxu0 0.0
    %993 = vmatpush1.msra.mxu0 %v956
    %994 = vmatprep.subr.mxu0 0.0
    %995 = vmatpush1.msra.mxu0 %v957
    %996 = vmatprep.subr.mxu0 0.0
    %997 = vmatpush1.msra.mxu0 %v958
    %998 = vmatprep.subr.mxu0 0.0
    %999 = vmatpush1.msra.mxu0 0.0
    %1000 = vmatprep.subr.mxu0 0.0
    %1001 = vmatpush1.msra.mxu0 0.0
    %1002 = vmatprep.subr.mxu0 0.0
    %1003 = vmatpush1.msra.mxu0 0.0
    %1004 = vmatprep.subr.mxu0 0.0
    %1005 = vmatpush1.msra.mxu0 0.0
    %1006 = vmatprep.subr.mxu0 0.0
    %1007 = vmatpush1.msra.mxu0 0.0
    %1008 = vmatprep.subr.mxu0 0.0
    %1009 = vmatpush1.msra.mxu0 0.0
    %1010 = vmatprep.subr.mxu0 0.0
    %1011 = vmatpush1.msra.mxu0 0.0
    %1012 = vmatprep.subr.mxu0 0.0
    %1013 = vmatpush1.msra.mxu0 0.0
    %1014 = vmatprep.subr.mxu0 0.0
    %1015 = vmatpush1.msra.mxu0 0.0
    %1016 = vmatprep.subr.mxu0 0.0
    %1017 = vmatpush1.msra.mxu0 0.0
    %1018 = vmatprep.subr.mxu0 0.0
    %1019 = vmatpush1.msra.mxu0 0.0
    %1020 = vmatprep.subr.mxu0 0.0
    %1021 = vmatpush1.msra.mxu0 0.0
    %1022 = vmatprep.subr.mxu0 0.0
    %1023 = vmatpush1.msra.mxu0 0.0
    %1024 = vmatprep.subr.mxu0 0.0
    %1025 = vmatpush1.msra.mxu0 0.0
    %1026 = vmatprep.subr.mxu0 0.0
    %1027 = vmatpush1.msra.mxu0 0.0
    %1028 = vmatprep.subr.mxu0 0.0
    %1029 = vmatpush1.msra.mxu0 0.0
    %1030 = vmatprep.mubr.f32.mxu0 0.0
    %1031 = vmatmul.mubr.f32.gmra.mrb[0].mxu0 %v942
    %v1032 = vpop.f32.mrb[0].mxu0
    %v1033 = vadd.f32 %v964, %v1032
    %v1034 = vpop.f32.mrb[0].mxu0
    %1035 = vdwg.mxu0
    %v1036 = vmax.f32 %v1033, 0.0
    %v1037 = vld [vmem:[%s5] sm:$0xff]
    %v1038 = vld [vmem:[%s5 + $0x8] sm:$0xff]
    %v1039 = vld [vmem:[%s5 + $0x10] sm:$0xff]
    %v1040 = vld [vmem:[%s5 + $0x18] sm:$0xff]
    %v1041 = vld [vmem:[%s5 + $0x20] sm:$0xff]
    %v1042 = vld [vmem:[%s5 + $0x28] sm:$0xff]
    %v1043 = vld [vmem:[%s5 + $0x30] sm:$0xff]
    %v1044 = vld [vmem:[%s5 + $0x38] sm:$0xff]
    %v1045 = vld [vmem:[%s5 + $0x40] sm:$0xff]
    %v1046 = vld [vmem:[%s5 + $0x48] sm:$0xff]
    %v1047 = vld [vmem:[%s5 + $0x50] sm:$0xff]
    %v1048 = vld [vmem:[%s5 + $0x58] sm:$0xff]
    %v1049 = vld [vmem:[%s5 + $0x60] sm:$0xff]
    %v1050 = vld [vmem:[%s5 + $0x68] sm:$0xff]
    %v1051 = vld [vmem:[%s5 + $0x70] sm:$0xff]
    %v1052 = vld [vmem:[%s5 + $0x78] sm:$0xff]
    %v1053 = vld [vmem:[%s6] sm:$0x1]
    %v1055 = vlaneseq
    %v1056 = vshrl.u32 %v1055, 7
    %v1057 = vsub.s32 0, %v1056
    %v1058 = vrot.slane %v1053, %v1057
    %1060 = vmatprep.subr.mxu0 0.0
    %1061 = vmatpush1.msra.mxu0 %v1037
    %1062 = vmatprep.subr.mxu0 0.0
    %1063 = vmatpush1.msra.mxu0 %v1038
    %1064 = vmatprep.subr.mxu0 0.0
    %1065 = vmatpush1.msra.mxu0 %v1039
    %1066 = vmatprep.subr.mxu0 0.0
    %1067 = vmatpush1.msra.mxu0 %v1040
    %1068 = vmatprep.subr.mxu0 0.0
    %1069 = vmatpush1.msra.mxu0 %v1041
    %1070 = vmatprep.subr.mxu0 0.0
    %1071 = vmatpush1.msra.mxu0 %v1042
    %1072 = vmatprep.subr.mxu0 0.0
    %1073 = vmatpush1.msra.mxu0 %v1043
    %1074 = vmatprep.subr.mxu0 0.0
    %1075 = vmatpush1.msra.mxu0 %v1044
    %1076 = vmatprep.subr.mxu0 0.0
    %1077 = vmatpush1.msra.mxu0 %v1045
    %1078 = vmatprep.subr.mxu0 0.0
    %1079 = vmatpush1.msra.mxu0 %v1046
    %1080 = vmatprep.subr.mxu0 0.0
    %1081 = vmatpush1.msra.mxu0 %v1047
    %1082 = vmatprep.subr.mxu0 0.0
    %1083 = vmatpush1.msra.mxu0 %v1048
    %1084 = vmatprep.subr.mxu0 0.0
    %1085 = vmatpush1.msra.mxu0 %v1049
    %1086 = vmatprep.subr.mxu0 0.0
    %1087 = vmatpush1.msra.mxu0 %v1050
    %1088 = vmatprep.subr.mxu0 0.0
    %1089 = vmatpush1.msra.mxu0 %v1051
    %1090 = vmatprep.subr.mxu0 0.0
    %1091 = vmatpush1.msra.mxu0 %v1052
    %1092 = vmatprep.subr.mxu0 0.0
    %1093 = vmatpush1.msra.mxu0 0.0
    %1094 = vmatprep.subr.mxu0 0.0
    %1095 = vmatpush1.msra.mxu0 0.0
    %1096 = vmatprep.subr.mxu0 0.0
    %1097 = vmatpush1.msra.mxu0 0.0
    %1098 = vmatprep.subr.mxu0 0.0
    %1099 = vmatpush1.msra.mxu0 0.0
    %1100 = vmatprep.subr.mxu0 0.0
    %1101 = vmatpush1.msra.mxu0 0.0
    %1102 = vmatprep.subr.mxu0 0.0
    %1103 = vmatpush1.msra.mxu0 0.0
    %1104 = vmatprep.subr.mxu0 0.0
    %1105 = vmatpush1.msra.mxu0 0.0
    %1106 = vmatprep.subr.mxu0 0.0
    %1107 = vmatpush1.msra.mxu0 0.0
    %1108 = vmatprep.subr.mxu0 0.0
    %1109 = vmatpush1.msra.mxu0 0.0
    %1110 = vmatprep.subr.mxu0 0.0
    %1111 = vmatpush1.msra.mxu0 0.0
    %1112 = vmatprep.subr.mxu0 0.0
    %1113 = vmatpush1.msra.mxu0 0.0
    %1114 = vmatprep.subr.mxu0 0.0
    %1115 = vmatpush1.msra.mxu0 0.0
    %1116 = vmatprep.subr.mxu0 0.0
    %1117 = vmatpush1.msra.mxu0 0.0
    %1118 = vmatprep.subr.mxu0 0.0
    %1119 = vmatpush1.msra.mxu0 0.0
    %1120 = vmatprep.subr.mxu0 0.0
    %1121 = vmatpush1.msra.mxu0 0.0
    %1122 = vmatprep.subr.mxu0 0.0
    %1123 = vmatpush1.msra.mxu0 0.0
    %1124 = vmatprep.mubr.f32.mxu0 0.0
    %1125 = vmatmul.mubr.f32.gmra.mrb[0].mxu0 %v1036
    %v1126 = vpop.f32.mrb[0].mxu0
    %v1127 = vadd.f32 %v1058, %v1126
    %v1128 = vpop.f32.mrb[0].mxu0
    %1129 = vdwg.mxu0
    %1130 = vst [vmem:[#allocation2] sm:$0x3] %v1127
    // Predicated region
    $region30: #{lenet_forward.5} parent=1 // pred_check
      _
    $region31: #{lenet_forward.5} parent=1 // pred_check_branch
      %1132 = sbr.rel (0) target = $region33
    $region32: #{lenet_forward.5} parent=1 // pred_region
      %s1134 = ssub.s32 32, 32
      %1135 = vsyncadd [#allocation3], %s1134
      %s1137 = sshll.u32 [#allocation2], 4
      %s1138 = int_to_ptr.vmem [resolvable:$true] %s1137
      %1140 = dma.vmem_to_hbm [thread:$0]  %s1138, 32, %s7, [#allocation3]
    $region33: #{lenet_forward.5} parent=1 // pred_fallthru
      _
    // Predicated region
    $region34: #{lenet_forward.5} parent=1 // pred_check
      _
    $region35: #{lenet_forward.5} parent=1 // pred_check_branch
      %1142 = sbr.rel (0) target = $region37
    $region36: #{lenet_forward.5} parent=1 // pred_region
      %1143 = dma.done [#allocation3], 32
    $region37: #{lenet_forward.5} parent=1 // pred_fallthru
      _
    %1144 = vsyncpa [#allocation3], 1

</llo_original>
